<compile_context>
chip_gen: v6e
topology: v6e:2x2x1
jax: 0.10.0
libtpu: 0.0.40
codegen_flags: <defaults>
</compile_context>

<pallas_src>
import jax
import jax.numpy as jnp
from jax.experimental import pallas as pl
from jax.experimental.pallas import tpu as pltpu


def _round_up(v, m):
    return ((v + m - 1) // m) * m


def _make_ae_kernel(layer_meta, pad_off, pad_cols):
    """layer_meta[l] = (relu, dout_padded, store_offset, store_width) in layer
    (production) order; pad_off/pad_cols describe the trailing zero columns
    that make the packed slab a multiple of 128 lanes wide."""

    def ae_kernel(x_ref, w1, w2, w3, wz, w4, w5, w6, wx, b_all, packed_ref):
        w_refs = (w1, w2, w3, wz, w4, w5, w6, wx)
        h = x_ref[...].astype(jnp.bfloat16)            # bf16 MXU operand
        for l, (relu, dout_p, off, sw) in enumerate(layer_meta):
            # bf16 x bf16 -> f32 accumulation on the MXU (single pass).
            y = jnp.dot(h, w_refs[l][...], preferred_element_type=jnp.float32)
            y = y + b_all[l:l + 1, :dout_p]            # f32 epilogue
            if relu:
                y = jnp.maximum(y, 0.0)
            # Incremental store at a static lane offset: keeps the live set
            # tiny and lets the vst slot overlap with the next matmuls
            # instead of a big serial concat+store epilogue.
            packed_ref[:, off:off + sw] = y[:, :sw]
            h = y.astype(jnp.bfloat16)                 # operand for next layer
        if pad_cols:
            packed_ref[:, pad_off:] = jnp.zeros(
                (packed_ref.shape[0], pad_cols), jnp.float32)

    return ae_kernel


def ae_forward_packed(x, params, *, tm=512, lane_pack=32):
    """Runs the fused AE kernel; returns (packed, layout).

    params: list of (W, b) pairs in layer order
      (enc_1, enc_2, enc_3, z_layer, dec_1, dec_2, dec_3, x_bar_layer);
      W is (in, out) (transpose of nn.Linear.weight), b is (1, out).

    packed is a (n_rows_padded, packed_total) f32 slab; layout is a list of
    (lane_offset, true_width) for the return order
    (x_bar, enc_h1, enc_h2, enc_h3, z, dec_h1, dec_h2, dec_h3).
    Only the first x.shape[0] rows of `packed` are valid.
    """
    n, n_input = x.shape
    assert len(params) == 8

    # Validate the layer chain so zero-padding can't silently misplace weights.
    prev = n_input
    for l, (w, b) in enumerate(params):
        assert w.shape[0] == prev, f"layer {l}: fan-in {w.shape[0]} != {prev}"
        assert b.shape == (1, w.shape[1]), f"layer {l}: bias shape {b.shape}"
        prev = w.shape[1]

    # ---- pad weights so every output (and next K) dim is a multiple of 128;
    #      store them as bf16 MXU operands. Zero padding + relu(0)=0 keeps the
    #      math exact. Biases are folded into one resident f32 array. ---------
    w_padded, douts_p = [], []
    prev_in = n_input                       # layer 1 keeps K == n_input
    for w, b in params:
        din, dout = w.shape
        dout_p = _round_up(dout, 128)
        w_p = jnp.zeros((prev_in, dout_p), jnp.float32).at[:din, :dout].set(
            w.astype(jnp.float32)).astype(jnp.bfloat16)
        w_padded.append(w_p)
        douts_p.append(dout_p)
        prev_in = dout_p
    max_dout_p = max(douts_p)
    b_all = jnp.zeros((8, max_dout_p), jnp.float32)
    for l, (w, b) in enumerate(params):
        b_all = b_all.at[l, :w.shape[1]].set(b.reshape(-1).astype(jnp.float32))

    # ---- packed-output layout (forward-return order:
    #      x_bar, h1, h2, h3, z, d1, d2, d3) --------------------------------
    ret_dims = [params[7][0].shape[1]] + [params[l][0].shape[1] for l in range(7)]
    slice_widths = [_round_up(d, lane_pack) for d in ret_dims]
    ret_offsets, off = [], 0
    for sw in slice_widths:
        ret_offsets.append(off)
        off += sw
    packed_w = off
    pad_cols = _round_up(packed_w, 128) - packed_w
    packed_total = packed_w + pad_cols

    # layer (production) order l -> return position (l + 1) % 8
    relu_flags = [True, True, True, False, True, True, True, False]
    layer_meta = tuple(
        (relu_flags[l], douts_p[l],
         ret_offsets[(l + 1) % 8], slice_widths[(l + 1) % 8])
        for l in range(8))

    # ---- rows: avoid a padding copy when N is already tm-aligned -----------
    n_pad = _round_up(n, tm)
    x_in = x.astype(jnp.float32)
    if n_pad != n:
        # TODO(synk): a masked short last tile would avoid this copy; padded
        # rows only produce relu(bias) garbage that callers must slice away.
        x_in = jnp.zeros((n_pad, n_input), jnp.float32).at[:n].set(x_in)

    in_specs = [pl.BlockSpec((tm, n_input), lambda i: (i, 0))]
    flat = [x_in]
    for w_p in w_padded:
        in_specs.append(pl.BlockSpec(w_p.shape, lambda i: (0, 0)))  # resident
        flat.append(w_p)
    in_specs.append(pl.BlockSpec(b_all.shape, lambda i: (0, 0)))    # resident
    flat.append(b_all)

    kernel = _make_ae_kernel(layer_meta, packed_w, pad_cols)

    packed = pl.pallas_call(
        kernel,
        grid=(n_pad // tm,),
        in_specs=in_specs,
        out_specs=pl.BlockSpec((tm, packed_total), lambda i: (i, 0)),
        out_shape=jax.ShapeDtypeStruct((n_pad, packed_total), jnp.float32),
        compiler_params=pltpu.CompilerParams(
            dimension_semantics=("parallel",)),
    )(*flat)

    layout = list(zip(ret_offsets, ret_dims))
    return packed, layout


def ae_forward(x, params, *, tm=512):
    """Convenience wrapper matching the PyTorch module's return signature:
    (x_bar, enc_h1, enc_h2, enc_h3, z, dec_h1, dec_h2, dec_h3).
    Perf-sensitive consumers should use ae_forward_packed to avoid re-reading
    the slab just to split it."""
    n = x.shape[0]
    packed, layout = ae_forward_packed(x, params, tm=tm)
    return tuple(packed[:n, off:off + d] for off, d in layout)


def ae_reference_f32(x, params):
    """Plain-JAX f32 reference (matches the PyTorch module's math)."""
    def lin(v, w, b, relu):
        y = v @ w + b
        return jnp.maximum(y, 0.0) if relu else y
    h1 = lin(x, *params[0], True)
    h2 = lin(h1, *params[1], True)
    h3 = lin(h2, *params[2], True)
    z = lin(h3, *params[3], False)
    d1 = lin(z, *params[4], True)
    d2 = lin(d1, *params[5], True)
    d3 = lin(d2, *params[6], True)
    xbar = lin(d3, *params[7], False)
    return (xbar, h1, h2, h3, z, d1, d2, d3)


def ae_reference_bf16(x, params):
    """Reference with the exact numerics the kernel uses: bf16 MXU operands,
    f32 accumulation and f32 bias/ReLU epilogue."""
    def lin(v, w, b, relu):
        y = jnp.dot(v.astype(jnp.bfloat16), w.astype(jnp.bfloat16),
                    preferred_element_type=jnp.float32) + b
        return jnp.maximum(y, 0.0) if relu else y
    h1 = lin(x, *params[0], True)
    h2 = lin(h1, *params[1], True)
    h3 = lin(h2, *params[2], True)
    z = lin(h3, *params[3], False)
    d1 = lin(z, *params[4], True)
    d2 = lin(d1, *params[5], True)
    d3 = lin(d2, *params[6], True)
    xbar = lin(d3, *params[7], False)
    return (xbar, h1, h2, h3, z, d1, d2, d3)


def init_params(key, dims):
    """dims: list of (in, out) per layer. Uniform init like PyTorch default."""
    params = []
    for (din, dout) in dims:
        key, kw, kb = jax.random.split(key, 3)
        bound = 1.0 / jnp.sqrt(din)
        w = jax.random.uniform(kw, (din, dout), jnp.float32, -bound, bound)
        b = jax.random.uniform(kb, (1, dout), jnp.float32, -bound, bound)
        params.append((w, b))
    return params


if __name__ == "__main__":
    # Small synthetic AE config (same layer structure as the PyTorch module).
    n_input = 16
    n_enc_1, n_enc_2, n_enc_3 = 32, 32, 16
    n_z = 8
    n_dec_1, n_dec_2, n_dec_3 = 16, 32, 32
    N = 1024   # rows; tm=512 -> grid of 2 (even: both v7x TCs get work)

    layer_dims = [
        (n_input, n_enc_1), (n_enc_1, n_enc_2), (n_enc_2, n_enc_3), (n_enc_3, n_z),
        (n_z, n_dec_1), (n_dec_1, n_dec_2), (n_dec_2, n_dec_3), (n_dec_3, n_input),
    ]

    key = jax.random.PRNGKey(0)
    key, kx = jax.random.split(key)
    x = jax.random.normal(kx, (N, n_input), jnp.float32)
    params = init_params(key, layer_dims)

    outs = ae_forward(x, params, tm=512)
    outs = jax.block_until_ready(outs)

    refs_bf16 = ae_reference_bf16(x, params)   # identical numerics to kernel
    refs_f32 = ae_reference_f32(x, params)     # module's f32 math
    for o, rb, rf in zip(outs, refs_bf16, refs_f32):
        assert o.shape == rf.shape, (o.shape, rf.shape)
        assert jnp.allclose(o, rb, atol=1e-4, rtol=1e-4), "mismatch vs bf16 reference"
        assert jnp.allclose(o, rf, atol=1e-1, rtol=1e-1), "mismatch vs f32 reference"

    print("KERNEL_OK")
</pallas_src>

<mosaic_0001>
module attributes {stable_mosaic.version = 11 : i64} {
  func.func @ae_kernel(%arg0: i32, %arg1: memref<512x16xf32, #tpu.memory_space<vmem>>, %arg2: memref<16x128xbf16, #tpu.memory_space<vmem>>, %arg3: memref<128x128xbf16, #tpu.memory_space<vmem>>, %arg4: memref<128x128xbf16, #tpu.memory_space<vmem>>, %arg5: memref<128x128xbf16, #tpu.memory_space<vmem>>, %arg6: memref<128x128xbf16, #tpu.memory_space<vmem>>, %arg7: memref<128x128xbf16, #tpu.memory_space<vmem>>, %arg8: memref<128x128xbf16, #tpu.memory_space<vmem>>, %arg9: memref<128x128xbf16, #tpu.memory_space<vmem>>, %arg10: memref<8x128xf32, #tpu.memory_space<vmem>>, %arg11: memref<512x256xf32, #tpu.memory_space<vmem>>) attributes {dimension_semantics = [#tpu.dimension_semantics<parallel>], iteration_bounds = array<i64: 2>, scalar_prefetch = 0 : i64, scratch_operands = 0 : i64, tpu.core_type = #tpu.core_type<tc>, window_params = [{transform_indices = @transform_0, window_bounds = array<i64: 512, 16>}, {pipeline_mode = #tpu.pipeline_mode<synchronous>, transform_indices = @transform_1, window_bounds = array<i64: 16, 128>}, {pipeline_mode = #tpu.pipeline_mode<synchronous>, transform_indices = @transform_2, window_bounds = array<i64: 128, 128>}, {pipeline_mode = #tpu.pipeline_mode<synchronous>, transform_indices = @transform_3, window_bounds = array<i64: 128, 128>}, {pipeline_mode = #tpu.pipeline_mode<synchronous>, transform_indices = @transform_4, window_bounds = array<i64: 128, 128>}, {pipeline_mode = #tpu.pipeline_mode<synchronous>, transform_indices = @transform_5, window_bounds = array<i64: 128, 128>}, {pipeline_mode = #tpu.pipeline_mode<synchronous>, transform_indices = @transform_6, window_bounds = array<i64: 128, 128>}, {pipeline_mode = #tpu.pipeline_mode<synchronous>, transform_indices = @transform_7, window_bounds = array<i64: 128, 128>}, {pipeline_mode = #tpu.pipeline_mode<synchronous>, transform_indices = @transform_8, window_bounds = array<i64: 128, 128>}, {pipeline_mode = #tpu.pipeline_mode<synchronous>, transform_indices = @transform_9, window_bounds = array<i64: 8, 128>}, {transform_indices = @transform_10, window_bounds = array<i64: 512, 256>}]} {
    %c0 = arith.constant 0 : index
    %c0_0 = arith.constant 0 : index
    %0 = vector.load %arg1[%c0, %c0_0] : memref<512x16xf32, #tpu.memory_space<vmem>>, vector<512x16xf32>
    %1 = arith.truncf %0 : vector<512x16xf32> to vector<512x16xbf16>
    %c0_1 = arith.constant 0 : index
    %c0_2 = arith.constant 0 : index
    %2 = vector.load %arg2[%c0_1, %c0_2] : memref<16x128xbf16, #tpu.memory_space<vmem>>, vector<16x128xbf16>
    %cst = arith.constant dense<0.000000e+00> : vector<512x128xf32>
    %3 = tpu.matmul %1, %2, %cst {dimension_numbers = #tpu.dot_dimension_numbers<[1], [0], [0], [1], [0, 0, 1, 1], [], []>} : vector<512x16xbf16>, vector<16x128xbf16>, vector<512x128xf32> -> vector<512x128xf32>
    %c0_3 = arith.constant 0 : index
    %c0_4 = arith.constant 0 : index
    %4 = vector.load %arg10[%c0_3, %c0_4] : memref<8x128xf32, #tpu.memory_space<vmem>>, vector<1x128xf32>
    %5 = vector.broadcast %4 : vector<1x128xf32> to vector<512x128xf32>
    %6 = arith.addf %3, %5 : vector<512x128xf32>
    %cst_5 = arith.constant 0.000000e+00 : f32
    %7 = vector.broadcast %cst_5 : f32 to vector<512x128xf32>
    %8 = arith.maximumf %6, %7 : vector<512x128xf32>
    %9 = vector.extract_strided_slice %8 {offsets = [0, 0], sizes = [512, 32], strides = [1, 1]} : vector<512x128xf32> to vector<512x32xf32>
    %c0_6 = arith.constant 0 : index
    %c32 = arith.constant 32 : index
    %10 = vector.load %arg11[%c0_6, %c32] : memref<512x256xf32, #tpu.memory_space<vmem>>, vector<512x32xf32>
    tpu.vector_store %arg11[%c0_6, %c32], %9 {strides = array<i32>} : memref<512x256xf32, #tpu.memory_space<vmem>>, vector<512x32xf32>,
    %11 = arith.truncf %8 : vector<512x128xf32> to vector<512x128xbf16>
    %c0_7 = arith.constant 0 : index
    %c0_8 = arith.constant 0 : index
    %12 = vector.load %arg3[%c0_7, %c0_8] : memref<128x128xbf16, #tpu.memory_space<vmem>>, vector<128x128xbf16>
    %cst_9 = arith.constant dense<0.000000e+00> : vector<512x128xf32>
    %13 = tpu.matmul %11, %12, %cst_9 {dimension_numbers = #tpu.dot_dimension_numbers<[1], [0], [0], [1], [0, 0, 1, 1], [], []>} : vector<512x128xbf16>, vector<128x128xbf16>, vector<512x128xf32> -> vector<512x128xf32>
    %c1 = arith.constant 1 : index
    %c0_10 = arith.constant 0 : index
    %14 = vector.load %arg10[%c1, %c0_10] : memref<8x128xf32, #tpu.memory_space<vmem>>, vector<1x128xf32>
    %15 = vector.broadcast %14 : vector<1x128xf32> to vector<512x128xf32>
    %16 = arith.addf %13, %15 : vector<512x128xf32>
    %cst_11 = arith.constant 0.000000e+00 : f32
    %17 = vector.broadcast %cst_11 : f32 to vector<512x128xf32>
    %18 = arith.maximumf %16, %17 : vector<512x128xf32>
    %19 = vector.extract_strided_slice %18 {offsets = [0, 0], sizes = [512, 32], strides = [1, 1]} : vector<512x128xf32> to vector<512x32xf32>
    %c0_12 = arith.constant 0 : index
    %c64 = arith.constant 64 : index
    %20 = vector.load %arg11[%c0_12, %c64] : memref<512x256xf32, #tpu.memory_space<vmem>>, vector<512x32xf32>
    tpu.vector_store %arg11[%c0_12, %c64], %19 {strides = array<i32>} : memref<512x256xf32, #tpu.memory_space<vmem>>, vector<512x32xf32>,
    %21 = arith.truncf %18 : vector<512x128xf32> to vector<512x128xbf16>
    %c0_13 = arith.constant 0 : index
    %c0_14 = arith.constant 0 : index
    %22 = vector.load %arg4[%c0_13, %c0_14] : memref<128x128xbf16, #tpu.memory_space<vmem>>, vector<128x128xbf16>
    %cst_15 = arith.constant dense<0.000000e+00> : vector<512x128xf32>
    %23 = tpu.matmul %21, %22, %cst_15 {dimension_numbers = #tpu.dot_dimension_numbers<[1], [0], [0], [1], [0, 0, 1, 1], [], []>} : vector<512x128xbf16>, vector<128x128xbf16>, vector<512x128xf32> -> vector<512x128xf32>
    %c2 = arith.constant 2 : index
    %c0_16 = arith.constant 0 : index
    %24 = vector.load %arg10[%c2, %c0_16] : memref<8x128xf32, #tpu.memory_space<vmem>>, vector<1x128xf32>
    %25 = vector.broadcast %24 : vector<1x128xf32> to vector<512x128xf32>
    %26 = arith.addf %23, %25 : vector<512x128xf32>
    %cst_17 = arith.constant 0.000000e+00 : f32
    %27 = vector.broadcast %cst_17 : f32 to vector<512x128xf32>
    %28 = arith.maximumf %26, %27 : vector<512x128xf32>
    %29 = vector.extract_strided_slice %28 {offsets = [0, 0], sizes = [512, 32], strides = [1, 1]} : vector<512x128xf32> to vector<512x32xf32>
    %c0_18 = arith.constant 0 : index
    %c96 = arith.constant 96 : index
    %30 = vector.load %arg11[%c0_18, %c96] : memref<512x256xf32, #tpu.memory_space<vmem>>, vector<512x32xf32>
    tpu.vector_store %arg11[%c0_18, %c96], %29 {strides = array<i32>} : memref<512x256xf32, #tpu.memory_space<vmem>>, vector<512x32xf32>,
    %31 = arith.truncf %28 : vector<512x128xf32> to vector<512x128xbf16>
    %c0_19 = arith.constant 0 : index
    %c0_20 = arith.constant 0 : index
    %32 = vector.load %arg5[%c0_19, %c0_20] : memref<128x128xbf16, #tpu.memory_space<vmem>>, vector<128x128xbf16>
    %cst_21 = arith.constant dense<0.000000e+00> : vector<512x128xf32>
    %33 = tpu.matmul %31, %32, %cst_21 {dimension_numbers = #tpu.dot_dimension_numbers<[1], [0], [0], [1], [0, 0, 1, 1], [], []>} : vector<512x128xbf16>, vector<128x128xbf16>, vector<512x128xf32> -> vector<512x128xf32>
    %c3 = arith.constant 3 : index
    %c0_22 = arith.constant 0 : index
    %34 = vector.load %arg10[%c3, %c0_22] : memref<8x128xf32, #tpu.memory_space<vmem>>, vector<1x128xf32>
    %35 = vector.broadcast %34 : vector<1x128xf32> to vector<512x128xf32>
    %36 = arith.addf %33, %35 : vector<512x128xf32>
    %37 = vector.extract_strided_slice %36 {offsets = [0, 0], sizes = [512, 32], strides = [1, 1]} : vector<512x128xf32> to vector<512x32xf32>
    %c0_23 = arith.constant 0 : index
    %c128 = arith.constant 128 : index
    %38 = vector.load %arg11[%c0_23, %c128] : memref<512x256xf32, #tpu.memory_space<vmem>>, vector<512x32xf32>
    tpu.vector_store %arg11[%c0_23, %c128], %37 {strides = array<i32>} : memref<512x256xf32, #tpu.memory_space<vmem>>, vector<512x32xf32>,
    %39 = arith.truncf %36 : vector<512x128xf32> to vector<512x128xbf16>
    %c0_24 = arith.constant 0 : index
    %c0_25 = arith.constant 0 : index
    %40 = vector.load %arg6[%c0_24, %c0_25] : memref<128x128xbf16, #tpu.memory_space<vmem>>, vector<128x128xbf16>
    %cst_26 = arith.constant dense<0.000000e+00> : vector<512x128xf32>
    %41 = tpu.matmul %39, %40, %cst_26 {dimension_numbers = #tpu.dot_dimension_numbers<[1], [0], [0], [1], [0, 0, 1, 1], [], []>} : vector<512x128xbf16>, vector<128x128xbf16>, vector<512x128xf32> -> vector<512x128xf32>
    %c4 = arith.constant 4 : index
    %c0_27 = arith.constant 0 : index
    %42 = vector.load %arg10[%c4, %c0_27] : memref<8x128xf32, #tpu.memory_space<vmem>>, vector<1x128xf32>
    %43 = vector.broadcast %42 : vector<1x128xf32> to vector<512x128xf32>
    %44 = arith.addf %41, %43 : vector<512x128xf32>
    %cst_28 = arith.constant 0.000000e+00 : f32
    %45 = vector.broadcast %cst_28 : f32 to vector<512x128xf32>
    %46 = arith.maximumf %44, %45 : vector<512x128xf32>
    %47 = vector.extract_strided_slice %46 {offsets = [0, 0], sizes = [512, 32], strides = [1, 1]} : vector<512x128xf32> to vector<512x32xf32>
    %c0_29 = arith.constant 0 : index
    %c160 = arith.constant 160 : index
    %48 = vector.load %arg11[%c0_29, %c160] : memref<512x256xf32, #tpu.memory_space<vmem>>, vector<512x32xf32>
    tpu.vector_store %arg11[%c0_29, %c160], %47 {strides = array<i32>} : memref<512x256xf32, #tpu.memory_space<vmem>>, vector<512x32xf32>,
    %49 = arith.truncf %46 : vector<512x128xf32> to vector<512x128xbf16>
    %c0_30 = arith.constant 0 : index
    %c0_31 = arith.constant 0 : index
    %50 = vector.load %arg7[%c0_30, %c0_31] : memref<128x128xbf16, #tpu.memory_space<vmem>>, vector<128x128xbf16>
    %cst_32 = arith.constant dense<0.000000e+00> : vector<512x128xf32>
    %51 = tpu.matmul %49, %50, %cst_32 {dimension_numbers = #tpu.dot_dimension_numbers<[1], [0], [0], [1], [0, 0, 1, 1], [], []>} : vector<512x128xbf16>, vector<128x128xbf16>, vector<512x128xf32> -> vector<512x128xf32>
    %c5 = arith.constant 5 : index
    %c0_33 = arith.constant 0 : index
    %52 = vector.load %arg10[%c5, %c0_33] : memref<8x128xf32, #tpu.memory_space<vmem>>, vector<1x128xf32>
    %53 = vector.broadcast %52 : vector<1x128xf32> to vector<512x128xf32>
    %54 = arith.addf %51, %53 : vector<512x128xf32>
    %cst_34 = arith.constant 0.000000e+00 : f32
    %55 = vector.broadcast %cst_34 : f32 to vector<512x128xf32>
    %56 = arith.maximumf %54, %55 : vector<512x128xf32>
    %57 = vector.extract_strided_slice %56 {offsets = [0, 0], sizes = [512, 32], strides = [1, 1]} : vector<512x128xf32> to vector<512x32xf32>
    %c0_35 = arith.constant 0 : index
    %c192 = arith.constant 192 : index
    %58 = vector.load %arg11[%c0_35, %c192] : memref<512x256xf32, #tpu.memory_space<vmem>>, vector<512x32xf32>
    tpu.vector_store %arg11[%c0_35, %c192], %57 {strides = array<i32>} : memref<512x256xf32, #tpu.memory_space<vmem>>, vector<512x32xf32>,
    %59 = arith.truncf %56 : vector<512x128xf32> to vector<512x128xbf16>
    %c0_36 = arith.constant 0 : index
    %c0_37 = arith.constant 0 : index
    %60 = vector.load %arg8[%c0_36, %c0_37] : memref<128x128xbf16, #tpu.memory_space<vmem>>, vector<128x128xbf16>
    %cst_38 = arith.constant dense<0.000000e+00> : vector<512x128xf32>
    %61 = tpu.matmul %59, %60, %cst_38 {dimension_numbers = #tpu.dot_dimension_numbers<[1], [0], [0], [1], [0, 0, 1, 1], [], []>} : vector<512x128xbf16>, vector<128x128xbf16>, vector<512x128xf32> -> vector<512x128xf32>
    %c6 = arith.constant 6 : index
    %c0_39 = arith.constant 0 : index
    %62 = vector.load %arg10[%c6, %c0_39] : memref<8x128xf32, #tpu.memory_space<vmem>>, vector<1x128xf32>
    %63 = vector.broadcast %62 : vector<1x128xf32> to vector<512x128xf32>
    %64 = arith.addf %61, %63 : vector<512x128xf32>
    %cst_40 = arith.constant 0.000000e+00 : f32
    %65 = vector.broadcast %cst_40 : f32 to vector<512x128xf32>
    %66 = arith.maximumf %64, %65 : vector<512x128xf32>
    %67 = vector.extract_strided_slice %66 {offsets = [0, 0], sizes = [512, 32], strides = [1, 1]} : vector<512x128xf32> to vector<512x32xf32>
    %c0_41 = arith.constant 0 : index
    %c224 = arith.constant 224 : index
    %68 = vector.load %arg11[%c0_41, %c224] : memref<512x256xf32, #tpu.memory_space<vmem>>, vector<512x32xf32>
    tpu.vector_store %arg11[%c0_41, %c224], %67 {strides = array<i32>} : memref<512x256xf32, #tpu.memory_space<vmem>>, vector<512x32xf32>,
    %69 = arith.truncf %66 : vector<512x128xf32> to vector<512x128xbf16>
    %c0_42 = arith.constant 0 : index
    %c0_43 = arith.constant 0 : index
    %70 = vector.load %arg9[%c0_42, %c0_43] : memref<128x128xbf16, #tpu.memory_space<vmem>>, vector<128x128xbf16>
    %cst_44 = arith.constant dense<0.000000e+00> : vector<512x128xf32>
    %71 = tpu.matmul %69, %70, %cst_44 {dimension_numbers = #tpu.dot_dimension_numbers<[1], [0], [0], [1], [0, 0, 1, 1], [], []>} : vector<512x128xbf16>, vector<128x128xbf16>, vector<512x128xf32> -> vector<512x128xf32>
    %c7 = arith.constant 7 : index
    %c0_45 = arith.constant 0 : index
    %72 = vector.load %arg10[%c7, %c0_45] : memref<8x128xf32, #tpu.memory_space<vmem>>, vector<1x128xf32>
    %73 = vector.broadcast %72 : vector<1x128xf32> to vector<512x128xf32>
    %74 = arith.addf %71, %73 : vector<512x128xf32>
    %75 = vector.extract_strided_slice %74 {offsets = [0, 0], sizes = [512, 32], strides = [1, 1]} : vector<512x128xf32> to vector<512x32xf32>
    %c0_46 = arith.constant 0 : index
    %c0_47 = arith.constant 0 : index
    %76 = vector.load %arg11[%c0_46, %c0_47] : memref<512x256xf32, #tpu.memory_space<vmem>>, vector<512x32xf32>
    tpu.vector_store %arg11[%c0_46, %c0_47], %75 {strides = array<i32>} : memref<512x256xf32, #tpu.memory_space<vmem>>, vector<512x32xf32>,
    return
  }
  func.func @transform_0(%arg0: i32) -> (i32, i32) {
    %c0_i32 = arith.constant 0 : i32
    %c0_i32_0 = arith.constant 0 : i32
    return %arg0, %c0_i32 : i32, i32
  }
  func.func @transform_1(%arg0: i32) -> (i32, i32) {
    %c0_i32 = arith.constant 0 : i32
    %c0_i32_0 = arith.constant 0 : i32
    %c0_i32_1 = arith.constant 0 : i32
    return %c0_i32, %c0_i32_0 : i32, i32
  }
  func.func @transform_2(%arg0: i32) -> (i32, i32) {
    %c0_i32 = arith.constant 0 : i32
    %c0_i32_0 = arith.constant 0 : i32
    %c0_i32_1 = arith.constant 0 : i32
    return %c0_i32, %c0_i32_0 : i32, i32
  }
  func.func @transform_3(%arg0: i32) -> (i32, i32) {
    %c0_i32 = arith.constant 0 : i32
    %c0_i32_0 = arith.constant 0 : i32
    %c0_i32_1 = arith.constant 0 : i32
    return %c0_i32, %c0_i32_0 : i32, i32
  }
  func.func @transform_4(%arg0: i32) -> (i32, i32) {
    %c0_i32 = arith.constant 0 : i32
    %c0_i32_0 = arith.constant 0 : i32
    %c0_i32_1 = arith.constant 0 : i32
    return %c0_i32, %c0_i32_0 : i32, i32
  }
  func.func @transform_5(%arg0: i32) -> (i32, i32) {
    %c0_i32 = arith.constant 0 : i32
    %c0_i32_0 = arith.constant 0 : i32
    %c0_i32_1 = arith.constant 0 : i32
    return %c0_i32, %c0_i32_0 : i32, i32
  }
  func.func @transform_6(%arg0: i32) -> (i32, i32) {
    %c0_i32 = arith.constant 0 : i32
    %c0_i32_0 = arith.constant 0 : i32
    %c0_i32_1 = arith.constant 0 : i32
    return %c0_i32, %c0_i32_0 : i32, i32
  }
  func.func @transform_7(%arg0: i32) -> (i32, i32) {
    %c0_i32 = arith.constant 0 : i32
    %c0_i32_0 = arith.constant 0 : i32
    %c0_i32_1 = arith.constant 0 : i32
    return %c0_i32, %c0_i32_0 : i32, i32
  }
  func.func @transform_8(%arg0: i32) -> (i32, i32) {
    %c0_i32 = arith.constant 0 : i32
    %c0_i32_0 = arith.constant 0 : i32
    %c0_i32_1 = arith.constant 0 : i32
    return %c0_i32, %c0_i32_0 : i32, i32
  }
  func.func @transform_9(%arg0: i32) -> (i32, i32) {
    %c0_i32 = arith.constant 0 : i32
    %c0_i32_0 = arith.constant 0 : i32
    %c0_i32_1 = arith.constant 0 : i32
    return %c0_i32, %c0_i32_0 : i32, i32
  }
  func.func @transform_10(%arg0: i32) -> (i32, i32) {
    %c0_i32 = arith.constant 0 : i32
    %c0_i32_0 = arith.constant 0 : i32
    return %arg0, %c0_i32 : i32, i32
  }
}

</mosaic_0001>

<llo_original>
// kernel: tpu_custom_call.1
$region0: #{tpu_custom_call.1}
  #allocation0 [shape = 'u32[]', space=smem, size = 0x4, offset = 0x4, fixed_abs, tag = 'smem constant byte address 0x4 - core index']
  #allocation1 [shape = 'u32[144,128]{1,0:T(1,128)}', space=vmem, size = 0x12000, scoped, tag = 'internal scratch']
  %s0 = inlined_call_operand.vmem [shape: f32[1024,16], index: 0, kind: input, shape index: {}]
  %s1 = inlined_call_operand.vmem [shape: bf16[16,128], index: 1, kind: input, shape index: {}]
  %s2 = inlined_call_operand.vmem [shape: bf16[128,128], index: 2, kind: input, shape index: {}]
  %s3 = inlined_call_operand.vmem [shape: bf16[128,128], index: 3, kind: input, shape index: {}]
  %s4 = inlined_call_operand.vmem [shape: bf16[128,128], index: 4, kind: input, shape index: {}]
  %s5 = inlined_call_operand.vmem [shape: bf16[128,128], index: 5, kind: input, shape index: {}]
  %s6 = inlined_call_operand.vmem [shape: bf16[128,128], index: 6, kind: input, shape index: {}]
  %s7 = inlined_call_operand.vmem [shape: bf16[128,128], index: 7, kind: input, shape index: {}]
  %s8 = inlined_call_operand.vmem [shape: bf16[128,128], index: 8, kind: input, shape index: {}]
  %s9 = inlined_call_operand.vmem [shape: f32[8,128], index: 9, kind: input, shape index: {}]
  %s10 = inlined_call_operand.hbm [shape: f32[1024,256], index: 10, kind: output, shape index: {}]
  %s11 = sld [smem:[#allocation0]]
  $region73: #{tpu_custom_call.1} parent=0
    _
  %s13 = ssub.s32 1, %s11
  %s14 = scalar_select 0, %s13, %s11
  $region1: #{tpu_custom_call.1} parent=0
    #allocation2 [shape = 'u8[1048576]{0}', space=vmem, size = 0x100000, scoped, tag = 'output window, operand 0']
    #allocation3 [shape = 's32[2]{0}', space=sflag, size = 0x8, scoped, tag = 'scoped memory for tpu_custom_call.1']
    %15 = vsyncpa [#allocation3], 0
    %s16 = scalar_lea.sflag [#allocation3], 1
    %17 = vsyncpa %s16, 0
    loop: start=0, step=1, limit=4
    $region2: #{tpu_custom_call.1} parent=1 // loop_pre_header
      _
    $region3: #{tpu_custom_call.1} parent=1 // loop_header
      %s19 = sphi 0, %s23
      %p20 = scmp.ge.s32.totalorder %s19, 4
      %s29 = sphi 0, %s31
      %s32 = sphi 0, %s29
      %s33 = sphi 0, %s32
      %s49 = sphi 0, %s33
      %s53 = sphi 0, %s53
      %s55 = sphi 0, %s53
      %s56 = sphi 0, %s55
      %s70 = sphi 0, %s56
      %s74 = sphi 0, %s74
      %s76 = sphi 0, %s74
      %s77 = sphi 0, %s76
      %s91 = sphi 0, %s77
      %s95 = sphi 0, %s95
      %s97 = sphi 0, %s95
      %s98 = sphi 0, %s97
      %s112 = sphi 0, %s98
      %s116 = sphi 0, %s116
      %s118 = sphi 0, %s116
      %s119 = sphi 0, %s118
      %s133 = sphi 0, %s119
      %s137 = sphi 0, %s137
      %s139 = sphi 0, %s137
      %s140 = sphi 0, %s139
      %s154 = sphi 0, %s140
      %s158 = sphi 0, %s158
      %s160 = sphi 0, %s158
      %s161 = sphi 0, %s160
      %s175 = sphi 0, %s161
      %s179 = sphi 0, %s179
      %s181 = sphi 0, %s179
      %s182 = sphi 0, %s181
      %s196 = sphi 0, %s182
      %s200 = sphi 0, %s200
      %s202 = sphi 0, %s200
      %s203 = sphi 0, %s202
      %s217 = sphi 0, %s203
      %s221 = sphi 0, %s221
      %s223 = sphi 0, %s221
      %s224 = sphi 0, %s223
      %s238 = sphi 0, %s224
      %s244 = sphi 0, %s246
      %s247 = sphi 0, %s244
      %s248 = sphi 0, %s247
      %s264 = sphi 0, %s248
    $region4: #{tpu_custom_call.1} parent=1 // loop_header_branch
      %22 = sbr.rel (%p20) target = $region8
    $region5: #{tpu_custom_call.1} parent=1 // loop_body
      %s24 = ssub.s32 %s19, 1
      %s25 = ssub.s32 %s19, 2
      %s26 = sadd.s32 %s19, 1
      %s27 = ssub.s32 %s19, %s26
      %p28 = scmp.eq.s32.totalorder %s27, 0
      %s30 = sadd.s32 %s29, 1
      %s31 = scalar_select %p28, %s29, %s30
      %p34 = pneg %p28
      %p35 = scmp.eq.s32.totalorder %s19, 1
      %p36 = por %p34, %p35
      %p37 = scmp.ne.s32.totalorder %s29, %s32
      %p38 = scmp.eq.s32.totalorder %s19, 0
      %p39 = por %p37, %p38
      %p40 = scmp.ne.s32.totalorder %s29, %s32
      %p41 = scmp.eq.s32.totalorder %s24, 1
      %p42 = por %p40, %p41
      %p43 = scmp.ne.s32.totalorder %s32, %s33
      %p44 = scmp.eq.s32.totalorder %s24, 0
      %p45 = por %p43, %p44
      %p46 = scmp.ne.s32.totalorder %s32, %s33
      %p47 = scmp.eq.s32.totalorder %s25, 1
      %p48 = por %p46, %p47
      %p50 = scmp.ne.s32.totalorder %s33, %s49
      %p51 = scmp.eq.s32.totalorder %s25, 0
      %p52 = por %p50, %p51
      %s54 = sadd.s32 %s53, 1
      %p57 = scmp.eq.s32.totalorder %s19, 1
      %p58 = scmp.ne.s32.totalorder %s53, %s55
      %p59 = scmp.eq.s32.totalorder %s19, 0
      %p60 = por %p58, %p59
      %p61 = scmp.ne.s32.totalorder %s53, %s55
      %p62 = scmp.eq.s32.totalorder %s24, 1
      %p63 = por %p61, %p62
      %p64 = scmp.ne.s32.totalorder %s55, %s56
      %p65 = scmp.eq.s32.totalorder %s24, 0
      %p66 = por %p64, %p65
      %p67 = scmp.ne.s32.totalorder %s55, %s56
      %p68 = scmp.eq.s32.totalorder %s25, 1
      %p69 = por %p67, %p68
      %p71 = scmp.ne.s32.totalorder %s56, %s70
      %p72 = scmp.eq.s32.totalorder %s25, 0
      %p73 = por %p71, %p72
      %s75 = sadd.s32 %s74, 1
      %p78 = scmp.eq.s32.totalorder %s19, 1
      %p79 = scmp.ne.s32.totalorder %s74, %s76
      %p80 = scmp.eq.s32.totalorder %s19, 0
      %p81 = por %p79, %p80
      %p82 = scmp.ne.s32.totalorder %s74, %s76
      %p83 = scmp.eq.s32.totalorder %s24, 1
      %p84 = por %p82, %p83
      %p85 = scmp.ne.s32.totalorder %s76, %s77
      %p86 = scmp.eq.s32.totalorder %s24, 0
      %p87 = por %p85, %p86
      %p88 = scmp.ne.s32.totalorder %s76, %s77
      %p89 = scmp.eq.s32.totalorder %s25, 1
      %p90 = por %p88, %p89
      %p92 = scmp.ne.s32.totalorder %s77, %s91
      %p93 = scmp.eq.s32.totalorder %s25, 0
      %p94 = por %p92, %p93
      %s96 = sadd.s32 %s95, 1
      %p99 = scmp.eq.s32.totalorder %s19, 1
      %p100 = scmp.ne.s32.totalorder %s95, %s97
      %p101 = scmp.eq.s32.totalorder %s19, 0
      %p102 = por %p100, %p101
      %p103 = scmp.ne.s32.totalorder %s95, %s97
      %p104 = scmp.eq.s32.totalorder %s24, 1
      %p105 = por %p103, %p104
      %p106 = scmp.ne.s32.totalorder %s97, %s98
      %p107 = scmp.eq.s32.totalorder %s24, 0
      %p108 = por %p106, %p107
      %p109 = scmp.ne.s32.totalorder %s97, %s98
      %p110 = scmp.eq.s32.totalorder %s25, 1
      %p111 = por %p109, %p110
      %p113 = scmp.ne.s32.totalorder %s98, %s112
      %p114 = scmp.eq.s32.totalorder %s25, 0
      %p115 = por %p113, %p114
      %s117 = sadd.s32 %s116, 1
      %p120 = scmp.eq.s32.totalorder %s19, 1
      %p121 = scmp.ne.s32.totalorder %s116, %s118
      %p122 = scmp.eq.s32.totalorder %s19, 0
      %p123 = por %p121, %p122
      %p124 = scmp.ne.s32.totalorder %s116, %s118
      %p125 = scmp.eq.s32.totalorder %s24, 1
      %p126 = por %p124, %p125
      %p127 = scmp.ne.s32.totalorder %s118, %s119
      %p128 = scmp.eq.s32.totalorder %s24, 0
      %p129 = por %p127, %p128
      %p130 = scmp.ne.s32.totalorder %s118, %s119
      %p131 = scmp.eq.s32.totalorder %s25, 1
      %p132 = por %p130, %p131
      %p134 = scmp.ne.s32.totalorder %s119, %s133
      %p135 = scmp.eq.s32.totalorder %s25, 0
      %p136 = por %p134, %p135
      %s138 = sadd.s32 %s137, 1
      %p141 = scmp.eq.s32.totalorder %s19, 1
      %p142 = scmp.ne.s32.totalorder %s137, %s139
      %p143 = scmp.eq.s32.totalorder %s19, 0
      %p144 = por %p142, %p143
      %p145 = scmp.ne.s32.totalorder %s137, %s139
      %p146 = scmp.eq.s32.totalorder %s24, 1
      %p147 = por %p145, %p146
      %p148 = scmp.ne.s32.totalorder %s139, %s140
      %p149 = scmp.eq.s32.totalorder %s24, 0
      %p150 = por %p148, %p149
      %p151 = scmp.ne.s32.totalorder %s139, %s140
      %p152 = scmp.eq.s32.totalorder %s25, 1
      %p153 = por %p151, %p152
      %p155 = scmp.ne.s32.totalorder %s140, %s154
      %p156 = scmp.eq.s32.totalorder %s25, 0
      %p157 = por %p155, %p156
      %s159 = sadd.s32 %s158, 1
      %p162 = scmp.eq.s32.totalorder %s19, 1
      %p163 = scmp.ne.s32.totalorder %s158, %s160
      %p164 = scmp.eq.s32.totalorder %s19, 0
      %p165 = por %p163, %p164
      %p166 = scmp.ne.s32.totalorder %s158, %s160
      %p167 = scmp.eq.s32.totalorder %s24, 1
      %p168 = por %p166, %p167
      %p169 = scmp.ne.s32.totalorder %s160, %s161
      %p170 = scmp.eq.s32.totalorder %s24, 0
      %p171 = por %p169, %p170
      %p172 = scmp.ne.s32.totalorder %s160, %s161
      %p173 = scmp.eq.s32.totalorder %s25, 1
      %p174 = por %p172, %p173
      %p176 = scmp.ne.s32.totalorder %s161, %s175
      %p177 = scmp.eq.s32.totalorder %s25, 0
      %p178 = por %p176, %p177
      %s180 = sadd.s32 %s179, 1
      %p183 = scmp.eq.s32.totalorder %s19, 1
      %p184 = scmp.ne.s32.totalorder %s179, %s181
      %p185 = scmp.eq.s32.totalorder %s19, 0
      %p186 = por %p184, %p185
      %p187 = scmp.ne.s32.totalorder %s179, %s181
      %p188 = scmp.eq.s32.totalorder %s24, 1
      %p189 = por %p187, %p188
      %p190 = scmp.ne.s32.totalorder %s181, %s182
      %p191 = scmp.eq.s32.totalorder %s24, 0
      %p192 = por %p190, %p191
      %p193 = scmp.ne.s32.totalorder %s181, %s182
      %p194 = scmp.eq.s32.totalorder %s25, 1
      %p195 = por %p193, %p194
      %p197 = scmp.ne.s32.totalorder %s182, %s196
      %p198 = scmp.eq.s32.totalorder %s25, 0
      %p199 = por %p197, %p198
      %s201 = sadd.s32 %s200, 1
      %p204 = scmp.eq.s32.totalorder %s19, 1
      %p205 = scmp.ne.s32.totalorder %s200, %s202
      %p206 = scmp.eq.s32.totalorder %s19, 0
      %p207 = por %p205, %p206
      %p208 = scmp.ne.s32.totalorder %s200, %s202
      %p209 = scmp.eq.s32.totalorder %s24, 1
      %p210 = por %p208, %p209
      %p211 = scmp.ne.s32.totalorder %s202, %s203
      %p212 = scmp.eq.s32.totalorder %s24, 0
      %p213 = por %p211, %p212
      %p214 = scmp.ne.s32.totalorder %s202, %s203
      %p215 = scmp.eq.s32.totalorder %s25, 1
      %p216 = por %p214, %p215
      %p218 = scmp.ne.s32.totalorder %s203, %s217
      %p219 = scmp.eq.s32.totalorder %s25, 0
      %p220 = por %p218, %p219
      %s222 = sadd.s32 %s221, 1
      %p225 = scmp.eq.s32.totalorder %s19, 1
      %p226 = scmp.ne.s32.totalorder %s221, %s223
      %p227 = scmp.eq.s32.totalorder %s19, 0
      %p228 = por %p226, %p227
      %p229 = scmp.ne.s32.totalorder %s221, %s223
      %p230 = scmp.eq.s32.totalorder %s24, 1
      %p231 = por %p229, %p230
      %p232 = scmp.ne.s32.totalorder %s223, %s224
      %p233 = scmp.eq.s32.totalorder %s24, 0
      %p234 = por %p232, %p233
      %p235 = scmp.ne.s32.totalorder %s223, %s224
      %p236 = scmp.eq.s32.totalorder %s25, 1
      %p237 = por %p235, %p236
      %p239 = scmp.ne.s32.totalorder %s224, %s238
      %p240 = scmp.eq.s32.totalorder %s25, 0
      %p241 = por %p239, %p240
      %s242 = ssub.s32 %s19, %s26
      %p243 = scmp.eq.s32.totalorder %s242, 0
      %s245 = sadd.s32 %s244, 1
      %s246 = scalar_select %p243, %s244, %s245
      %p249 = pneg %p243
      %p250 = scmp.eq.s32.totalorder %s19, 1
      %p251 = por %p249, %p250
      %p252 = scmp.ne.s32.totalorder %s244, %s247
      %p253 = scmp.eq.s32.totalorder %s19, 0
      %p254 = por %p252, %p253
      %p255 = scmp.ne.s32.totalorder %s244, %s247
      %p256 = scmp.eq.s32.totalorder %s24, 1
      %p257 = por %p255, %p256
      %p258 = scmp.ne.s32.totalorder %s247, %s248
      %p259 = scmp.eq.s32.totalorder %s24, 0
      %p260 = por %p258, %p259
      %p261 = scmp.ne.s32.totalorder %s247, %s248
      %p262 = scmp.eq.s32.totalorder %s25, 1
      %p263 = por %p261, %p262
      %p265 = scmp.ne.s32.totalorder %s248, %s264
      %p266 = scmp.eq.s32.totalorder %s25, 0
      %p267 = por %p265, %p266
      %p268 = scmp.le.s32.totalorder 1, %s19
      %p269 = scmp.lt.s32.totalorder %s19, 3
      %p270 = pnand %p268, %p269
      %p271 = pneg %p270
      // Predicated region
      $region9: #{tpu_custom_call.1} parent=5 // pred_check
        _
      $region10: #{tpu_custom_call.1} parent=5 // pred_check_branch
        %273 = sbr.rel (%p270) target = $region12
      $region11: #{tpu_custom_call.1} parent=5 // pred_region
        %s274 = ssub.s32 %s19, 1
        // Predicated region
        $region13: #{tpu_custom_call.1} parent=11 // pred_check
          %p275 = pneg %p66
        $region14: #{tpu_custom_call.1} parent=11 // pred_check_branch
          %277 = sbr.rel (%p275) target = $region16
        $region15: #{tpu_custom_call.1} parent=11 // pred_region
          _
        $region16: #{tpu_custom_call.1} parent=11 // pred_fallthru
          _
        // Predicated region
        $region17: #{tpu_custom_call.1} parent=11 // pred_check
          %p278 = pneg %p87
        $region18: #{tpu_custom_call.1} parent=11 // pred_check_branch
          %280 = sbr.rel (%p278) target = $region20
        $region19: #{tpu_custom_call.1} parent=11 // pred_region
          _
        $region20: #{tpu_custom_call.1} parent=11 // pred_fallthru
          _
        // Predicated region
        $region21: #{tpu_custom_call.1} parent=11 // pred_check
          %p281 = pneg %p108
        $region22: #{tpu_custom_call.1} parent=11 // pred_check_branch
          %283 = sbr.rel (%p281) target = $region24
        $region23: #{tpu_custom_call.1} parent=11 // pred_region
          _
        $region24: #{tpu_custom_call.1} parent=11 // pred_fallthru
          _
        // Predicated region
        $region25: #{tpu_custom_call.1} parent=11 // pred_check
          %p284 = pneg %p129
        $region26: #{tpu_custom_call.1} parent=11 // pred_check_branch
          %286 = sbr.rel (%p284) target = $region28
        $region27: #{tpu_custom_call.1} parent=11 // pred_region
          _
        $region28: #{tpu_custom_call.1} parent=11 // pred_fallthru
          _
        // Predicated region
        $region29: #{tpu_custom_call.1} parent=11 // pred_check
          %p287 = pneg %p150
        $region30: #{tpu_custom_call.1} parent=11 // pred_check_branch
          %289 = sbr.rel (%p287) target = $region32
        $region31: #{tpu_custom_call.1} parent=11 // pred_region
          _
        $region32: #{tpu_custom_call.1} parent=11 // pred_fallthru
          _
        // Predicated region
        $region33: #{tpu_custom_call.1} parent=11 // pred_check
          %p290 = pneg %p171
        $region34: #{tpu_custom_call.1} parent=11 // pred_check_branch
          %292 = sbr.rel (%p290) target = $region36
        $region35: #{tpu_custom_call.1} parent=11 // pred_region
          _
        $region36: #{tpu_custom_call.1} parent=11 // pred_fallthru
          _
        // Predicated region
        $region37: #{tpu_custom_call.1} parent=11 // pred_check
          %p293 = pneg %p192
        $region38: #{tpu_custom_call.1} parent=11 // pred_check_branch
          %295 = sbr.rel (%p293) target = $region40
        $region39: #{tpu_custom_call.1} parent=11 // pred_region
          _
        $region40: #{tpu_custom_call.1} parent=11 // pred_fallthru
          _
        // Predicated region
        $region41: #{tpu_custom_call.1} parent=11 // pred_check
          %p296 = pneg %p213
        $region42: #{tpu_custom_call.1} parent=11 // pred_check_branch
          %298 = sbr.rel (%p296) target = $region44
        $region43: #{tpu_custom_call.1} parent=11 // pred_region
          _
        $region44: #{tpu_custom_call.1} parent=11 // pred_fallthru
          _
        // Predicated region
        $region45: #{tpu_custom_call.1} parent=11 // pred_check
          %p299 = pneg %p234
        $region46: #{tpu_custom_call.1} parent=11 // pred_check_branch
          %301 = sbr.rel (%p299) target = $region48
        $region47: #{tpu_custom_call.1} parent=11 // pred_region
          _
        $region48: #{tpu_custom_call.1} parent=11 // pred_fallthru
          _
      $region12: #{tpu_custom_call.1} parent=5 // pred_fallthru
        _
      %p302 = scmp.lt.s32.totalorder %s19, 2
      // Predicated region
      $region49: #{tpu_custom_call.1} parent=5 // pred_check
        %p303 = pneg %p302
      $region50: #{tpu_custom_call.1} parent=5 // pred_check_branch
        %305 = sbr.rel (%p303) target = $region52
      $region51: #{tpu_custom_call.1} parent=5 // pred_region
        // Predicated region
        $region53: #{tpu_custom_call.1} parent=51 // pred_check
          %p306 = pneg %p39
        $region54: #{tpu_custom_call.1} parent=51 // pred_check_branch
          %308 = sbr.rel (%p306) target = $region56
        $region55: #{tpu_custom_call.1} parent=51 // pred_region
          %s309 = smul.u32 64, %s19
          %p310 = scmp.lt.s32.totalorder %s309, 127
          %s311 = scalar_select %p310, %s309, 127
          %s312 = smul.addr %s311, 8
          %s313 = scalar_lea.vmem %s0, %s312
          %s314 = smul.u32 64, %s19
        $region56: #{tpu_custom_call.1} parent=51 // pred_fallthru
          _
      $region52: #{tpu_custom_call.1} parent=5 // pred_fallthru
        _
      %p315 = scmp.le.s32.totalorder 1, %s19
      %p316 = scmp.lt.s32.totalorder %s19, 3
      %p317 = pnand %p315, %p316
      %p318 = pneg %p317
      // Predicated region
      $region57: #{tpu_custom_call.1} parent=5 // pred_check
        _
      $region58: #{tpu_custom_call.1} parent=5 // pred_check_branch
        %320 = sbr.rel (%p317) target = $region60
      $region59: #{tpu_custom_call.1} parent=5 // pred_region
        %s321 = ssub.s32 %s19, 1
        %s322 = smul.u32 64, %s24
        %p323 = scmp.lt.s32.totalorder %s322, 127
        %s324 = scalar_select %p323, %s322, 127
        %s325 = smul.addr %s324, 8
        %s326 = scalar_lea.vmem %s0, %s325
        %p327 = pneg %p45
        %p328 = pneg %p42
        %p329 = pneg %p66
        %p330 = pneg %p63
        %p331 = pneg %p87
        %p332 = pneg %p84
        %p333 = pneg %p108
        %p334 = pneg %p105
        %p335 = pneg %p129
        %p336 = pneg %p126
        %p337 = pneg %p150
        %p338 = pneg %p147
        %p339 = pneg %p171
        %p340 = pneg %p168
        %p341 = pneg %p192
        %p342 = pneg %p189
        %p343 = pneg %p213
        %p344 = pneg %p210
        %p345 = pneg %p234
        %p346 = pneg %p231
        %p347 = pneg %p260
        %p348 = pneg %p257
        %s349 = sand.u32 %s247, 1
        %s350 = scalar_lea.sflag [#allocation3], %s349
        %s351 = sand.u32 %s247, 1
        %s352 = smul.addr %s351, 1024
        %s353 = scalar_lea.vmem [#allocation2], %s352
        %s354 = smul.u32 64, %s24
        %p355 = scmp.lt.s32.totalorder %s354, 127
        %s356 = scalar_select %p355, %s354, 127
        %s357 = smul.addr %s356, 8
        %s358 = scalar_lea.vmem %s0, %s357
        %s359 = smul.u32 64, %s24
        %s360 = smul.u32 64, %s24
        %v362 = vld [vmem:[%s358] sm:$0xff]
        %v363 = vld [vmem:[%s358 + $0x8] sm:$0xff]
        %v364 = vld [vmem:[%s358 + $0x10] sm:$0xff]
        %v365 = vld [vmem:[%s358 + $0x18] sm:$0xff]
        %v366 = vld [vmem:[%s358 + $0x20] sm:$0xff]
        %v367 = vld [vmem:[%s358 + $0x28] sm:$0xff]
        %v368 = vld [vmem:[%s358 + $0x30] sm:$0xff]
        %v369 = vld [vmem:[%s358 + $0x38] sm:$0xff]
        %v370 = vld [vmem:[%s358 + $0x40] sm:$0xff]
        %v371 = vld [vmem:[%s358 + $0x48] sm:$0xff]
        %v372 = vld [vmem:[%s358 + $0x50] sm:$0xff]
        %v373 = vld [vmem:[%s358 + $0x58] sm:$0xff]
        %v374 = vld [vmem:[%s358 + $0x60] sm:$0xff]
        %v375 = vld [vmem:[%s358 + $0x68] sm:$0xff]
        %v376 = vld [vmem:[%s358 + $0x70] sm:$0xff]
        %v377 = vld [vmem:[%s358 + $0x78] sm:$0xff]
        %v378 = vld [vmem:[%s358 + $0x80] sm:$0xff]
        %v379 = vld [vmem:[%s358 + $0x88] sm:$0xff]
        %v380 = vld [vmem:[%s358 + $0x90] sm:$0xff]
        %v381 = vld [vmem:[%s358 + $0x98] sm:$0xff]
        %v382 = vld [vmem:[%s358 + $0xa0] sm:$0xff]
        %v383 = vld [vmem:[%s358 + $0xa8] sm:$0xff]
        %v384 = vld [vmem:[%s358 + $0xb0] sm:$0xff]
        %v385 = vld [vmem:[%s358 + $0xb8] sm:$0xff]
        %v386 = vld [vmem:[%s358 + $0xc0] sm:$0xff]
        %v387 = vld [vmem:[%s358 + $0xc8] sm:$0xff]
        %v388 = vld [vmem:[%s358 + $0xd0] sm:$0xff]
        %v389 = vld [vmem:[%s358 + $0xd8] sm:$0xff]
        %v390 = vld [vmem:[%s358 + $0xe0] sm:$0xff]
        %v391 = vld [vmem:[%s358 + $0xe8] sm:$0xff]
        %v392 = vld [vmem:[%s358 + $0xf0] sm:$0xff]
        %v393 = vld [vmem:[%s358 + $0xf8] sm:$0xff]
        %v394 = vld [vmem:[%s358 + $0x100] sm:$0xff]
        %v395 = vld [vmem:[%s358 + $0x108] sm:$0xff]
        %v396 = vld [vmem:[%s358 + $0x110] sm:$0xff]
        %v397 = vld [vmem:[%s358 + $0x118] sm:$0xff]
        %v398 = vld [vmem:[%s358 + $0x120] sm:$0xff]
        %v399 = vld [vmem:[%s358 + $0x128] sm:$0xff]
        %v400 = vld [vmem:[%s358 + $0x130] sm:$0xff]
        %v401 = vld [vmem:[%s358 + $0x138] sm:$0xff]
        %v402 = vld [vmem:[%s358 + $0x140] sm:$0xff]
        %v403 = vld [vmem:[%s358 + $0x148] sm:$0xff]
        %v404 = vld [vmem:[%s358 + $0x150] sm:$0xff]
        %v405 = vld [vmem:[%s358 + $0x158] sm:$0xff]
        %v406 = vld [vmem:[%s358 + $0x160] sm:$0xff]
        %v407 = vld [vmem:[%s358 + $0x168] sm:$0xff]
        %v408 = vld [vmem:[%s358 + $0x170] sm:$0xff]
        %v409 = vld [vmem:[%s358 + $0x178] sm:$0xff]
        %v410 = vld [vmem:[%s358 + $0x180] sm:$0xff]
        %v411 = vld [vmem:[%s358 + $0x188] sm:$0xff]
        %v412 = vld [vmem:[%s358 + $0x190] sm:$0xff]
        %v413 = vld [vmem:[%s358 + $0x198] sm:$0xff]
        %v414 = vld [vmem:[%s358 + $0x1a0] sm:$0xff]
        %v415 = vld [vmem:[%s358 + $0x1a8] sm:$0xff]
        %v416 = vld [vmem:[%s358 + $0x1b0] sm:$0xff]
        %v417 = vld [vmem:[%s358 + $0x1b8] sm:$0xff]
        %v418 = vld [vmem:[%s358 + $0x1c0] sm:$0xff]
        %v419 = vld [vmem:[%s358 + $0x1c8] sm:$0xff]
        %v420 = vld [vmem:[%s358 + $0x1d0] sm:$0xff]
        %v421 = vld [vmem:[%s358 + $0x1d8] sm:$0xff]
        %v422 = vld [vmem:[%s358 + $0x1e0] sm:$0xff]
        %v423 = vld [vmem:[%s358 + $0x1e8] sm:$0xff]
        %v424 = vld [vmem:[%s358 + $0x1f0] sm:$0xff]
        %v425 = vld [vmem:[%s358 + $0x1f8] sm:$0xff]
        %v426 = vpack.c.bf16 %v363, %v362
        %v427 = vpack.c.bf16 %v365, %v364
        %v428 = vpack.c.bf16 %v367, %v366
        %v429 = vpack.c.bf16 %v369, %v368
        %v430 = vpack.c.bf16 %v371, %v370
        %v431 = vpack.c.bf16 %v373, %v372
        %v432 = vpack.c.bf16 %v375, %v374
        %v433 = vpack.c.bf16 %v377, %v376
        %v434 = vpack.c.bf16 %v379, %v378
        %v435 = vpack.c.bf16 %v381, %v380
        %v436 = vpack.c.bf16 %v383, %v382
        %v437 = vpack.c.bf16 %v385, %v384
        %v438 = vpack.c.bf16 %v387, %v386
        %v439 = vpack.c.bf16 %v389, %v388
        %v440 = vpack.c.bf16 %v391, %v390
        %v441 = vpack.c.bf16 %v393, %v392
        %v442 = vpack.c.bf16 %v395, %v394
        %v443 = vpack.c.bf16 %v397, %v396
        %v444 = vpack.c.bf16 %v399, %v398
        %v445 = vpack.c.bf16 %v401, %v400
        %v446 = vpack.c.bf16 %v403, %v402
        %v447 = vpack.c.bf16 %v405, %v404
        %v448 = vpack.c.bf16 %v407, %v406
        %v449 = vpack.c.bf16 %v409, %v408
        %v450 = vpack.c.bf16 %v411, %v410
        %v451 = vpack.c.bf16 %v413, %v412
        %v452 = vpack.c.bf16 %v415, %v414
        %v453 = vpack.c.bf16 %v417, %v416
        %v454 = vpack.c.bf16 %v419, %v418
        %v455 = vpack.c.bf16 %v421, %v420
        %v456 = vpack.c.bf16 %v423, %v422
        %v457 = vpack.c.bf16 %v425, %v424
        %v458 = vld [vmem:[%s1] sm:$0xf]
        %v459 = vld [vmem:[%s1 + $0x4] sm:$0xf]
        %v460 = vld [vmem:[%s9] sm:$0x1]
        %v461 = vlaneseq
        %v462 = vshrl.u32 %v461, 7
        %v463 = vsub.s32 0, %v462
        %v464 = vrot.slane %v460, %v463
        %v467 = vunpack.c.l.b16 %v458
        %v468 = vunpack.c.l.b16 %v459
        %v469 = vpack.c.b16 %v468, %v467
        %vm471 = vcmask 130048
        %v473 = vsel %vm471, %v426, 0
        %v476 = vsel %vm471, %v427, 0
        %v479 = vsel %vm471, %v428, 0
        %v482 = vsel %vm471, %v429, 0
        %v485 = vsel %vm471, %v430, 0
        %v488 = vsel %vm471, %v431, 0
        %v491 = vsel %vm471, %v432, 0
        %v494 = vsel %vm471, %v433, 0
        %v497 = vsel %vm471, %v434, 0
        %v500 = vsel %vm471, %v435, 0
        %v503 = vsel %vm471, %v436, 0
        %v506 = vsel %vm471, %v437, 0
        %v509 = vsel %vm471, %v438, 0
        %v512 = vsel %vm471, %v439, 0
        %v515 = vsel %vm471, %v440, 0
        %v518 = vsel %vm471, %v441, 0
        %v521 = vsel %vm471, %v442, 0
        %v524 = vsel %vm471, %v443, 0
        %v527 = vsel %vm471, %v444, 0
        %v530 = vsel %vm471, %v445, 0
        %v533 = vsel %vm471, %v446, 0
        %v536 = vsel %vm471, %v447, 0
        %v539 = vsel %vm471, %v448, 0
        %v542 = vsel %vm471, %v449, 0
        %v545 = vsel %vm471, %v450, 0
        %v548 = vsel %vm471, %v451, 0
        %v551 = vsel %vm471, %v452, 0
        %v554 = vsel %vm471, %v453, 0
        %v557 = vsel %vm471, %v454, 0
        %v560 = vsel %vm471, %v455, 0
        %v563 = vsel %vm471, %v456, 0
        %v566 = vsel %vm471, %v457, 0
        %568 = vmatprep.subr.bf16.mxu0 0
        %569 = vmatpush1.bf16.msra.mxu0 0
        %570 = vmatprep.subr.bf16.mxu0 0
        %571 = vmatpush1.bf16.msra.mxu0 0
        %572 = vmatprep.subr.bf16.mxu0 0
        %573 = vmatpush1.bf16.msra.mxu0 0
        %574 = vmatprep.subr.bf16.mxu0 0
        %575 = vmatpush1.bf16.msra.mxu0 0
        %576 = vmatprep.subr.bf16.mxu0 0
        %577 = vmatpush1.bf16.msra.mxu0 0
        %578 = vmatprep.subr.bf16.mxu0 0
        %579 = vmatpush1.bf16.msra.mxu0 0
        %580 = vmatprep.subr.bf16.mxu0 0
        %581 = vmatpush1.bf16.msra.mxu0 0
        %582 = vmatprep.subr.bf16.mxu0 0
        %583 = vmatpush1.bf16.msra.mxu0 %v469
        %584 = vmatprep.subr.bf16.mxu0 0
        %585 = vmatpush2.bf16.msra.mxu0 0
        %586 = vmatprep.subr.bf16.mxu0 0
        %587 = vmatpush2.bf16.msra.mxu0 0
        %588 = vmatprep.subr.bf16.mxu0 0
        %589 = vmatpush2.bf16.msra.mxu0 0
        %590 = vmatprep.subr.bf16.mxu0 0
        %591 = vmatpush2.bf16.msra.mxu0 0
        %592 = vmatprep.subr.bf16.mxu0 0
        %593 = vmatpush2.bf16.msra.mxu0 0
        %594 = vmatprep.subr.bf16.mxu0 0
        %595 = vmatpush2.bf16.msra.mxu0 0
        %596 = vmatprep.subr.bf16.mxu0 0
        %597 = vmatpush2.bf16.msra.mxu0 0
        %598 = vmatprep.subr.bf16.mxu0 0
        %599 = vmatpush2.bf16.msra.mxu0 0
        %600 = vmatprep.mubr.bf16.mxu0 0
        %601 = vmatmul.mubr.bf16.gmra.mxu0 %v473
        %v602 = vpop.f32.mrf.mxu0
        %v603 = vadd.f32 %v464, %v602
        %v604 = vpop.f32.mrf.mxu0
        %v605 = vpop.f32.mrf.mxu0
        %v606 = vadd.f32 %v464, %v605
        %v607 = vpop.f32.mrf.mxu0
        %608 = vmatprep.mubr.bf16.mxu0 0
        %609 = vmatmul.mubr.bf16.gmra.mxu0 %v476
        %v610 = vpop.f32.mrf.mxu0
        %v611 = vadd.f32 %v464, %v610
        %v612 = vpop.f32.mrf.mxu0
        %v613 = vpop.f32.mrf.mxu0
        %v614 = vadd.f32 %v464, %v613
        %v615 = vpop.f32.mrf.mxu0
        %616 = vmatprep.mubr.bf16.mxu0 0
        %617 = vmatmul.mubr.bf16.gmra.mxu0 %v479
        %v618 = vpop.f32.mrf.mxu0
        %v619 = vadd.f32 %v464, %v618
        %v620 = vpop.f32.mrf.mxu0
        %v621 = vpop.f32.mrf.mxu0
        %v622 = vadd.f32 %v464, %v621
        %v623 = vpop.f32.mrf.mxu0
        %624 = vmatprep.mubr.bf16.mxu0 0
        %625 = vmatmul.mubr.bf16.gmra.mxu0 %v482
        %v626 = vpop.f32.mrf.mxu0
        %v627 = vadd.f32 %v464, %v626
        %v628 = vpop.f32.mrf.mxu0
        %v629 = vpop.f32.mrf.mxu0
        %v630 = vadd.f32 %v464, %v629
        %v631 = vpop.f32.mrf.mxu0
        %632 = vmatprep.mubr.bf16.mxu0 0
        %633 = vmatmul.mubr.bf16.gmra.mxu0 %v485
        %v634 = vpop.f32.mrf.mxu0
        %v635 = vadd.f32 %v464, %v634
        %v636 = vpop.f32.mrf.mxu0
        %v637 = vpop.f32.mrf.mxu0
        %v638 = vadd.f32 %v464, %v637
        %v639 = vpop.f32.mrf.mxu0
        %640 = vmatprep.mubr.bf16.mxu0 0
        %641 = vmatmul.mubr.bf16.gmra.mxu0 %v488
        %v642 = vpop.f32.mrf.mxu0
        %v643 = vadd.f32 %v464, %v642
        %v644 = vpop.f32.mrf.mxu0
        %v645 = vpop.f32.mrf.mxu0
        %v646 = vadd.f32 %v464, %v645
        %v647 = vpop.f32.mrf.mxu0
        %648 = vmatprep.mubr.bf16.mxu0 0
        %649 = vmatmul.mubr.bf16.gmra.mxu0 %v491
        %v650 = vpop.f32.mrf.mxu0
        %v651 = vadd.f32 %v464, %v650
        %v652 = vpop.f32.mrf.mxu0
        %v653 = vpop.f32.mrf.mxu0
        %v654 = vadd.f32 %v464, %v653
        %v655 = vpop.f32.mrf.mxu0
        %656 = vmatprep.mubr.bf16.mxu0 0
        %657 = vmatmul.mubr.bf16.gmra.mxu0 %v494
        %v658 = vpop.f32.mrf.mxu0
        %v659 = vadd.f32 %v464, %v658
        %v660 = vpop.f32.mrf.mxu0
        %v661 = vpop.f32.mrf.mxu0
        %v662 = vadd.f32 %v464, %v661
        %v663 = vpop.f32.mrf.mxu0
        %664 = vmatprep.mubr.bf16.mxu0 0
        %665 = vmatmul.mubr.bf16.gmra.mxu0 %v497
        %v666 = vpop.f32.mrf.mxu0
        %v667 = vadd.f32 %v464, %v666
        %v668 = vpop.f32.mrf.mxu0
        %v669 = vpop.f32.mrf.mxu0
        %v670 = vadd.f32 %v464, %v669
        %v671 = vpop.f32.mrf.mxu0
        %672 = vmatprep.mubr.bf16.mxu0 0
        %673 = vmatmul.mubr.bf16.gmra.mxu0 %v500
        %v674 = vpop.f32.mrf.mxu0
        %v675 = vadd.f32 %v464, %v674
        %v676 = vpop.f32.mrf.mxu0
        %v677 = vpop.f32.mrf.mxu0
        %v678 = vadd.f32 %v464, %v677
        %v679 = vpop.f32.mrf.mxu0
        %680 = vmatprep.mubr.bf16.mxu0 0
        %681 = vmatmul.mubr.bf16.gmra.mxu0 %v503
        %v682 = vpop.f32.mrf.mxu0
        %v683 = vadd.f32 %v464, %v682
        %v684 = vpop.f32.mrf.mxu0
        %v685 = vpop.f32.mrf.mxu0
        %v686 = vadd.f32 %v464, %v685
        %v687 = vpop.f32.mrf.mxu0
        %688 = vmatprep.mubr.bf16.mxu0 0
        %689 = vmatmul.mubr.bf16.gmra.mxu0 %v506
        %v690 = vpop.f32.mrf.mxu0
        %v691 = vadd.f32 %v464, %v690
        %v692 = vpop.f32.mrf.mxu0
        %v693 = vpop.f32.mrf.mxu0
        %v694 = vadd.f32 %v464, %v693
        %v695 = vpop.f32.mrf.mxu0
        %696 = vmatprep.mubr.bf16.mxu0 0
        %697 = vmatmul.mubr.bf16.gmra.mxu0 %v509
        %v698 = vpop.f32.mrf.mxu0
        %v699 = vadd.f32 %v464, %v698
        %v700 = vpop.f32.mrf.mxu0
        %v701 = vpop.f32.mrf.mxu0
        %v702 = vadd.f32 %v464, %v701
        %v703 = vpop.f32.mrf.mxu0
        %704 = vmatprep.mubr.bf16.mxu0 0
        %705 = vmatmul.mubr.bf16.gmra.mxu0 %v512
        %v706 = vpop.f32.mrf.mxu0
        %v707 = vadd.f32 %v464, %v706
        %v708 = vpop.f32.mrf.mxu0
        %v709 = vpop.f32.mrf.mxu0
        %v710 = vadd.f32 %v464, %v709
        %v711 = vpop.f32.mrf.mxu0
        %712 = vmatprep.mubr.bf16.mxu0 0
        %713 = vmatmul.mubr.bf16.gmra.mxu0 %v515
        %v714 = vpop.f32.mrf.mxu0
        %v715 = vadd.f32 %v464, %v714
        %v716 = vpop.f32.mrf.mxu0
        %v717 = vpop.f32.mrf.mxu0
        %v718 = vadd.f32 %v464, %v717
        %v719 = vpop.f32.mrf.mxu0
        %720 = vmatprep.mubr.bf16.mxu0 0
        %721 = vmatmul.mubr.bf16.gmra.mxu0 %v518
        %v722 = vpop.f32.mrf.mxu0
        %v723 = vadd.f32 %v464, %v722
        %v724 = vpop.f32.mrf.mxu0
        %v725 = vpop.f32.mrf.mxu0
        %v726 = vadd.f32 %v464, %v725
        %v727 = vpop.f32.mrf.mxu0
        %728 = vmatprep.mubr.bf16.mxu0 0
        %729 = vmatmul.mubr.bf16.gmra.mxu0 %v521
        %v730 = vpop.f32.mrf.mxu0
        %v731 = vadd.f32 %v464, %v730
        %v732 = vpop.f32.mrf.mxu0
        %v733 = vpop.f32.mrf.mxu0
        %v734 = vadd.f32 %v464, %v733
        %v735 = vpop.f32.mrf.mxu0
        %736 = vmatprep.mubr.bf16.mxu0 0
        %737 = vmatmul.mubr.bf16.gmra.mxu0 %v524
        %v738 = vpop.f32.mrf.mxu0
        %v739 = vadd.f32 %v464, %v738
        %v740 = vpop.f32.mrf.mxu0
        %v741 = vpop.f32.mrf.mxu0
        %v742 = vadd.f32 %v464, %v741
        %v743 = vpop.f32.mrf.mxu0
        %744 = vmatprep.mubr.bf16.mxu0 0
        %745 = vmatmul.mubr.bf16.gmra.mxu0 %v527
        %v746 = vpop.f32.mrf.mxu0
        %v747 = vadd.f32 %v464, %v746
        %v748 = vpop.f32.mrf.mxu0
        %v749 = vpop.f32.mrf.mxu0
        %v750 = vadd.f32 %v464, %v749
        %v751 = vpop.f32.mrf.mxu0
        %752 = vmatprep.mubr.bf16.mxu0 0
        %753 = vmatmul.mubr.bf16.gmra.mxu0 %v530
        %v754 = vpop.f32.mrf.mxu0
        %v755 = vadd.f32 %v464, %v754
        %v756 = vpop.f32.mrf.mxu0
        %v757 = vpop.f32.mrf.mxu0
        %v758 = vadd.f32 %v464, %v757
        %v759 = vpop.f32.mrf.mxu0
        %760 = vmatprep.mubr.bf16.mxu0 0
        %761 = vmatmul.mubr.bf16.gmra.mxu0 %v533
        %v762 = vpop.f32.mrf.mxu0
        %v763 = vadd.f32 %v464, %v762
        %v764 = vpop.f32.mrf.mxu0
        %v765 = vpop.f32.mrf.mxu0
        %v766 = vadd.f32 %v464, %v765
        %v767 = vpop.f32.mrf.mxu0
        %768 = vmatprep.mubr.bf16.mxu0 0
        %769 = vmatmul.mubr.bf16.gmra.mxu0 %v536
        %v770 = vpop.f32.mrf.mxu0
        %v771 = vadd.f32 %v464, %v770
        %v772 = vpop.f32.mrf.mxu0
        %v773 = vpop.f32.mrf.mxu0
        %v774 = vadd.f32 %v464, %v773
        %v775 = vpop.f32.mrf.mxu0
        %776 = vmatprep.mubr.bf16.mxu0 0
        %777 = vmatmul.mubr.bf16.gmra.mxu0 %v539
        %v778 = vpop.f32.mrf.mxu0
        %v779 = vadd.f32 %v464, %v778
        %v780 = vpop.f32.mrf.mxu0
        %v781 = vpop.f32.mrf.mxu0
        %v782 = vadd.f32 %v464, %v781
        %v783 = vpop.f32.mrf.mxu0
        %784 = vmatprep.mubr.bf16.mxu0 0
        %785 = vmatmul.mubr.bf16.gmra.mxu0 %v542
        %v786 = vpop.f32.mrf.mxu0
        %v787 = vadd.f32 %v464, %v786
        %v788 = vpop.f32.mrf.mxu0
        %v789 = vpop.f32.mrf.mxu0
        %v790 = vadd.f32 %v464, %v789
        %v791 = vpop.f32.mrf.mxu0
        %792 = vmatprep.mubr.bf16.mxu0 0
        %793 = vmatmul.mubr.bf16.gmra.mxu0 %v545
        %v794 = vpop.f32.mrf.mxu0
        %v795 = vadd.f32 %v464, %v794
        %v796 = vpop.f32.mrf.mxu0
        %v797 = vpop.f32.mrf.mxu0
        %v798 = vadd.f32 %v464, %v797
        %v799 = vpop.f32.mrf.mxu0
        %800 = vmatprep.mubr.bf16.mxu0 0
        %801 = vmatmul.mubr.bf16.gmra.mxu0 %v548
        %v802 = vpop.f32.mrf.mxu0
        %v803 = vadd.f32 %v464, %v802
        %v804 = vpop.f32.mrf.mxu0
        %v805 = vpop.f32.mrf.mxu0
        %v806 = vadd.f32 %v464, %v805
        %v807 = vpop.f32.mrf.mxu0
        %808 = vmatprep.mubr.bf16.mxu0 0
        %809 = vmatmul.mubr.bf16.gmra.mxu0 %v551
        %v810 = vpop.f32.mrf.mxu0
        %v811 = vadd.f32 %v464, %v810
        %v812 = vpop.f32.mrf.mxu0
        %v813 = vpop.f32.mrf.mxu0
        %v814 = vadd.f32 %v464, %v813
        %v815 = vpop.f32.mrf.mxu0
        %816 = vmatprep.mubr.bf16.mxu0 0
        %817 = vmatmul.mubr.bf16.gmra.mxu0 %v554
        %v818 = vpop.f32.mrf.mxu0
        %v819 = vadd.f32 %v464, %v818
        %v820 = vpop.f32.mrf.mxu0
        %v821 = vpop.f32.mrf.mxu0
        %v822 = vadd.f32 %v464, %v821
        %v823 = vpop.f32.mrf.mxu0
        %824 = vmatprep.mubr.bf16.mxu0 0
        %825 = vmatmul.mubr.bf16.gmra.mxu0 %v557
        %v826 = vpop.f32.mrf.mxu0
        %v827 = vadd.f32 %v464, %v826
        %v828 = vpop.f32.mrf.mxu0
        %v829 = vpop.f32.mrf.mxu0
        %v830 = vadd.f32 %v464, %v829
        %v831 = vpop.f32.mrf.mxu0
        %832 = vmatprep.mubr.bf16.mxu0 0
        %833 = vmatmul.mubr.bf16.gmra.mxu0 %v560
        %v834 = vpop.f32.mrf.mxu0
        %v835 = vadd.f32 %v464, %v834
        %v836 = vpop.f32.mrf.mxu0
        %v837 = vpop.f32.mrf.mxu0
        %v838 = vadd.f32 %v464, %v837
        %v839 = vpop.f32.mrf.mxu0
        %840 = vmatprep.mubr.bf16.mxu0 0
        %841 = vmatmul.mubr.bf16.gmra.mxu0 %v563
        %v842 = vpop.f32.mrf.mxu0
        %v843 = vadd.f32 %v464, %v842
        %v844 = vpop.f32.mrf.mxu0
        %v845 = vpop.f32.mrf.mxu0
        %v846 = vadd.f32 %v464, %v845
        %v847 = vpop.f32.mrf.mxu0
        %848 = vmatprep.mubr.bf16.mxu0 0
        %849 = vmatmul.mubr.bf16.gmra.mxu0 %v566
        %v850 = vpop.f32.mrf.mxu0
        %v851 = vadd.f32 %v464, %v850
        %v852 = vpop.f32.mrf.mxu0
        %v853 = vpop.f32.mrf.mxu0
        %v854 = vadd.f32 %v464, %v853
        %v855 = vpop.f32.mrf.mxu0
        %856 = vdwg.mxu0
        %v857 = vmax.f32 %v603, 0.0
        %v858 = vmax.f32 %v606, 0.0
        %v859 = vmax.f32 %v611, 0.0
        %v860 = vmax.f32 %v614, 0.0
        %v861 = vmax.f32 %v619, 0.0
        %v862 = vmax.f32 %v622, 0.0
        %v863 = vmax.f32 %v627, 0.0
        %v864 = vmax.f32 %v630, 0.0
        %v865 = vmax.f32 %v635, 0.0
        %v866 = vmax.f32 %v638, 0.0
        %v867 = vmax.f32 %v643, 0.0
        %v868 = vmax.f32 %v646, 0.0
        %v869 = vmax.f32 %v651, 0.0
        %v870 = vmax.f32 %v654, 0.0
        %v871 = vmax.f32 %v659, 0.0
        %v872 = vmax.f32 %v662, 0.0
        %v873 = vmax.f32 %v667, 0.0
        %v874 = vmax.f32 %v670, 0.0
        %v875 = vmax.f32 %v675, 0.0
        %v876 = vmax.f32 %v678, 0.0
        %v877 = vmax.f32 %v683, 0.0
        %v878 = vmax.f32 %v686, 0.0
        %v879 = vmax.f32 %v691, 0.0
        %v880 = vmax.f32 %v694, 0.0
        %v881 = vmax.f32 %v699, 0.0
        %v882 = vmax.f32 %v702, 0.0
        %v883 = vmax.f32 %v707, 0.0
        %v884 = vmax.f32 %v710, 0.0
        %v885 = vmax.f32 %v715, 0.0
        %v886 = vmax.f32 %v718, 0.0
        %v887 = vmax.f32 %v723, 0.0
        %v888 = vmax.f32 %v726, 0.0
        %v889 = vmax.f32 %v731, 0.0
        %v890 = vmax.f32 %v734, 0.0
        %v891 = vmax.f32 %v739, 0.0
        %v892 = vmax.f32 %v742, 0.0
        %v893 = vmax.f32 %v747, 0.0
        %v894 = vmax.f32 %v750, 0.0
        %v895 = vmax.f32 %v755, 0.0
        %v896 = vmax.f32 %v758, 0.0
        %v897 = vmax.f32 %v763, 0.0
        %v898 = vmax.f32 %v766, 0.0
        %v899 = vmax.f32 %v771, 0.0
        %v900 = vmax.f32 %v774, 0.0
        %v901 = vmax.f32 %v779, 0.0
        %v902 = vmax.f32 %v782, 0.0
        %v903 = vmax.f32 %v787, 0.0
        %v904 = vmax.f32 %v790, 0.0
        %v905 = vmax.f32 %v795, 0.0
        %v906 = vmax.f32 %v798, 0.0
        %v907 = vmax.f32 %v803, 0.0
        %v908 = vmax.f32 %v806, 0.0
        %v909 = vmax.f32 %v811, 0.0
        %v910 = vmax.f32 %v814, 0.0
        %v911 = vmax.f32 %v819, 0.0
        %v912 = vmax.f32 %v822, 0.0
        %v913 = vmax.f32 %v827, 0.0
        %v914 = vmax.f32 %v830, 0.0
        %v915 = vmax.f32 %v835, 0.0
        %v916 = vmax.f32 %v838, 0.0
        %v917 = vmax.f32 %v843, 0.0
        %v918 = vmax.f32 %v846, 0.0
        %v919 = vmax.f32 %v851, 0.0
        %v920 = vmax.f32 %v854, 0.0
        %985 = vrot.lane.b32.xlu0 %v857, 32
        %v986 = vpop.permute.xlu0 %985
        %987 = vrot.lane.b32.xlu0 %v858, 32
        %v988 = vpop.permute.xlu0 %987
        %989 = vrot.lane.b32.xlu0 %v859, 32
        %v990 = vpop.permute.xlu0 %989
        %991 = vrot.lane.b32.xlu0 %v860, 32
        %v992 = vpop.permute.xlu0 %991
        %993 = vrot.lane.b32.xlu0 %v861, 32
        %v994 = vpop.permute.xlu0 %993
        %995 = vrot.lane.b32.xlu0 %v862, 32
        %v996 = vpop.permute.xlu0 %995
        %997 = vrot.lane.b32.xlu0 %v863, 32
        %v998 = vpop.permute.xlu0 %997
        %999 = vrot.lane.b32.xlu0 %v864, 32
        %v1000 = vpop.permute.xlu0 %999
        %1001 = vrot.lane.b32.xlu0 %v865, 32
        %v1002 = vpop.permute.xlu0 %1001
        %1003 = vrot.lane.b32.xlu0 %v866, 32
        %v1004 = vpop.permute.xlu0 %1003
        %1005 = vrot.lane.b32.xlu0 %v867, 32
        %v1006 = vpop.permute.xlu0 %1005
        %1007 = vrot.lane.b32.xlu0 %v868, 32
        %v1008 = vpop.permute.xlu0 %1007
        %1009 = vrot.lane.b32.xlu0 %v869, 32
        %v1010 = vpop.permute.xlu0 %1009
        %1011 = vrot.lane.b32.xlu0 %v870, 32
        %v1012 = vpop.permute.xlu0 %1011
        %1013 = vrot.lane.b32.xlu0 %v871, 32
        %v1014 = vpop.permute.xlu0 %1013
        %1015 = vrot.lane.b32.xlu0 %v872, 32
        %v1016 = vpop.permute.xlu0 %1015
        %1017 = vrot.lane.b32.xlu0 %v873, 32
        %v1018 = vpop.permute.xlu0 %1017
        %1019 = vrot.lane.b32.xlu0 %v874, 32
        %v1020 = vpop.permute.xlu0 %1019
        %1021 = vrot.lane.b32.xlu0 %v875, 32
        %v1022 = vpop.permute.xlu0 %1021
        %1023 = vrot.lane.b32.xlu0 %v876, 32
        %v1024 = vpop.permute.xlu0 %1023
        %1025 = vrot.lane.b32.xlu0 %v877, 32
        %v1026 = vpop.permute.xlu0 %1025
        %1027 = vrot.lane.b32.xlu0 %v878, 32
        %v1028 = vpop.permute.xlu0 %1027
        %1029 = vrot.lane.b32.xlu0 %v879, 32
        %v1030 = vpop.permute.xlu0 %1029
        %1031 = vrot.lane.b32.xlu0 %v880, 32
        %v1032 = vpop.permute.xlu0 %1031
        %1033 = vrot.lane.b32.xlu0 %v881, 32
        %v1034 = vpop.permute.xlu0 %1033
        %1035 = vrot.lane.b32.xlu0 %v882, 32
        %v1036 = vpop.permute.xlu0 %1035
        %1037 = vrot.lane.b32.xlu0 %v883, 32
        %v1038 = vpop.permute.xlu0 %1037
        %1039 = vrot.lane.b32.xlu0 %v884, 32
        %v1040 = vpop.permute.xlu0 %1039
        %1041 = vrot.lane.b32.xlu0 %v885, 32
        %v1042 = vpop.permute.xlu0 %1041
        %1043 = vrot.lane.b32.xlu0 %v886, 32
        %v1044 = vpop.permute.xlu0 %1043
        %1045 = vrot.lane.b32.xlu0 %v887, 32
        %v1046 = vpop.permute.xlu0 %1045
        %1047 = vrot.lane.b32.xlu0 %v888, 32
        %v1048 = vpop.permute.xlu0 %1047
        %1049 = vrot.lane.b32.xlu0 %v889, 32
        %v1050 = vpop.permute.xlu0 %1049
        %1051 = vrot.lane.b32.xlu0 %v890, 32
        %v1052 = vpop.permute.xlu0 %1051
        %1053 = vrot.lane.b32.xlu0 %v891, 32
        %v1054 = vpop.permute.xlu0 %1053
        %1055 = vrot.lane.b32.xlu0 %v892, 32
        %v1056 = vpop.permute.xlu0 %1055
        %1057 = vrot.lane.b32.xlu0 %v893, 32
        %v1058 = vpop.permute.xlu0 %1057
        %1059 = vrot.lane.b32.xlu0 %v894, 32
        %v1060 = vpop.permute.xlu0 %1059
        %1061 = vrot.lane.b32.xlu0 %v895, 32
        %v1062 = vpop.permute.xlu0 %1061
        %1063 = vrot.lane.b32.xlu0 %v896, 32
        %v1064 = vpop.permute.xlu0 %1063
        %1065 = vrot.lane.b32.xlu0 %v897, 32
        %v1066 = vpop.permute.xlu0 %1065
        %1067 = vrot.lane.b32.xlu0 %v898, 32
        %v1068 = vpop.permute.xlu0 %1067
        %1069 = vrot.lane.b32.xlu0 %v899, 32
        %v1070 = vpop.permute.xlu0 %1069
        %1071 = vrot.lane.b32.xlu0 %v900, 32
        %v1072 = vpop.permute.xlu0 %1071
        %1073 = vrot.lane.b32.xlu0 %v901, 32
        %v1074 = vpop.permute.xlu0 %1073
        %1075 = vrot.lane.b32.xlu0 %v902, 32
        %v1076 = vpop.permute.xlu0 %1075
        %1077 = vrot.lane.b32.xlu0 %v903, 32
        %v1078 = vpop.permute.xlu0 %1077
        %1079 = vrot.lane.b32.xlu0 %v904, 32
        %v1080 = vpop.permute.xlu0 %1079
        %1081 = vrot.lane.b32.xlu0 %v905, 32
        %v1082 = vpop.permute.xlu0 %1081
        %1083 = vrot.lane.b32.xlu0 %v906, 32
        %v1084 = vpop.permute.xlu0 %1083
        %1085 = vrot.lane.b32.xlu0 %v907, 32
        %v1086 = vpop.permute.xlu0 %1085
        %1087 = vrot.lane.b32.xlu0 %v908, 32
        %v1088 = vpop.permute.xlu0 %1087
        %1089 = vrot.lane.b32.xlu0 %v909, 32
        %v1090 = vpop.permute.xlu0 %1089
        %1091 = vrot.lane.b32.xlu0 %v910, 32
        %v1092 = vpop.permute.xlu0 %1091
        %1093 = vrot.lane.b32.xlu0 %v911, 32
        %v1094 = vpop.permute.xlu0 %1093
        %1095 = vrot.lane.b32.xlu0 %v912, 32
        %v1096 = vpop.permute.xlu0 %1095
        %1097 = vrot.lane.b32.xlu0 %v913, 32
        %v1098 = vpop.permute.xlu0 %1097
        %1099 = vrot.lane.b32.xlu0 %v914, 32
        %v1100 = vpop.permute.xlu0 %1099
        %1101 = vrot.lane.b32.xlu0 %v915, 32
        %v1102 = vpop.permute.xlu0 %1101
        %1103 = vrot.lane.b32.xlu0 %v916, 32
        %v1104 = vpop.permute.xlu0 %1103
        %1105 = vrot.lane.b32.xlu0 %v917, 32
        %v1106 = vpop.permute.xlu0 %1105
        %1107 = vrot.lane.b32.xlu0 %v918, 32
        %v1108 = vpop.permute.xlu0 %1107
        %1109 = vrot.lane.b32.xlu0 %v919, 32
        %v1110 = vpop.permute.xlu0 %1109
        %1111 = vrot.lane.b32.xlu0 %v920, 32
        %v1112 = vpop.permute.xlu0 %1111
        %vm1177 = vcmask 523520
        %1178 = vst.msk [vmem:[%s353] sm:$0xff] %vm1177, %v986
        %1179 = vst.msk [vmem:[%s353 + $0x10] sm:$0xff] %vm1177, %v988
        %1180 = vst.msk [vmem:[%s353 + $0x20] sm:$0xff] %vm1177, %v990
        %1181 = vst.msk [vmem:[%s353 + $0x30] sm:$0xff] %vm1177, %v992
        %1182 = vst.msk [vmem:[%s353 + $0x40] sm:$0xff] %vm1177, %v994
        %1183 = vst.msk [vmem:[%s353 + $0x50] sm:$0xff] %vm1177, %v996
        %1184 = vst.msk [vmem:[%s353 + $0x60] sm:$0xff] %vm1177, %v998
        %1185 = vst.msk [vmem:[%s353 + $0x70] sm:$0xff] %vm1177, %v1000
        %1186 = vst.msk [vmem:[%s353 + $0x80] sm:$0xff] %vm1177, %v1002
        %1187 = vst.msk [vmem:[%s353 + $0x90] sm:$0xff] %vm1177, %v1004
        %1188 = vst.msk [vmem:[%s353 + $0xa0] sm:$0xff] %vm1177, %v1006
        %1189 = vst.msk [vmem:[%s353 + $0xb0] sm:$0xff] %vm1177, %v1008
        %1190 = vst.msk [vmem:[%s353 + $0xc0] sm:$0xff] %vm1177, %v1010
        %1191 = vst.msk [vmem:[%s353 + $0xd0] sm:$0xff] %vm1177, %v1012
        %1192 = vst.msk [vmem:[%s353 + $0xe0] sm:$0xff] %vm1177, %v1014
        %1193 = vst.msk [vmem:[%s353 + $0xf0] sm:$0xff] %vm1177, %v1016
        %1194 = vst.msk [vmem:[%s353 + $0x100] sm:$0xff] %vm1177, %v1018
        %1195 = vst.msk [vmem:[%s353 + $0x110] sm:$0xff] %vm1177, %v1020
        %1196 = vst.msk [vmem:[%s353 + $0x120] sm:$0xff] %vm1177, %v1022
        %1197 = vst.msk [vmem:[%s353 + $0x130] sm:$0xff] %vm1177, %v1024
        %1198 = vst.msk [vmem:[%s353 + $0x140] sm:$0xff] %vm1177, %v1026
        %1199 = vst.msk [vmem:[%s353 + $0x150] sm:$0xff] %vm1177, %v1028
        %1200 = vst.msk [vmem:[%s353 + $0x160] sm:$0xff] %vm1177, %v1030
        %1201 = vst.msk [vmem:[%s353 + $0x170] sm:$0xff] %vm1177, %v1032
        %1202 = vst.msk [vmem:[%s353 + $0x180] sm:$0xff] %vm1177, %v1034
        %1203 = vst.msk [vmem:[%s353 + $0x190] sm:$0xff] %vm1177, %v1036
        %1204 = vst.msk [vmem:[%s353 + $0x1a0] sm:$0xff] %vm1177, %v1038
        %1205 = vst.msk [vmem:[%s353 + $0x1b0] sm:$0xff] %vm1177, %v1040
        %1206 = vst.msk [vmem:[%s353 + $0x1c0] sm:$0xff] %vm1177, %v1042
        %1207 = vst.msk [vmem:[%s353 + $0x1d0] sm:$0xff] %vm1177, %v1044
        %1208 = vst.msk [vmem:[%s353 + $0x1e0] sm:$0xff] %vm1177, %v1046
        %1209 = vst.msk [vmem:[%s353 + $0x1f0] sm:$0xff] %vm1177, %v1048
        %1210 = vst.msk [vmem:[%s353 + $0x200] sm:$0xff] %vm1177, %v1050
        %1211 = vst.msk [vmem:[%s353 + $0x210] sm:$0xff] %vm1177, %v1052
        %1212 = vst.msk [vmem:[%s353 + $0x220] sm:$0xff] %vm1177, %v1054
        %1213 = vst.msk [vmem:[%s353 + $0x230] sm:$0xff] %vm1177, %v1056
        %1214 = vst.msk [vmem:[%s353 + $0x240] sm:$0xff] %vm1177, %v1058
        %1215 = vst.msk [vmem:[%s353 + $0x250] sm:$0xff] %vm1177, %v1060
        %1216 = vst.msk [vmem:[%s353 + $0x260] sm:$0xff] %vm1177, %v1062
        %1217 = vst.msk [vmem:[%s353 + $0x270] sm:$0xff] %vm1177, %v1064
        %1218 = vst.msk [vmem:[%s353 + $0x280] sm:$0xff] %vm1177, %v1066
        %1219 = vst.msk [vmem:[%s353 + $0x290] sm:$0xff] %vm1177, %v1068
        %1220 = vst.msk [vmem:[%s353 + $0x2a0] sm:$0xff] %vm1177, %v1070
        %1221 = vst.msk [vmem:[%s353 + $0x2b0] sm:$0xff] %vm1177, %v1072
        %1222 = vst.msk [vmem:[%s353 + $0x2c0] sm:$0xff] %vm1177, %v1074
        %1223 = vst.msk [vmem:[%s353 + $0x2d0] sm:$0xff] %vm1177, %v1076
        %1224 = vst.msk [vmem:[%s353 + $0x2e0] sm:$0xff] %vm1177, %v1078
        %1225 = vst.msk [vmem:[%s353 + $0x2f0] sm:$0xff] %vm1177, %v1080
        %1226 = vst.msk [vmem:[%s353 + $0x300] sm:$0xff] %vm1177, %v1082
        %1227 = vst.msk [vmem:[%s353 + $0x310] sm:$0xff] %vm1177, %v1084
        %1228 = vst.msk [vmem:[%s353 + $0x320] sm:$0xff] %vm1177, %v1086
        %1229 = vst.msk [vmem:[%s353 + $0x330] sm:$0xff] %vm1177, %v1088
        %1230 = vst.msk [vmem:[%s353 + $0x340] sm:$0xff] %vm1177, %v1090
        %1231 = vst.msk [vmem:[%s353 + $0x350] sm:$0xff] %vm1177, %v1092
        %1232 = vst.msk [vmem:[%s353 + $0x360] sm:$0xff] %vm1177, %v1094
        %1233 = vst.msk [vmem:[%s353 + $0x370] sm:$0xff] %vm1177, %v1096
        %1234 = vst.msk [vmem:[%s353 + $0x380] sm:$0xff] %vm1177, %v1098
        %1235 = vst.msk [vmem:[%s353 + $0x390] sm:$0xff] %vm1177, %v1100
        %1236 = vst.msk [vmem:[%s353 + $0x3a0] sm:$0xff] %vm1177, %v1102
        %1237 = vst.msk [vmem:[%s353 + $0x3b0] sm:$0xff] %vm1177, %v1104
        %1238 = vst.msk [vmem:[%s353 + $0x3c0] sm:$0xff] %vm1177, %v1106
        %1239 = vst.msk [vmem:[%s353 + $0x3d0] sm:$0xff] %vm1177, %v1108
        %1240 = vst.msk [vmem:[%s353 + $0x3e0] sm:$0xff] %vm1177, %v1110
        %1241 = vst.msk [vmem:[%s353 + $0x3f0] sm:$0xff] %vm1177, %v1112
        %v1242 = vpack.c.bf16 %v858, %v857
        %v1243 = vpack.c.bf16 %v860, %v859
        %v1244 = vpack.c.bf16 %v862, %v861
        %v1245 = vpack.c.bf16 %v864, %v863
        %v1246 = vpack.c.bf16 %v866, %v865
        %v1247 = vpack.c.bf16 %v868, %v867
        %v1248 = vpack.c.bf16 %v870, %v869
        %v1249 = vpack.c.bf16 %v872, %v871
        %v1250 = vpack.c.bf16 %v874, %v873
        %v1251 = vpack.c.bf16 %v876, %v875
        %v1252 = vpack.c.bf16 %v878, %v877
        %v1253 = vpack.c.bf16 %v880, %v879
        %v1254 = vpack.c.bf16 %v882, %v881
        %v1255 = vpack.c.bf16 %v884, %v883
        %v1256 = vpack.c.bf16 %v886, %v885
        %v1257 = vpack.c.bf16 %v888, %v887
        %v1258 = vpack.c.bf16 %v890, %v889
        %v1259 = vpack.c.bf16 %v892, %v891
        %v1260 = vpack.c.bf16 %v894, %v893
        %v1261 = vpack.c.bf16 %v896, %v895
        %v1262 = vpack.c.bf16 %v898, %v897
        %v1263 = vpack.c.bf16 %v900, %v899
        %v1264 = vpack.c.bf16 %v902, %v901
        %v1265 = vpack.c.bf16 %v904, %v903
        %v1266 = vpack.c.bf16 %v906, %v905
        %v1267 = vpack.c.bf16 %v908, %v907
        %v1268 = vpack.c.bf16 %v910, %v909
        %v1269 = vpack.c.bf16 %v912, %v911
        %v1270 = vpack.c.bf16 %v914, %v913
        %v1271 = vpack.c.bf16 %v916, %v915
        %v1272 = vpack.c.bf16 %v918, %v917
        %v1273 = vpack.c.bf16 %v920, %v919
        %v1274 = vld [vmem:[%s2] sm:$0xf]
        %v1275 = vld [vmem:[%s2 + $0x4] sm:$0xf]
        %v1276 = vld [vmem:[%s2 + $0x8] sm:$0xf]
        %v1277 = vld [vmem:[%s2 + $0xc] sm:$0xf]
        %v1278 = vld [vmem:[%s2 + $0x10] sm:$0xf]
        %v1279 = vld [vmem:[%s2 + $0x14] sm:$0xf]
        %v1280 = vld [vmem:[%s2 + $0x18] sm:$0xf]
        %v1281 = vld [vmem:[%s2 + $0x1c] sm:$0xf]
        %v1282 = vld [vmem:[%s2 + $0x20] sm:$0xf]
        %v1283 = vld [vmem:[%s2 + $0x24] sm:$0xf]
        %v1284 = vld [vmem:[%s2 + $0x28] sm:$0xf]
        %v1285 = vld [vmem:[%s2 + $0x2c] sm:$0xf]
        %v1286 = vld [vmem:[%s2 + $0x30] sm:$0xf]
        %v1287 = vld [vmem:[%s2 + $0x34] sm:$0xf]
        %v1288 = vld [vmem:[%s2 + $0x38] sm:$0xf]
        %v1289 = vld [vmem:[%s2 + $0x3c] sm:$0xf]
        %v1290 = vld [vmem:[%s9 + $0x1] sm:$0x1]
        %v1291 = vlaneseq
        %v1292 = vshrl.u32 %v1291, 7
        %v1293 = vsub.s32 0, %v1292
        %v1294 = vrot.slane %v1290, %v1293
        %v1311 = vunpack.c.l.b16 %v1274
        %v1312 = vunpack.c.l.b16 %v1275
        %v1313 = vunpack.c.l.b16 %v1276
        %v1314 = vunpack.c.l.b16 %v1277
        %v1315 = vunpack.c.l.b16 %v1278
        %v1316 = vunpack.c.l.b16 %v1279
        %v1317 = vunpack.c.l.b16 %v1280
        %v1318 = vunpack.c.l.b16 %v1281
        %v1319 = vunpack.c.l.b16 %v1282
        %v1320 = vunpack.c.l.b16 %v1283
        %v1321 = vunpack.c.l.b16 %v1284
        %v1322 = vunpack.c.l.b16 %v1285
        %v1323 = vunpack.c.l.b16 %v1286
        %v1324 = vunpack.c.l.b16 %v1287
        %v1325 = vunpack.c.l.b16 %v1288
        %v1326 = vunpack.c.l.b16 %v1289
        %v1327 = vpack.c.b16 %v1312, %v1311
        %v1328 = vpack.c.b16 %v1314, %v1313
        %v1329 = vpack.c.b16 %v1316, %v1315
        %v1330 = vpack.c.b16 %v1318, %v1317
        %v1331 = vpack.c.b16 %v1320, %v1319
        %v1332 = vpack.c.b16 %v1322, %v1321
        %v1333 = vpack.c.b16 %v1324, %v1323
        %v1334 = vpack.c.b16 %v1326, %v1325
        %1343 = vmatprep.subr.bf16.mxu0 0
        %1344 = vmatpush1.bf16.msra.mxu0 %v1334
        %1345 = vmatprep.subr.bf16.mxu0 0
        %1346 = vmatpush1.bf16.msra.mxu0 %v1333
        %1347 = vmatprep.subr.bf16.mxu0 0
        %1348 = vmatpush1.bf16.msra.mxu0 %v1332
        %1349 = vmatprep.subr.bf16.mxu0 0
        %1350 = vmatpush1.bf16.msra.mxu0 %v1331
        %1351 = vmatprep.subr.bf16.mxu0 0
        %1352 = vmatpush1.bf16.msra.mxu0 %v1330
        %1353 = vmatprep.subr.bf16.mxu0 0
        %1354 = vmatpush1.bf16.msra.mxu0 %v1329
        %1355 = vmatprep.subr.bf16.mxu0 0
        %1356 = vmatpush1.bf16.msra.mxu0 %v1328
        %1357 = vmatprep.subr.bf16.mxu0 0
        %1358 = vmatpush1.bf16.msra.mxu0 %v1327
        %1359 = vmatprep.subr.bf16.mxu0 0
        %1360 = vmatpush2.bf16.msra.mxu0 0
        %1361 = vmatprep.subr.bf16.mxu0 0
        %1362 = vmatpush2.bf16.msra.mxu0 0
        %1363 = vmatprep.subr.bf16.mxu0 0
        %1364 = vmatpush2.bf16.msra.mxu0 0
        %1365 = vmatprep.subr.bf16.mxu0 0
        %1366 = vmatpush2.bf16.msra.mxu0 0
        %1367 = vmatprep.subr.bf16.mxu0 0
        %1368 = vmatpush2.bf16.msra.mxu0 0
        %1369 = vmatprep.subr.bf16.mxu0 0
        %1370 = vmatpush2.bf16.msra.mxu0 0
        %1371 = vmatprep.subr.bf16.mxu0 0
        %1372 = vmatpush2.bf16.msra.mxu0 0
        %1373 = vmatprep.subr.bf16.mxu0 0
        %1374 = vmatpush2.bf16.msra.mxu0 0
        %1375 = vmatprep.mubr.bf16.mxu0 0
        %1376 = vmatmul.mubr.bf16.gmra.mxu0 %v1242
        %v1377 = vpop.f32.mrf.mxu0
        %v1378 = vadd.f32 %v1294, %v1377
        %v1379 = vpop.f32.mrf.mxu0
        %v1380 = vpop.f32.mrf.mxu0
        %v1381 = vadd.f32 %v1294, %v1380
        %v1382 = vpop.f32.mrf.mxu0
        %1383 = vmatprep.mubr.bf16.mxu0 0
        %1384 = vmatmul.mubr.bf16.gmra.mxu0 %v1243
        %v1385 = vpop.f32.mrf.mxu0
        %v1386 = vadd.f32 %v1294, %v1385
        %v1387 = vpop.f32.mrf.mxu0
        %v1388 = vpop.f32.mrf.mxu0
        %v1389 = vadd.f32 %v1294, %v1388
        %v1390 = vpop.f32.mrf.mxu0
        %1391 = vmatprep.mubr.bf16.mxu0 0
        %1392 = vmatmul.mubr.bf16.gmra.mxu0 %v1244
        %v1393 = vpop.f32.mrf.mxu0
        %v1394 = vadd.f32 %v1294, %v1393
        %v1395 = vpop.f32.mrf.mxu0
        %v1396 = vpop.f32.mrf.mxu0
        %v1397 = vadd.f32 %v1294, %v1396
        %v1398 = vpop.f32.mrf.mxu0
        %1399 = vmatprep.mubr.bf16.mxu0 0
        %1400 = vmatmul.mubr.bf16.gmra.mxu0 %v1245
        %v1401 = vpop.f32.mrf.mxu0
        %v1402 = vadd.f32 %v1294, %v1401
        %v1403 = vpop.f32.mrf.mxu0
        %v1404 = vpop.f32.mrf.mxu0
        %v1405 = vadd.f32 %v1294, %v1404
        %v1406 = vpop.f32.mrf.mxu0
        %1407 = vmatprep.mubr.bf16.mxu0 0
        %1408 = vmatmul.mubr.bf16.gmra.mxu0 %v1246
        %v1409 = vpop.f32.mrf.mxu0
        %v1410 = vadd.f32 %v1294, %v1409
        %v1411 = vpop.f32.mrf.mxu0
        %v1412 = vpop.f32.mrf.mxu0
        %v1413 = vadd.f32 %v1294, %v1412
        %v1414 = vpop.f32.mrf.mxu0
        %1415 = vmatprep.mubr.bf16.mxu0 0
        %1416 = vmatmul.mubr.bf16.gmra.mxu0 %v1247
        %v1417 = vpop.f32.mrf.mxu0
        %v1418 = vadd.f32 %v1294, %v1417
        %v1419 = vpop.f32.mrf.mxu0
        %v1420 = vpop.f32.mrf.mxu0
        %v1421 = vadd.f32 %v1294, %v1420
        %v1422 = vpop.f32.mrf.mxu0
        %1423 = vmatprep.mubr.bf16.mxu0 0
        %1424 = vmatmul.mubr.bf16.gmra.mxu0 %v1248
        %v1425 = vpop.f32.mrf.mxu0
        %v1426 = vadd.f32 %v1294, %v1425
        %v1427 = vpop.f32.mrf.mxu0
        %v1428 = vpop.f32.mrf.mxu0
        %v1429 = vadd.f32 %v1294, %v1428
        %v1430 = vpop.f32.mrf.mxu0
        %1431 = vmatprep.mubr.bf16.mxu0 0
        %1432 = vmatmul.mubr.bf16.gmra.mxu0 %v1249
        %v1433 = vpop.f32.mrf.mxu0
        %v1434 = vadd.f32 %v1294, %v1433
        %v1435 = vpop.f32.mrf.mxu0
        %v1436 = vpop.f32.mrf.mxu0
        %v1437 = vadd.f32 %v1294, %v1436
        %v1438 = vpop.f32.mrf.mxu0
        %1439 = vmatprep.mubr.bf16.mxu0 0
        %1440 = vmatmul.mubr.bf16.gmra.mxu0 %v1250
        %v1441 = vpop.f32.mrf.mxu0
        %v1442 = vadd.f32 %v1294, %v1441
        %v1443 = vpop.f32.mrf.mxu0
        %v1444 = vpop.f32.mrf.mxu0
        %v1445 = vadd.f32 %v1294, %v1444
        %v1446 = vpop.f32.mrf.mxu0
        %1447 = vmatprep.mubr.bf16.mxu0 0
        %1448 = vmatmul.mubr.bf16.gmra.mxu0 %v1251
        %v1449 = vpop.f32.mrf.mxu0
        %v1450 = vadd.f32 %v1294, %v1449
        %v1451 = vpop.f32.mrf.mxu0
        %v1452 = vpop.f32.mrf.mxu0
        %v1453 = vadd.f32 %v1294, %v1452
        %v1454 = vpop.f32.mrf.mxu0
        %1455 = vmatprep.mubr.bf16.mxu0 0
        %1456 = vmatmul.mubr.bf16.gmra.mxu0 %v1252
        %v1457 = vpop.f32.mrf.mxu0
        %v1458 = vadd.f32 %v1294, %v1457
        %v1459 = vpop.f32.mrf.mxu0
        %v1460 = vpop.f32.mrf.mxu0
        %v1461 = vadd.f32 %v1294, %v1460
        %v1462 = vpop.f32.mrf.mxu0
        %1463 = vmatprep.mubr.bf16.mxu0 0
        %1464 = vmatmul.mubr.bf16.gmra.mxu0 %v1253
        %v1465 = vpop.f32.mrf.mxu0
        %v1466 = vadd.f32 %v1294, %v1465
        %v1467 = vpop.f32.mrf.mxu0
        %v1468 = vpop.f32.mrf.mxu0
        %v1469 = vadd.f32 %v1294, %v1468
        %v1470 = vpop.f32.mrf.mxu0
        %1471 = vmatprep.mubr.bf16.mxu0 0
        %1472 = vmatmul.mubr.bf16.gmra.mxu0 %v1254
        %v1473 = vpop.f32.mrf.mxu0
        %v1474 = vadd.f32 %v1294, %v1473
        %v1475 = vpop.f32.mrf.mxu0
        %v1476 = vpop.f32.mrf.mxu0
        %v1477 = vadd.f32 %v1294, %v1476
        %v1478 = vpop.f32.mrf.mxu0
        %1479 = vmatprep.mubr.bf16.mxu0 0
        %1480 = vmatmul.mubr.bf16.gmra.mxu0 %v1255
        %v1481 = vpop.f32.mrf.mxu0
        %v1482 = vadd.f32 %v1294, %v1481
        %v1483 = vpop.f32.mrf.mxu0
        %v1484 = vpop.f32.mrf.mxu0
        %v1485 = vadd.f32 %v1294, %v1484
        %v1486 = vpop.f32.mrf.mxu0
        %1487 = vmatprep.mubr.bf16.mxu0 0
        %1488 = vmatmul.mubr.bf16.gmra.mxu0 %v1256
        %v1489 = vpop.f32.mrf.mxu0
        %v1490 = vadd.f32 %v1294, %v1489
        %v1491 = vpop.f32.mrf.mxu0
        %v1492 = vpop.f32.mrf.mxu0
        %v1493 = vadd.f32 %v1294, %v1492
        %v1494 = vpop.f32.mrf.mxu0
        %1495 = vmatprep.mubr.bf16.mxu0 0
        %1496 = vmatmul.mubr.bf16.gmra.mxu0 %v1257
        %v1497 = vpop.f32.mrf.mxu0
        %v1498 = vadd.f32 %v1294, %v1497
        %v1499 = vpop.f32.mrf.mxu0
        %v1500 = vpop.f32.mrf.mxu0
        %v1501 = vadd.f32 %v1294, %v1500
        %v1502 = vpop.f32.mrf.mxu0
        %1503 = vmatprep.mubr.bf16.mxu0 0
        %1504 = vmatmul.mubr.bf16.gmra.mxu0 %v1258
        %v1505 = vpop.f32.mrf.mxu0
        %v1506 = vadd.f32 %v1294, %v1505
        %v1507 = vpop.f32.mrf.mxu0
        %v1508 = vpop.f32.mrf.mxu0
        %v1509 = vadd.f32 %v1294, %v1508
        %v1510 = vpop.f32.mrf.mxu0
        %1511 = vmatprep.mubr.bf16.mxu0 0
        %1512 = vmatmul.mubr.bf16.gmra.mxu0 %v1259
        %v1513 = vpop.f32.mrf.mxu0
        %v1514 = vadd.f32 %v1294, %v1513
        %v1515 = vpop.f32.mrf.mxu0
        %v1516 = vpop.f32.mrf.mxu0
        %v1517 = vadd.f32 %v1294, %v1516
        %v1518 = vpop.f32.mrf.mxu0
        %1519 = vmatprep.mubr.bf16.mxu0 0
        %1520 = vmatmul.mubr.bf16.gmra.mxu0 %v1260
        %v1521 = vpop.f32.mrf.mxu0
        %v1522 = vadd.f32 %v1294, %v1521
        %v1523 = vpop.f32.mrf.mxu0
        %v1524 = vpop.f32.mrf.mxu0
        %v1525 = vadd.f32 %v1294, %v1524
        %v1526 = vpop.f32.mrf.mxu0
        %1527 = vmatprep.mubr.bf16.mxu0 0
        %1528 = vmatmul.mubr.bf16.gmra.mxu0 %v1261
        %v1529 = vpop.f32.mrf.mxu0
        %v1530 = vadd.f32 %v1294, %v1529
        %v1531 = vpop.f32.mrf.mxu0
        %v1532 = vpop.f32.mrf.mxu0
        %v1533 = vadd.f32 %v1294, %v1532
        %v1534 = vpop.f32.mrf.mxu0
        %1535 = vmatprep.mubr.bf16.mxu0 0
        %1536 = vmatmul.mubr.bf16.gmra.mxu0 %v1262
        %v1537 = vpop.f32.mrf.mxu0
        %v1538 = vadd.f32 %v1294, %v1537
        %v1539 = vpop.f32.mrf.mxu0
        %v1540 = vpop.f32.mrf.mxu0
        %v1541 = vadd.f32 %v1294, %v1540
        %v1542 = vpop.f32.mrf.mxu0
        %1543 = vmatprep.mubr.bf16.mxu0 0
        %1544 = vmatmul.mubr.bf16.gmra.mxu0 %v1263
        %v1545 = vpop.f32.mrf.mxu0
        %v1546 = vadd.f32 %v1294, %v1545
        %v1547 = vpop.f32.mrf.mxu0
        %v1548 = vpop.f32.mrf.mxu0
        %v1549 = vadd.f32 %v1294, %v1548
        %v1550 = vpop.f32.mrf.mxu0
        %1551 = vmatprep.mubr.bf16.mxu0 0
        %1552 = vmatmul.mubr.bf16.gmra.mxu0 %v1264
        %v1553 = vpop.f32.mrf.mxu0
        %v1554 = vadd.f32 %v1294, %v1553
        %v1555 = vpop.f32.mrf.mxu0
        %v1556 = vpop.f32.mrf.mxu0
        %v1557 = vadd.f32 %v1294, %v1556
        %v1558 = vpop.f32.mrf.mxu0
        %1559 = vmatprep.mubr.bf16.mxu0 0
        %1560 = vmatmul.mubr.bf16.gmra.mxu0 %v1265
        %v1561 = vpop.f32.mrf.mxu0
        %v1562 = vadd.f32 %v1294, %v1561
        %v1563 = vpop.f32.mrf.mxu0
        %v1564 = vpop.f32.mrf.mxu0
        %v1565 = vadd.f32 %v1294, %v1564
        %v1566 = vpop.f32.mrf.mxu0
        %1567 = vmatprep.mubr.bf16.mxu0 0
        %1568 = vmatmul.mubr.bf16.gmra.mxu0 %v1266
        %v1569 = vpop.f32.mrf.mxu0
        %v1570 = vadd.f32 %v1294, %v1569
        %v1571 = vpop.f32.mrf.mxu0
        %v1572 = vpop.f32.mrf.mxu0
        %v1573 = vadd.f32 %v1294, %v1572
        %v1574 = vpop.f32.mrf.mxu0
        %1575 = vmatprep.mubr.bf16.mxu0 0
        %1576 = vmatmul.mubr.bf16.gmra.mxu0 %v1267
        %v1577 = vpop.f32.mrf.mxu0
        %v1578 = vadd.f32 %v1294, %v1577
        %v1579 = vpop.f32.mrf.mxu0
        %v1580 = vpop.f32.mrf.mxu0
        %v1581 = vadd.f32 %v1294, %v1580
        %v1582 = vpop.f32.mrf.mxu0
        %1583 = vmatprep.mubr.bf16.mxu0 0
        %1584 = vmatmul.mubr.bf16.gmra.mxu0 %v1268
        %v1585 = vpop.f32.mrf.mxu0
        %v1586 = vadd.f32 %v1294, %v1585
        %v1587 = vpop.f32.mrf.mxu0
        %v1588 = vpop.f32.mrf.mxu0
        %v1589 = vadd.f32 %v1294, %v1588
        %v1590 = vpop.f32.mrf.mxu0
        %1591 = vmatprep.mubr.bf16.mxu0 0
        %1592 = vmatmul.mubr.bf16.gmra.mxu0 %v1269
        %v1593 = vpop.f32.mrf.mxu0
        %v1594 = vadd.f32 %v1294, %v1593
        %v1595 = vpop.f32.mrf.mxu0
        %v1596 = vpop.f32.mrf.mxu0
        %v1597 = vadd.f32 %v1294, %v1596
        %v1598 = vpop.f32.mrf.mxu0
        %1599 = vmatprep.mubr.bf16.mxu0 0
        %1600 = vmatmul.mubr.bf16.gmra.mxu0 %v1270
        %v1601 = vpop.f32.mrf.mxu0
        %v1602 = vadd.f32 %v1294, %v1601
        %v1603 = vpop.f32.mrf.mxu0
        %v1604 = vpop.f32.mrf.mxu0
        %v1605 = vadd.f32 %v1294, %v1604
        %v1606 = vpop.f32.mrf.mxu0
        %1607 = vmatprep.mubr.bf16.mxu0 0
        %1608 = vmatmul.mubr.bf16.gmra.mxu0 %v1271
        %v1609 = vpop.f32.mrf.mxu0
        %v1610 = vadd.f32 %v1294, %v1609
        %v1611 = vpop.f32.mrf.mxu0
        %v1612 = vpop.f32.mrf.mxu0
        %v1613 = vadd.f32 %v1294, %v1612
        %v1614 = vpop.f32.mrf.mxu0
        %1615 = vmatprep.mubr.bf16.mxu0 0
        %1616 = vmatmul.mubr.bf16.gmra.mxu0 %v1272
        %v1617 = vpop.f32.mrf.mxu0
        %v1618 = vadd.f32 %v1294, %v1617
        %v1619 = vpop.f32.mrf.mxu0
        %v1620 = vpop.f32.mrf.mxu0
        %v1621 = vadd.f32 %v1294, %v1620
        %v1622 = vpop.f32.mrf.mxu0
        %1623 = vmatprep.mubr.bf16.mxu0 0
        %1624 = vmatmul.mubr.bf16.gmra.mxu0 %v1273
        %v1625 = vpop.f32.mrf.mxu0
        %v1626 = vadd.f32 %v1294, %v1625
        %v1627 = vpop.f32.mrf.mxu0
        %v1628 = vpop.f32.mrf.mxu0
        %v1629 = vadd.f32 %v1294, %v1628
        %v1630 = vpop.f32.mrf.mxu0
        %1631 = vdwg.mxu0
        %v1632 = vmax.f32 %v1378, 0.0
        %v1633 = vmax.f32 %v1381, 0.0
        %v1634 = vmax.f32 %v1386, 0.0
        %v1635 = vmax.f32 %v1389, 0.0
        %v1636 = vmax.f32 %v1394, 0.0
        %v1637 = vmax.f32 %v1397, 0.0
        %v1638 = vmax.f32 %v1402, 0.0
        %v1639 = vmax.f32 %v1405, 0.0
        %v1640 = vmax.f32 %v1410, 0.0
        %v1641 = vmax.f32 %v1413, 0.0
        %v1642 = vmax.f32 %v1418, 0.0
        %v1643 = vmax.f32 %v1421, 0.0
        %v1644 = vmax.f32 %v1426, 0.0
        %v1645 = vmax.f32 %v1429, 0.0
        %v1646 = vmax.f32 %v1434, 0.0
        %v1647 = vmax.f32 %v1437, 0.0
        %v1648 = vmax.f32 %v1442, 0.0
        %v1649 = vmax.f32 %v1445, 0.0
        %v1650 = vmax.f32 %v1450, 0.0
        %v1651 = vmax.f32 %v1453, 0.0
        %v1652 = vmax.f32 %v1458, 0.0
        %v1653 = vmax.f32 %v1461, 0.0
        %v1654 = vmax.f32 %v1466, 0.0
        %v1655 = vmax.f32 %v1469, 0.0
        %v1656 = vmax.f32 %v1474, 0.0
        %v1657 = vmax.f32 %v1477, 0.0
        %v1658 = vmax.f32 %v1482, 0.0
        %v1659 = vmax.f32 %v1485, 0.0
        %v1660 = vmax.f32 %v1490, 0.0
        %v1661 = vmax.f32 %v1493, 0.0
        %v1662 = vmax.f32 %v1498, 0.0
        %v1663 = vmax.f32 %v1501, 0.0
        %v1664 = vmax.f32 %v1506, 0.0
        %v1665 = vmax.f32 %v1509, 0.0
        %v1666 = vmax.f32 %v1514, 0.0
        %v1667 = vmax.f32 %v1517, 0.0
        %v1668 = vmax.f32 %v1522, 0.0
        %v1669 = vmax.f32 %v1525, 0.0
        %v1670 = vmax.f32 %v1530, 0.0
        %v1671 = vmax.f32 %v1533, 0.0
        %v1672 = vmax.f32 %v1538, 0.0
        %v1673 = vmax.f32 %v1541, 0.0
        %v1674 = vmax.f32 %v1546, 0.0
        %v1675 = vmax.f32 %v1549, 0.0
        %v1676 = vmax.f32 %v1554, 0.0
        %v1677 = vmax.f32 %v1557, 0.0
        %v1678 = vmax.f32 %v1562, 0.0
        %v1679 = vmax.f32 %v1565, 0.0
        %v1680 = vmax.f32 %v1570, 0.0
        %v1681 = vmax.f32 %v1573, 0.0
        %v1682 = vmax.f32 %v1578, 0.0
        %v1683 = vmax.f32 %v1581, 0.0
        %v1684 = vmax.f32 %v1586, 0.0
        %v1685 = vmax.f32 %v1589, 0.0
        %v1686 = vmax.f32 %v1594, 0.0
        %v1687 = vmax.f32 %v1597, 0.0
        %v1688 = vmax.f32 %v1602, 0.0
        %v1689 = vmax.f32 %v1605, 0.0
        %v1690 = vmax.f32 %v1610, 0.0
        %v1691 = vmax.f32 %v1613, 0.0
        %v1692 = vmax.f32 %v1618, 0.0
        %v1693 = vmax.f32 %v1621, 0.0
        %v1694 = vmax.f32 %v1626, 0.0
        %v1695 = vmax.f32 %v1629, 0.0
        %1760 = vrot.lane.b32.xlu0 %v1632, 64
        %v1761 = vpop.permute.xlu0 %1760
        %1762 = vrot.lane.b32.xlu0 %v1633, 64
        %v1763 = vpop.permute.xlu0 %1762
        %1764 = vrot.lane.b32.xlu0 %v1634, 64
        %v1765 = vpop.permute.xlu0 %1764
        %1766 = vrot.lane.b32.xlu0 %v1635, 64
        %v1767 = vpop.permute.xlu0 %1766
        %1768 = vrot.lane.b32.xlu0 %v1636, 64
        %v1769 = vpop.permute.xlu0 %1768
        %1770 = vrot.lane.b32.xlu0 %v1637, 64
        %v1771 = vpop.permute.xlu0 %1770
        %1772 = vrot.lane.b32.xlu0 %v1638, 64
        %v1773 = vpop.permute.xlu0 %1772
        %1774 = vrot.lane.b32.xlu0 %v1639, 64
        %v1775 = vpop.permute.xlu0 %1774
        %1776 = vrot.lane.b32.xlu0 %v1640, 64
        %v1777 = vpop.permute.xlu0 %1776
        %1778 = vrot.lane.b32.xlu0 %v1641, 64
        %v1779 = vpop.permute.xlu0 %1778
        %1780 = vrot.lane.b32.xlu0 %v1642, 64
        %v1781 = vpop.permute.xlu0 %1780
        %1782 = vrot.lane.b32.xlu0 %v1643, 64
        %v1783 = vpop.permute.xlu0 %1782
        %1784 = vrot.lane.b32.xlu0 %v1644, 64
        %v1785 = vpop.permute.xlu0 %1784
        %1786 = vrot.lane.b32.xlu0 %v1645, 64
        %v1787 = vpop.permute.xlu0 %1786
        %1788 = vrot.lane.b32.xlu0 %v1646, 64
        %v1789 = vpop.permute.xlu0 %1788
        %1790 = vrot.lane.b32.xlu0 %v1647, 64
        %v1791 = vpop.permute.xlu0 %1790
        %1792 = vrot.lane.b32.xlu0 %v1648, 64
        %v1793 = vpop.permute.xlu0 %1792
        %1794 = vrot.lane.b32.xlu0 %v1649, 64
        %v1795 = vpop.permute.xlu0 %1794
        %1796 = vrot.lane.b32.xlu0 %v1650, 64
        %v1797 = vpop.permute.xlu0 %1796
        %1798 = vrot.lane.b32.xlu0 %v1651, 64
        %v1799 = vpop.permute.xlu0 %1798
        %1800 = vrot.lane.b32.xlu0 %v1652, 64
        %v1801 = vpop.permute.xlu0 %1800
        %1802 = vrot.lane.b32.xlu0 %v1653, 64
        %v1803 = vpop.permute.xlu0 %1802
        %1804 = vrot.lane.b32.xlu0 %v1654, 64
        %v1805 = vpop.permute.xlu0 %1804
        %1806 = vrot.lane.b32.xlu0 %v1655, 64
        %v1807 = vpop.permute.xlu0 %1806
        %1808 = vrot.lane.b32.xlu0 %v1656, 64
        %v1809 = vpop.permute.xlu0 %1808
        %1810 = vrot.lane.b32.xlu0 %v1657, 64
        %v1811 = vpop.permute.xlu0 %1810
        %1812 = vrot.lane.b32.xlu0 %v1658, 64
        %v1813 = vpop.permute.xlu0 %1812
        %1814 = vrot.lane.b32.xlu0 %v1659, 64
        %v1815 = vpop.permute.xlu0 %1814
        %1816 = vrot.lane.b32.xlu0 %v1660, 64
        %v1817 = vpop.permute.xlu0 %1816
        %1818 = vrot.lane.b32.xlu0 %v1661, 64
        %v1819 = vpop.permute.xlu0 %1818
        %1820 = vrot.lane.b32.xlu0 %v1662, 64
        %v1821 = vpop.permute.xlu0 %1820
        %1822 = vrot.lane.b32.xlu0 %v1663, 64
        %v1823 = vpop.permute.xlu0 %1822
        %1824 = vrot.lane.b32.xlu0 %v1664, 64
        %v1825 = vpop.permute.xlu0 %1824
        %1826 = vrot.lane.b32.xlu0 %v1665, 64
        %v1827 = vpop.permute.xlu0 %1826
        %1828 = vrot.lane.b32.xlu0 %v1666, 64
        %v1829 = vpop.permute.xlu0 %1828
        %1830 = vrot.lane.b32.xlu0 %v1667, 64
        %v1831 = vpop.permute.xlu0 %1830
        %1832 = vrot.lane.b32.xlu0 %v1668, 64
        %v1833 = vpop.permute.xlu0 %1832
        %1834 = vrot.lane.b32.xlu0 %v1669, 64
        %v1835 = vpop.permute.xlu0 %1834
        %1836 = vrot.lane.b32.xlu0 %v1670, 64
        %v1837 = vpop.permute.xlu0 %1836
        %1838 = vrot.lane.b32.xlu0 %v1671, 64
        %v1839 = vpop.permute.xlu0 %1838
        %1840 = vrot.lane.b32.xlu0 %v1672, 64
        %v1841 = vpop.permute.xlu0 %1840
        %1842 = vrot.lane.b32.xlu0 %v1673, 64
        %v1843 = vpop.permute.xlu0 %1842
        %1844 = vrot.lane.b32.xlu0 %v1674, 64
        %v1845 = vpop.permute.xlu0 %1844
        %1846 = vrot.lane.b32.xlu0 %v1675, 64
        %v1847 = vpop.permute.xlu0 %1846
        %1848 = vrot.lane.b32.xlu0 %v1676, 64
        %v1849 = vpop.permute.xlu0 %1848
        %1850 = vrot.lane.b32.xlu0 %v1677, 64
        %v1851 = vpop.permute.xlu0 %1850
        %1852 = vrot.lane.b32.xlu0 %v1678, 64
        %v1853 = vpop.permute.xlu0 %1852
        %1854 = vrot.lane.b32.xlu0 %v1679, 64
        %v1855 = vpop.permute.xlu0 %1854
        %1856 = vrot.lane.b32.xlu0 %v1680, 64
        %v1857 = vpop.permute.xlu0 %1856
        %1858 = vrot.lane.b32.xlu0 %v1681, 64
        %v1859 = vpop.permute.xlu0 %1858
        %1860 = vrot.lane.b32.xlu0 %v1682, 64
        %v1861 = vpop.permute.xlu0 %1860
        %1862 = vrot.lane.b32.xlu0 %v1683, 64
        %v1863 = vpop.permute.xlu0 %1862
        %1864 = vrot.lane.b32.xlu0 %v1684, 64
        %v1865 = vpop.permute.xlu0 %1864
        %1866 = vrot.lane.b32.xlu0 %v1685, 64
        %v1867 = vpop.permute.xlu0 %1866
        %1868 = vrot.lane.b32.xlu0 %v1686, 64
        %v1869 = vpop.permute.xlu0 %1868
        %1870 = vrot.lane.b32.xlu0 %v1687, 64
        %v1871 = vpop.permute.xlu0 %1870
        %1872 = vrot.lane.b32.xlu0 %v1688, 64
        %v1873 = vpop.permute.xlu0 %1872
        %1874 = vrot.lane.b32.xlu0 %v1689, 64
        %v1875 = vpop.permute.xlu0 %1874
        %1876 = vrot.lane.b32.xlu0 %v1690, 64
        %v1877 = vpop.permute.xlu0 %1876
        %1878 = vrot.lane.b32.xlu0 %v1691, 64
        %v1879 = vpop.permute.xlu0 %1878
        %1880 = vrot.lane.b32.xlu0 %v1692, 64
        %v1881 = vpop.permute.xlu0 %1880
        %1882 = vrot.lane.b32.xlu0 %v1693, 64
        %v1883 = vpop.permute.xlu0 %1882
        %1884 = vrot.lane.b32.xlu0 %v1694, 64
        %v1885 = vpop.permute.xlu0 %1884
        %1886 = vrot.lane.b32.xlu0 %v1695, 64
        %v1887 = vpop.permute.xlu0 %1886
        %vm1952 = vcmask 785920
        %1953 = vst.msk [vmem:[%s353] sm:$0xff] %vm1952, %v1761
        %1954 = vst.msk [vmem:[%s353 + $0x10] sm:$0xff] %vm1952, %v1763
        %1955 = vst.msk [vmem:[%s353 + $0x20] sm:$0xff] %vm1952, %v1765
        %1956 = vst.msk [vmem:[%s353 + $0x30] sm:$0xff] %vm1952, %v1767
        %1957 = vst.msk [vmem:[%s353 + $0x40] sm:$0xff] %vm1952, %v1769
        %1958 = vst.msk [vmem:[%s353 + $0x50] sm:$0xff] %vm1952, %v1771
        %1959 = vst.msk [vmem:[%s353 + $0x60] sm:$0xff] %vm1952, %v1773
        %1960 = vst.msk [vmem:[%s353 + $0x70] sm:$0xff] %vm1952, %v1775
        %1961 = vst.msk [vmem:[%s353 + $0x80] sm:$0xff] %vm1952, %v1777
        %1962 = vst.msk [vmem:[%s353 + $0x90] sm:$0xff] %vm1952, %v1779
        %1963 = vst.msk [vmem:[%s353 + $0xa0] sm:$0xff] %vm1952, %v1781
        %1964 = vst.msk [vmem:[%s353 + $0xb0] sm:$0xff] %vm1952, %v1783
        %1965 = vst.msk [vmem:[%s353 + $0xc0] sm:$0xff] %vm1952, %v1785
        %1966 = vst.msk [vmem:[%s353 + $0xd0] sm:$0xff] %vm1952, %v1787
        %1967 = vst.msk [vmem:[%s353 + $0xe0] sm:$0xff] %vm1952, %v1789
        %1968 = vst.msk [vmem:[%s353 + $0xf0] sm:$0xff] %vm1952, %v1791
        %1969 = vst.msk [vmem:[%s353 + $0x100] sm:$0xff] %vm1952, %v1793
        %1970 = vst.msk [vmem:[%s353 + $0x110] sm:$0xff] %vm1952, %v1795
        %1971 = vst.msk [vmem:[%s353 + $0x120] sm:$0xff] %vm1952, %v1797
        %1972 = vst.msk [vmem:[%s353 + $0x130] sm:$0xff] %vm1952, %v1799
        %1973 = vst.msk [vmem:[%s353 + $0x140] sm:$0xff] %vm1952, %v1801
        %1974 = vst.msk [vmem:[%s353 + $0x150] sm:$0xff] %vm1952, %v1803
        %1975 = vst.msk [vmem:[%s353 + $0x160] sm:$0xff] %vm1952, %v1805
        %1976 = vst.msk [vmem:[%s353 + $0x170] sm:$0xff] %vm1952, %v1807
        %1977 = vst.msk [vmem:[%s353 + $0x180] sm:$0xff] %vm1952, %v1809
        %1978 = vst.msk [vmem:[%s353 + $0x190] sm:$0xff] %vm1952, %v1811
        %1979 = vst.msk [vmem:[%s353 + $0x1a0] sm:$0xff] %vm1952, %v1813
        %1980 = vst.msk [vmem:[%s353 + $0x1b0] sm:$0xff] %vm1952, %v1815
        %1981 = vst.msk [vmem:[%s353 + $0x1c0] sm:$0xff] %vm1952, %v1817
        %1982 = vst.msk [vmem:[%s353 + $0x1d0] sm:$0xff] %vm1952, %v1819
        %1983 = vst.msk [vmem:[%s353 + $0x1e0] sm:$0xff] %vm1952, %v1821
        %1984 = vst.msk [vmem:[%s353 + $0x1f0] sm:$0xff] %vm1952, %v1823
        %1985 = vst.msk [vmem:[%s353 + $0x200] sm:$0xff] %vm1952, %v1825
        %1986 = vst.msk [vmem:[%s353 + $0x210] sm:$0xff] %vm1952, %v1827
        %1987 = vst.msk [vmem:[%s353 + $0x220] sm:$0xff] %vm1952, %v1829
        %1988 = vst.msk [vmem:[%s353 + $0x230] sm:$0xff] %vm1952, %v1831
        %1989 = vst.msk [vmem:[%s353 + $0x240] sm:$0xff] %vm1952, %v1833
        %1990 = vst.msk [vmem:[%s353 + $0x250] sm:$0xff] %vm1952, %v1835
        %1991 = vst.msk [vmem:[%s353 + $0x260] sm:$0xff] %vm1952, %v1837
        %1992 = vst.msk [vmem:[%s353 + $0x270] sm:$0xff] %vm1952, %v1839
        %1993 = vst.msk [vmem:[%s353 + $0x280] sm:$0xff] %vm1952, %v1841
        %1994 = vst.msk [vmem:[%s353 + $0x290] sm:$0xff] %vm1952, %v1843
        %1995 = vst.msk [vmem:[%s353 + $0x2a0] sm:$0xff] %vm1952, %v1845
        %1996 = vst.msk [vmem:[%s353 + $0x2b0] sm:$0xff] %vm1952, %v1847
        %1997 = vst.msk [vmem:[%s353 + $0x2c0] sm:$0xff] %vm1952, %v1849
        %1998 = vst.msk [vmem:[%s353 + $0x2d0] sm:$0xff] %vm1952, %v1851
        %1999 = vst.msk [vmem:[%s353 + $0x2e0] sm:$0xff] %vm1952, %v1853
        %2000 = vst.msk [vmem:[%s353 + $0x2f0] sm:$0xff] %vm1952, %v1855
        %2001 = vst.msk [vmem:[%s353 + $0x300] sm:$0xff] %vm1952, %v1857
        %2002 = vst.msk [vmem:[%s353 + $0x310] sm:$0xff] %vm1952, %v1859
        %2003 = vst.msk [vmem:[%s353 + $0x320] sm:$0xff] %vm1952, %v1861
        %2004 = vst.msk [vmem:[%s353 + $0x330] sm:$0xff] %vm1952, %v1863
        %2005 = vst.msk [vmem:[%s353 + $0x340] sm:$0xff] %vm1952, %v1865
        %2006 = vst.msk [vmem:[%s353 + $0x350] sm:$0xff] %vm1952, %v1867
        %2007 = vst.msk [vmem:[%s353 + $0x360] sm:$0xff] %vm1952, %v1869
        %2008 = vst.msk [vmem:[%s353 + $0x370] sm:$0xff] %vm1952, %v1871
        %2009 = vst.msk [vmem:[%s353 + $0x380] sm:$0xff] %vm1952, %v1873
        %2010 = vst.msk [vmem:[%s353 + $0x390] sm:$0xff] %vm1952, %v1875
        %2011 = vst.msk [vmem:[%s353 + $0x3a0] sm:$0xff] %vm1952, %v1877
        %2012 = vst.msk [vmem:[%s353 + $0x3b0] sm:$0xff] %vm1952, %v1879
        %2013 = vst.msk [vmem:[%s353 + $0x3c0] sm:$0xff] %vm1952, %v1881
        %2014 = vst.msk [vmem:[%s353 + $0x3d0] sm:$0xff] %vm1952, %v1883
        %2015 = vst.msk [vmem:[%s353 + $0x3e0] sm:$0xff] %vm1952, %v1885
        %2016 = vst.msk [vmem:[%s353 + $0x3f0] sm:$0xff] %vm1952, %v1887
        %v2017 = vpack.c.bf16 %v1633, %v1632
        %v2018 = vpack.c.bf16 %v1635, %v1634
        %v2019 = vpack.c.bf16 %v1637, %v1636
        %v2020 = vpack.c.bf16 %v1639, %v1638
        %v2021 = vpack.c.bf16 %v1641, %v1640
        %v2022 = vpack.c.bf16 %v1643, %v1642
        %v2023 = vpack.c.bf16 %v1645, %v1644
        %v2024 = vpack.c.bf16 %v1647, %v1646
        %v2025 = vpack.c.bf16 %v1649, %v1648
        %v2026 = vpack.c.bf16 %v1651, %v1650
        %v2027 = vpack.c.bf16 %v1653, %v1652
        %v2028 = vpack.c.bf16 %v1655, %v1654
        %v2029 = vpack.c.bf16 %v1657, %v1656
        %v2030 = vpack.c.bf16 %v1659, %v1658
        %v2031 = vpack.c.bf16 %v1661, %v1660
        %v2032 = vpack.c.bf16 %v1663, %v1662
        %v2033 = vpack.c.bf16 %v1665, %v1664
        %v2034 = vpack.c.bf16 %v1667, %v1666
        %v2035 = vpack.c.bf16 %v1669, %v1668
        %v2036 = vpack.c.bf16 %v1671, %v1670
        %v2037 = vpack.c.bf16 %v1673, %v1672
        %v2038 = vpack.c.bf16 %v1675, %v1674
        %v2039 = vpack.c.bf16 %v1677, %v1676
        %v2040 = vpack.c.bf16 %v1679, %v1678
        %v2041 = vpack.c.bf16 %v1681, %v1680
        %v2042 = vpack.c.bf16 %v1683, %v1682
        %v2043 = vpack.c.bf16 %v1685, %v1684
        %v2044 = vpack.c.bf16 %v1687, %v1686
        %v2045 = vpack.c.bf16 %v1689, %v1688
        %v2046 = vpack.c.bf16 %v1691, %v1690
        %v2047 = vpack.c.bf16 %v1693, %v1692
        %v2048 = vpack.c.bf16 %v1695, %v1694
        %v2049 = vld [vmem:[%s3] sm:$0xf]
        %v2050 = vld [vmem:[%s3 + $0x4] sm:$0xf]
        %v2051 = vld [vmem:[%s3 + $0x8] sm:$0xf]
        %v2052 = vld [vmem:[%s3 + $0xc] sm:$0xf]
        %v2053 = vld [vmem:[%s3 + $0x10] sm:$0xf]
        %v2054 = vld [vmem:[%s3 + $0x14] sm:$0xf]
        %v2055 = vld [vmem:[%s3 + $0x18] sm:$0xf]
        %v2056 = vld [vmem:[%s3 + $0x1c] sm:$0xf]
        %v2057 = vld [vmem:[%s3 + $0x20] sm:$0xf]
        %v2058 = vld [vmem:[%s3 + $0x24] sm:$0xf]
        %v2059 = vld [vmem:[%s3 + $0x28] sm:$0xf]
        %v2060 = vld [vmem:[%s3 + $0x2c] sm:$0xf]
        %v2061 = vld [vmem:[%s3 + $0x30] sm:$0xf]
        %v2062 = vld [vmem:[%s3 + $0x34] sm:$0xf]
        %v2063 = vld [vmem:[%s3 + $0x38] sm:$0xf]
        %v2064 = vld [vmem:[%s3 + $0x3c] sm:$0xf]
        %v2065 = vld [vmem:[%s9 + $0x2] sm:$0x1]
        %v2066 = vlaneseq
        %v2067 = vshrl.u32 %v2066, 7
        %v2068 = vsub.s32 0, %v2067
        %v2069 = vrot.slane %v2065, %v2068
        %v2086 = vunpack.c.l.b16 %v2049
        %v2087 = vunpack.c.l.b16 %v2050
        %v2088 = vunpack.c.l.b16 %v2051
        %v2089 = vunpack.c.l.b16 %v2052
        %v2090 = vunpack.c.l.b16 %v2053
        %v2091 = vunpack.c.l.b16 %v2054
        %v2092 = vunpack.c.l.b16 %v2055
        %v2093 = vunpack.c.l.b16 %v2056
        %v2094 = vunpack.c.l.b16 %v2057
        %v2095 = vunpack.c.l.b16 %v2058
        %v2096 = vunpack.c.l.b16 %v2059
        %v2097 = vunpack.c.l.b16 %v2060
        %v2098 = vunpack.c.l.b16 %v2061
        %v2099 = vunpack.c.l.b16 %v2062
        %v2100 = vunpack.c.l.b16 %v2063
        %v2101 = vunpack.c.l.b16 %v2064
        %v2102 = vpack.c.b16 %v2087, %v2086
        %v2103 = vpack.c.b16 %v2089, %v2088
        %v2104 = vpack.c.b16 %v2091, %v2090
        %v2105 = vpack.c.b16 %v2093, %v2092
        %v2106 = vpack.c.b16 %v2095, %v2094
        %v2107 = vpack.c.b16 %v2097, %v2096
        %v2108 = vpack.c.b16 %v2099, %v2098
        %v2109 = vpack.c.b16 %v2101, %v2100
        %2118 = vmatprep.subr.bf16.mxu0 0
        %2119 = vmatpush1.bf16.msra.mxu0 %v2109
        %2120 = vmatprep.subr.bf16.mxu0 0
        %2121 = vmatpush1.bf16.msra.mxu0 %v2108
        %2122 = vmatprep.subr.bf16.mxu0 0
        %2123 = vmatpush1.bf16.msra.mxu0 %v2107
        %2124 = vmatprep.subr.bf16.mxu0 0
        %2125 = vmatpush1.bf16.msra.mxu0 %v2106
        %2126 = vmatprep.subr.bf16.mxu0 0
        %2127 = vmatpush1.bf16.msra.mxu0 %v2105
        %2128 = vmatprep.subr.bf16.mxu0 0
        %2129 = vmatpush1.bf16.msra.mxu0 %v2104
        %2130 = vmatprep.subr.bf16.mxu0 0
        %2131 = vmatpush1.bf16.msra.mxu0 %v2103
        %2132 = vmatprep.subr.bf16.mxu0 0
        %2133 = vmatpush1.bf16.msra.mxu0 %v2102
        %2134 = vmatprep.subr.bf16.mxu0 0
        %2135 = vmatpush2.bf16.msra.mxu0 0
        %2136 = vmatprep.subr.bf16.mxu0 0
        %2137 = vmatpush2.bf16.msra.mxu0 0
        %2138 = vmatprep.subr.bf16.mxu0 0
        %2139 = vmatpush2.bf16.msra.mxu0 0
        %2140 = vmatprep.subr.bf16.mxu0 0
        %2141 = vmatpush2.bf16.msra.mxu0 0
        %2142 = vmatprep.subr.bf16.mxu0 0
        %2143 = vmatpush2.bf16.msra.mxu0 0
        %2144 = vmatprep.subr.bf16.mxu0 0
        %2145 = vmatpush2.bf16.msra.mxu0 0
        %2146 = vmatprep.subr.bf16.mxu0 0
        %2147 = vmatpush2.bf16.msra.mxu0 0
        %2148 = vmatprep.subr.bf16.mxu0 0
        %2149 = vmatpush2.bf16.msra.mxu0 0
        %2150 = vmatprep.mubr.bf16.mxu0 0
        %2151 = vmatmul.mubr.bf16.gmra.mxu0 %v2017
        %v2152 = vpop.f32.mrf.mxu0
        %v2153 = vadd.f32 %v2069, %v2152
        %v2154 = vpop.f32.mrf.mxu0
        %v2155 = vpop.f32.mrf.mxu0
        %v2156 = vadd.f32 %v2069, %v2155
        %v2157 = vpop.f32.mrf.mxu0
        %2158 = vmatprep.mubr.bf16.mxu0 0
        %2159 = vmatmul.mubr.bf16.gmra.mxu0 %v2018
        %v2160 = vpop.f32.mrf.mxu0
        %v2161 = vadd.f32 %v2069, %v2160
        %v2162 = vpop.f32.mrf.mxu0
        %v2163 = vpop.f32.mrf.mxu0
        %v2164 = vadd.f32 %v2069, %v2163
        %v2165 = vpop.f32.mrf.mxu0
        %2166 = vmatprep.mubr.bf16.mxu0 0
        %2167 = vmatmul.mubr.bf16.gmra.mxu0 %v2019
        %v2168 = vpop.f32.mrf.mxu0
        %v2169 = vadd.f32 %v2069, %v2168
        %v2170 = vpop.f32.mrf.mxu0
        %v2171 = vpop.f32.mrf.mxu0
        %v2172 = vadd.f32 %v2069, %v2171
        %v2173 = vpop.f32.mrf.mxu0
        %2174 = vmatprep.mubr.bf16.mxu0 0
        %2175 = vmatmul.mubr.bf16.gmra.mxu0 %v2020
        %v2176 = vpop.f32.mrf.mxu0
        %v2177 = vadd.f32 %v2069, %v2176
        %v2178 = vpop.f32.mrf.mxu0
        %v2179 = vpop.f32.mrf.mxu0
        %v2180 = vadd.f32 %v2069, %v2179
        %v2181 = vpop.f32.mrf.mxu0
        %2182 = vmatprep.mubr.bf16.mxu0 0
        %2183 = vmatmul.mubr.bf16.gmra.mxu0 %v2021
        %v2184 = vpop.f32.mrf.mxu0
        %v2185 = vadd.f32 %v2069, %v2184
        %v2186 = vpop.f32.mrf.mxu0
        %v2187 = vpop.f32.mrf.mxu0
        %v2188 = vadd.f32 %v2069, %v2187
        %v2189 = vpop.f32.mrf.mxu0
        %2190 = vmatprep.mubr.bf16.mxu0 0
        %2191 = vmatmul.mubr.bf16.gmra.mxu0 %v2022
        %v2192 = vpop.f32.mrf.mxu0
        %v2193 = vadd.f32 %v2069, %v2192
        %v2194 = vpop.f32.mrf.mxu0
        %v2195 = vpop.f32.mrf.mxu0
        %v2196 = vadd.f32 %v2069, %v2195
        %v2197 = vpop.f32.mrf.mxu0
        %2198 = vmatprep.mubr.bf16.mxu0 0
        %2199 = vmatmul.mubr.bf16.gmra.mxu0 %v2023
        %v2200 = vpop.f32.mrf.mxu0
        %v2201 = vadd.f32 %v2069, %v2200
        %v2202 = vpop.f32.mrf.mxu0
        %v2203 = vpop.f32.mrf.mxu0
        %v2204 = vadd.f32 %v2069, %v2203
        %v2205 = vpop.f32.mrf.mxu0
        %2206 = vmatprep.mubr.bf16.mxu0 0
        %2207 = vmatmul.mubr.bf16.gmra.mxu0 %v2024
        %v2208 = vpop.f32.mrf.mxu0
        %v2209 = vadd.f32 %v2069, %v2208
        %v2210 = vpop.f32.mrf.mxu0
        %v2211 = vpop.f32.mrf.mxu0
        %v2212 = vadd.f32 %v2069, %v2211
        %v2213 = vpop.f32.mrf.mxu0
        %2214 = vmatprep.mubr.bf16.mxu0 0
        %2215 = vmatmul.mubr.bf16.gmra.mxu0 %v2025
        %v2216 = vpop.f32.mrf.mxu0
        %v2217 = vadd.f32 %v2069, %v2216
        %v2218 = vpop.f32.mrf.mxu0
        %v2219 = vpop.f32.mrf.mxu0
        %v2220 = vadd.f32 %v2069, %v2219
        %v2221 = vpop.f32.mrf.mxu0
        %2222 = vmatprep.mubr.bf16.mxu0 0
        %2223 = vmatmul.mubr.bf16.gmra.mxu0 %v2026
        %v2224 = vpop.f32.mrf.mxu0
        %v2225 = vadd.f32 %v2069, %v2224
        %v2226 = vpop.f32.mrf.mxu0
        %v2227 = vpop.f32.mrf.mxu0
        %v2228 = vadd.f32 %v2069, %v2227
        %v2229 = vpop.f32.mrf.mxu0
        %2230 = vmatprep.mubr.bf16.mxu0 0
        %2231 = vmatmul.mubr.bf16.gmra.mxu0 %v2027
        %v2232 = vpop.f32.mrf.mxu0
        %v2233 = vadd.f32 %v2069, %v2232
        %v2234 = vpop.f32.mrf.mxu0
        %v2235 = vpop.f32.mrf.mxu0
        %v2236 = vadd.f32 %v2069, %v2235
        %v2237 = vpop.f32.mrf.mxu0
        %2238 = vmatprep.mubr.bf16.mxu0 0
        %2239 = vmatmul.mubr.bf16.gmra.mxu0 %v2028
        %v2240 = vpop.f32.mrf.mxu0
        %v2241 = vadd.f32 %v2069, %v2240
        %v2242 = vpop.f32.mrf.mxu0
        %v2243 = vpop.f32.mrf.mxu0
        %v2244 = vadd.f32 %v2069, %v2243
        %v2245 = vpop.f32.mrf.mxu0
        %2246 = vmatprep.mubr.bf16.mxu0 0
        %2247 = vmatmul.mubr.bf16.gmra.mxu0 %v2029
        %v2248 = vpop.f32.mrf.mxu0
        %v2249 = vadd.f32 %v2069, %v2248
        %v2250 = vpop.f32.mrf.mxu0
        %v2251 = vpop.f32.mrf.mxu0
        %v2252 = vadd.f32 %v2069, %v2251
        %v2253 = vpop.f32.mrf.mxu0
        %2254 = vmatprep.mubr.bf16.mxu0 0
        %2255 = vmatmul.mubr.bf16.gmra.mxu0 %v2030
        %v2256 = vpop.f32.mrf.mxu0
        %v2257 = vadd.f32 %v2069, %v2256
        %v2258 = vpop.f32.mrf.mxu0
        %v2259 = vpop.f32.mrf.mxu0
        %v2260 = vadd.f32 %v2069, %v2259
        %v2261 = vpop.f32.mrf.mxu0
        %2262 = vmatprep.mubr.bf16.mxu0 0
        %2263 = vmatmul.mubr.bf16.gmra.mxu0 %v2031
        %v2264 = vpop.f32.mrf.mxu0
        %v2265 = vadd.f32 %v2069, %v2264
        %v2266 = vpop.f32.mrf.mxu0
        %v2267 = vpop.f32.mrf.mxu0
        %v2268 = vadd.f32 %v2069, %v2267
        %v2269 = vpop.f32.mrf.mxu0
        %2270 = vmatprep.mubr.bf16.mxu0 0
        %2271 = vmatmul.mubr.bf16.gmra.mxu0 %v2032
        %v2272 = vpop.f32.mrf.mxu0
        %v2273 = vadd.f32 %v2069, %v2272
        %v2274 = vpop.f32.mrf.mxu0
        %v2275 = vpop.f32.mrf.mxu0
        %v2276 = vadd.f32 %v2069, %v2275
        %v2277 = vpop.f32.mrf.mxu0
        %2278 = vmatprep.mubr.bf16.mxu0 0
        %2279 = vmatmul.mubr.bf16.gmra.mxu0 %v2033
        %v2280 = vpop.f32.mrf.mxu0
        %v2281 = vadd.f32 %v2069, %v2280
        %v2282 = vpop.f32.mrf.mxu0
        %v2283 = vpop.f32.mrf.mxu0
        %v2284 = vadd.f32 %v2069, %v2283
        %v2285 = vpop.f32.mrf.mxu0
        %2286 = vmatprep.mubr.bf16.mxu0 0
        %2287 = vmatmul.mubr.bf16.gmra.mxu0 %v2034
        %v2288 = vpop.f32.mrf.mxu0
        %v2289 = vadd.f32 %v2069, %v2288
        %v2290 = vpop.f32.mrf.mxu0
        %v2291 = vpop.f32.mrf.mxu0
        %v2292 = vadd.f32 %v2069, %v2291
        %v2293 = vpop.f32.mrf.mxu0
        %2294 = vmatprep.mubr.bf16.mxu0 0
        %2295 = vmatmul.mubr.bf16.gmra.mxu0 %v2035
        %v2296 = vpop.f32.mrf.mxu0
        %v2297 = vadd.f32 %v2069, %v2296
        %v2298 = vpop.f32.mrf.mxu0
        %v2299 = vpop.f32.mrf.mxu0
        %v2300 = vadd.f32 %v2069, %v2299
        %v2301 = vpop.f32.mrf.mxu0
        %2302 = vmatprep.mubr.bf16.mxu0 0
        %2303 = vmatmul.mubr.bf16.gmra.mxu0 %v2036
        %v2304 = vpop.f32.mrf.mxu0
        %v2305 = vadd.f32 %v2069, %v2304
        %v2306 = vpop.f32.mrf.mxu0
        %v2307 = vpop.f32.mrf.mxu0
        %v2308 = vadd.f32 %v2069, %v2307
        %v2309 = vpop.f32.mrf.mxu0
        %2310 = vmatprep.mubr.bf16.mxu0 0
        %2311 = vmatmul.mubr.bf16.gmra.mxu0 %v2037
        %v2312 = vpop.f32.mrf.mxu0
        %v2313 = vadd.f32 %v2069, %v2312
        %v2314 = vpop.f32.mrf.mxu0
        %v2315 = vpop.f32.mrf.mxu0
        %v2316 = vadd.f32 %v2069, %v2315
        %v2317 = vpop.f32.mrf.mxu0
        %2318 = vmatprep.mubr.bf16.mxu0 0
        %2319 = vmatmul.mubr.bf16.gmra.mxu0 %v2038
        %v2320 = vpop.f32.mrf.mxu0
        %v2321 = vadd.f32 %v2069, %v2320
        %v2322 = vpop.f32.mrf.mxu0
        %v2323 = vpop.f32.mrf.mxu0
        %v2324 = vadd.f32 %v2069, %v2323
        %v2325 = vpop.f32.mrf.mxu0
        %2326 = vmatprep.mubr.bf16.mxu0 0
        %2327 = vmatmul.mubr.bf16.gmra.mxu0 %v2039
        %v2328 = vpop.f32.mrf.mxu0
        %v2329 = vadd.f32 %v2069, %v2328
        %v2330 = vpop.f32.mrf.mxu0
        %v2331 = vpop.f32.mrf.mxu0
        %v2332 = vadd.f32 %v2069, %v2331
        %v2333 = vpop.f32.mrf.mxu0
        %2334 = vmatprep.mubr.bf16.mxu0 0
        %2335 = vmatmul.mubr.bf16.gmra.mxu0 %v2040
        %v2336 = vpop.f32.mrf.mxu0
        %v2337 = vadd.f32 %v2069, %v2336
        %v2338 = vpop.f32.mrf.mxu0
        %v2339 = vpop.f32.mrf.mxu0
        %v2340 = vadd.f32 %v2069, %v2339
        %v2341 = vpop.f32.mrf.mxu0
        %2342 = vmatprep.mubr.bf16.mxu0 0
        %2343 = vmatmul.mubr.bf16.gmra.mxu0 %v2041
        %v2344 = vpop.f32.mrf.mxu0
        %v2345 = vadd.f32 %v2069, %v2344
        %v2346 = vpop.f32.mrf.mxu0
        %v2347 = vpop.f32.mrf.mxu0
        %v2348 = vadd.f32 %v2069, %v2347
        %v2349 = vpop.f32.mrf.mxu0
        %2350 = vmatprep.mubr.bf16.mxu0 0
        %2351 = vmatmul.mubr.bf16.gmra.mxu0 %v2042
        %v2352 = vpop.f32.mrf.mxu0
        %v2353 = vadd.f32 %v2069, %v2352
        %v2354 = vpop.f32.mrf.mxu0
        %v2355 = vpop.f32.mrf.mxu0
        %v2356 = vadd.f32 %v2069, %v2355
        %v2357 = vpop.f32.mrf.mxu0
        %2358 = vmatprep.mubr.bf16.mxu0 0
        %2359 = vmatmul.mubr.bf16.gmra.mxu0 %v2043
        %v2360 = vpop.f32.mrf.mxu0
        %v2361 = vadd.f32 %v2069, %v2360
        %v2362 = vpop.f32.mrf.mxu0
        %v2363 = vpop.f32.mrf.mxu0
        %v2364 = vadd.f32 %v2069, %v2363
        %v2365 = vpop.f32.mrf.mxu0
        %2366 = vmatprep.mubr.bf16.mxu0 0
        %2367 = vmatmul.mubr.bf16.gmra.mxu0 %v2044
        %v2368 = vpop.f32.mrf.mxu0
        %v2369 = vadd.f32 %v2069, %v2368
        %v2370 = vpop.f32.mrf.mxu0
        %v2371 = vpop.f32.mrf.mxu0
        %v2372 = vadd.f32 %v2069, %v2371
        %v2373 = vpop.f32.mrf.mxu0
        %2374 = vmatprep.mubr.bf16.mxu0 0
        %2375 = vmatmul.mubr.bf16.gmra.mxu0 %v2045
        %v2376 = vpop.f32.mrf.mxu0
        %v2377 = vadd.f32 %v2069, %v2376
        %v2378 = vpop.f32.mrf.mxu0
        %v2379 = vpop.f32.mrf.mxu0
        %v2380 = vadd.f32 %v2069, %v2379
        %v2381 = vpop.f32.mrf.mxu0
        %2382 = vmatprep.mubr.bf16.mxu0 0
        %2383 = vmatmul.mubr.bf16.gmra.mxu0 %v2046
        %v2384 = vpop.f32.mrf.mxu0
        %v2385 = vadd.f32 %v2069, %v2384
        %v2386 = vpop.f32.mrf.mxu0
        %v2387 = vpop.f32.mrf.mxu0
        %v2388 = vadd.f32 %v2069, %v2387
        %v2389 = vpop.f32.mrf.mxu0
        %2390 = vmatprep.mubr.bf16.mxu0 0
        %2391 = vmatmul.mubr.bf16.gmra.mxu0 %v2047
        %v2392 = vpop.f32.mrf.mxu0
        %v2393 = vadd.f32 %v2069, %v2392
        %v2394 = vpop.f32.mrf.mxu0
        %v2395 = vpop.f32.mrf.mxu0
        %v2396 = vadd.f32 %v2069, %v2395
        %v2397 = vpop.f32.mrf.mxu0
        %2398 = vmatprep.mubr.bf16.mxu0 0
        %2399 = vmatmul.mubr.bf16.gmra.mxu0 %v2048
        %v2400 = vpop.f32.mrf.mxu0
        %v2401 = vadd.f32 %v2069, %v2400
        %v2402 = vpop.f32.mrf.mxu0
        %v2403 = vpop.f32.mrf.mxu0
        %v2404 = vadd.f32 %v2069, %v2403
        %v2405 = vpop.f32.mrf.mxu0
        %2406 = vdwg.mxu0
        %v2407 = vmax.f32 %v2153, 0.0
        %v2408 = vmax.f32 %v2156, 0.0
        %v2409 = vmax.f32 %v2161, 0.0
        %v2410 = vmax.f32 %v2164, 0.0
        %v2411 = vmax.f32 %v2169, 0.0
        %v2412 = vmax.f32 %v2172, 0.0
        %v2413 = vmax.f32 %v2177, 0.0
        %v2414 = vmax.f32 %v2180, 0.0
        %v2415 = vmax.f32 %v2185, 0.0
        %v2416 = vmax.f32 %v2188, 0.0
        %v2417 = vmax.f32 %v2193, 0.0
        %v2418 = vmax.f32 %v2196, 0.0
        %v2419 = vmax.f32 %v2201, 0.0
        %v2420 = vmax.f32 %v2204, 0.0
        %v2421 = vmax.f32 %v2209, 0.0
        %v2422 = vmax.f32 %v2212, 0.0
        %v2423 = vmax.f32 %v2217, 0.0
        %v2424 = vmax.f32 %v2220, 0.0
        %v2425 = vmax.f32 %v2225, 0.0
        %v2426 = vmax.f32 %v2228, 0.0
        %v2427 = vmax.f32 %v2233, 0.0
        %v2428 = vmax.f32 %v2236, 0.0
        %v2429 = vmax.f32 %v2241, 0.0
        %v2430 = vmax.f32 %v2244, 0.0
        %v2431 = vmax.f32 %v2249, 0.0
        %v2432 = vmax.f32 %v2252, 0.0
        %v2433 = vmax.f32 %v2257, 0.0
        %v2434 = vmax.f32 %v2260, 0.0
        %v2435 = vmax.f32 %v2265, 0.0
        %v2436 = vmax.f32 %v2268, 0.0
        %v2437 = vmax.f32 %v2273, 0.0
        %v2438 = vmax.f32 %v2276, 0.0
        %v2439 = vmax.f32 %v2281, 0.0
        %v2440 = vmax.f32 %v2284, 0.0
        %v2441 = vmax.f32 %v2289, 0.0
        %v2442 = vmax.f32 %v2292, 0.0
        %v2443 = vmax.f32 %v2297, 0.0
        %v2444 = vmax.f32 %v2300, 0.0
        %v2445 = vmax.f32 %v2305, 0.0
        %v2446 = vmax.f32 %v2308, 0.0
        %v2447 = vmax.f32 %v2313, 0.0
        %v2448 = vmax.f32 %v2316, 0.0
        %v2449 = vmax.f32 %v2321, 0.0
        %v2450 = vmax.f32 %v2324, 0.0
        %v2451 = vmax.f32 %v2329, 0.0
        %v2452 = vmax.f32 %v2332, 0.0
        %v2453 = vmax.f32 %v2337, 0.0
        %v2454 = vmax.f32 %v2340, 0.0
        %v2455 = vmax.f32 %v2345, 0.0
        %v2456 = vmax.f32 %v2348, 0.0
        %v2457 = vmax.f32 %v2353, 0.0
        %v2458 = vmax.f32 %v2356, 0.0
        %v2459 = vmax.f32 %v2361, 0.0
        %v2460 = vmax.f32 %v2364, 0.0
        %v2461 = vmax.f32 %v2369, 0.0
        %v2462 = vmax.f32 %v2372, 0.0
        %v2463 = vmax.f32 %v2377, 0.0
        %v2464 = vmax.f32 %v2380, 0.0
        %v2465 = vmax.f32 %v2385, 0.0
        %v2466 = vmax.f32 %v2388, 0.0
        %v2467 = vmax.f32 %v2393, 0.0
        %v2468 = vmax.f32 %v2396, 0.0
        %v2469 = vmax.f32 %v2401, 0.0
        %v2470 = vmax.f32 %v2404, 0.0
        %2535 = vrot.lane.b32.xlu0 %v2407, 96
        %v2536 = vpop.permute.xlu0 %2535
        %2537 = vrot.lane.b32.xlu0 %v2408, 96
        %v2538 = vpop.permute.xlu0 %2537
        %2539 = vrot.lane.b32.xlu0 %v2409, 96
        %v2540 = vpop.permute.xlu0 %2539
        %2541 = vrot.lane.b32.xlu0 %v2410, 96
        %v2542 = vpop.permute.xlu0 %2541
        %2543 = vrot.lane.b32.xlu0 %v2411, 96
        %v2544 = vpop.permute.xlu0 %2543
        %2545 = vrot.lane.b32.xlu0 %v2412, 96
        %v2546 = vpop.permute.xlu0 %2545
        %2547 = vrot.lane.b32.xlu0 %v2413, 96
        %v2548 = vpop.permute.xlu0 %2547
        %2549 = vrot.lane.b32.xlu0 %v2414, 96
        %v2550 = vpop.permute.xlu0 %2549
        %2551 = vrot.lane.b32.xlu0 %v2415, 96
        %v2552 = vpop.permute.xlu0 %2551
        %2553 = vrot.lane.b32.xlu0 %v2416, 96
        %v2554 = vpop.permute.xlu0 %2553
        %2555 = vrot.lane.b32.xlu0 %v2417, 96
        %v2556 = vpop.permute.xlu0 %2555
        %2557 = vrot.lane.b32.xlu0 %v2418, 96
        %v2558 = vpop.permute.xlu0 %2557
        %2559 = vrot.lane.b32.xlu0 %v2419, 96
        %v2560 = vpop.permute.xlu0 %2559
        %2561 = vrot.lane.b32.xlu0 %v2420, 96
        %v2562 = vpop.permute.xlu0 %2561
        %2563 = vrot.lane.b32.xlu0 %v2421, 96
        %v2564 = vpop.permute.xlu0 %2563
        %2565 = vrot.lane.b32.xlu0 %v2422, 96
        %v2566 = vpop.permute.xlu0 %2565
        %2567 = vrot.lane.b32.xlu0 %v2423, 96
        %v2568 = vpop.permute.xlu0 %2567
        %2569 = vrot.lane.b32.xlu0 %v2424, 96
        %v2570 = vpop.permute.xlu0 %2569
        %2571 = vrot.lane.b32.xlu0 %v2425, 96
        %v2572 = vpop.permute.xlu0 %2571
        %2573 = vrot.lane.b32.xlu0 %v2426, 96
        %v2574 = vpop.permute.xlu0 %2573
        %2575 = vrot.lane.b32.xlu0 %v2427, 96
        %v2576 = vpop.permute.xlu0 %2575
        %2577 = vrot.lane.b32.xlu0 %v2428, 96
        %v2578 = vpop.permute.xlu0 %2577
        %2579 = vrot.lane.b32.xlu0 %v2429, 96
        %v2580 = vpop.permute.xlu0 %2579
        %2581 = vrot.lane.b32.xlu0 %v2430, 96
        %v2582 = vpop.permute.xlu0 %2581
        %2583 = vrot.lane.b32.xlu0 %v2431, 96
        %v2584 = vpop.permute.xlu0 %2583
        %2585 = vrot.lane.b32.xlu0 %v2432, 96
        %v2586 = vpop.permute.xlu0 %2585
        %2587 = vrot.lane.b32.xlu0 %v2433, 96
        %v2588 = vpop.permute.xlu0 %2587
        %2589 = vrot.lane.b32.xlu0 %v2434, 96
        %v2590 = vpop.permute.xlu0 %2589
        %2591 = vrot.lane.b32.xlu0 %v2435, 96
        %v2592 = vpop.permute.xlu0 %2591
        %2593 = vrot.lane.b32.xlu0 %v2436, 96
        %v2594 = vpop.permute.xlu0 %2593
        %2595 = vrot.lane.b32.xlu0 %v2437, 96
        %v2596 = vpop.permute.xlu0 %2595
        %2597 = vrot.lane.b32.xlu0 %v2438, 96
        %v2598 = vpop.permute.xlu0 %2597
        %2599 = vrot.lane.b32.xlu0 %v2439, 96
        %v2600 = vpop.permute.xlu0 %2599
        %2601 = vrot.lane.b32.xlu0 %v2440, 96
        %v2602 = vpop.permute.xlu0 %2601
        %2603 = vrot.lane.b32.xlu0 %v2441, 96
        %v2604 = vpop.permute.xlu0 %2603
        %2605 = vrot.lane.b32.xlu0 %v2442, 96
        %v2606 = vpop.permute.xlu0 %2605
        %2607 = vrot.lane.b32.xlu0 %v2443, 96
        %v2608 = vpop.permute.xlu0 %2607
        %2609 = vrot.lane.b32.xlu0 %v2444, 96
        %v2610 = vpop.permute.xlu0 %2609
        %2611 = vrot.lane.b32.xlu0 %v2445, 96
        %v2612 = vpop.permute.xlu0 %2611
        %2613 = vrot.lane.b32.xlu0 %v2446, 96
        %v2614 = vpop.permute.xlu0 %2613
        %2615 = vrot.lane.b32.xlu0 %v2447, 96
        %v2616 = vpop.permute.xlu0 %2615
        %2617 = vrot.lane.b32.xlu0 %v2448, 96
        %v2618 = vpop.permute.xlu0 %2617
        %2619 = vrot.lane.b32.xlu0 %v2449, 96
        %v2620 = vpop.permute.xlu0 %2619
        %2621 = vrot.lane.b32.xlu0 %v2450, 96
        %v2622 = vpop.permute.xlu0 %2621
        %2623 = vrot.lane.b32.xlu0 %v2451, 96
        %v2624 = vpop.permute.xlu0 %2623
        %2625 = vrot.lane.b32.xlu0 %v2452, 96
        %v2626 = vpop.permute.xlu0 %2625
        %2627 = vrot.lane.b32.xlu0 %v2453, 96
        %v2628 = vpop.permute.xlu0 %2627
        %2629 = vrot.lane.b32.xlu0 %v2454, 96
        %v2630 = vpop.permute.xlu0 %2629
        %2631 = vrot.lane.b32.xlu0 %v2455, 96
        %v2632 = vpop.permute.xlu0 %2631
        %2633 = vrot.lane.b32.xlu0 %v2456, 96
        %v2634 = vpop.permute.xlu0 %2633
        %2635 = vrot.lane.b32.xlu0 %v2457, 96
        %v2636 = vpop.permute.xlu0 %2635
        %2637 = vrot.lane.b32.xlu0 %v2458, 96
        %v2638 = vpop.permute.xlu0 %2637
        %2639 = vrot.lane.b32.xlu0 %v2459, 96
        %v2640 = vpop.permute.xlu0 %2639
        %2641 = vrot.lane.b32.xlu0 %v2460, 96
        %v2642 = vpop.permute.xlu0 %2641
        %2643 = vrot.lane.b32.xlu0 %v2461, 96
        %v2644 = vpop.permute.xlu0 %2643
        %2645 = vrot.lane.b32.xlu0 %v2462, 96
        %v2646 = vpop.permute.xlu0 %2645
        %2647 = vrot.lane.b32.xlu0 %v2463, 96
        %v2648 = vpop.permute.xlu0 %2647
        %2649 = vrot.lane.b32.xlu0 %v2464, 96
        %v2650 = vpop.permute.xlu0 %2649
        %2651 = vrot.lane.b32.xlu0 %v2465, 96
        %v2652 = vpop.permute.xlu0 %2651
        %2653 = vrot.lane.b32.xlu0 %v2466, 96
        %v2654 = vpop.permute.xlu0 %2653
        %2655 = vrot.lane.b32.xlu0 %v2467, 96
        %v2656 = vpop.permute.xlu0 %2655
        %2657 = vrot.lane.b32.xlu0 %v2468, 96
        %v2658 = vpop.permute.xlu0 %2657
        %2659 = vrot.lane.b32.xlu0 %v2469, 96
        %v2660 = vpop.permute.xlu0 %2659
        %2661 = vrot.lane.b32.xlu0 %v2470, 96
        %v2662 = vpop.permute.xlu0 %2661
        %vm2727 = vcmask 1048320
        %2728 = vst.msk [vmem:[%s353] sm:$0xff] %vm2727, %v2536
        %2729 = vst.msk [vmem:[%s353 + $0x10] sm:$0xff] %vm2727, %v2538
        %2730 = vst.msk [vmem:[%s353 + $0x20] sm:$0xff] %vm2727, %v2540
        %2731 = vst.msk [vmem:[%s353 + $0x30] sm:$0xff] %vm2727, %v2542
        %2732 = vst.msk [vmem:[%s353 + $0x40] sm:$0xff] %vm2727, %v2544
        %2733 = vst.msk [vmem:[%s353 + $0x50] sm:$0xff] %vm2727, %v2546
        %2734 = vst.msk [vmem:[%s353 + $0x60] sm:$0xff] %vm2727, %v2548
        %2735 = vst.msk [vmem:[%s353 + $0x70] sm:$0xff] %vm2727, %v2550
        %2736 = vst.msk [vmem:[%s353 + $0x80] sm:$0xff] %vm2727, %v2552
        %2737 = vst.msk [vmem:[%s353 + $0x90] sm:$0xff] %vm2727, %v2554
        %2738 = vst.msk [vmem:[%s353 + $0xa0] sm:$0xff] %vm2727, %v2556
        %2739 = vst.msk [vmem:[%s353 + $0xb0] sm:$0xff] %vm2727, %v2558
        %2740 = vst.msk [vmem:[%s353 + $0xc0] sm:$0xff] %vm2727, %v2560
        %2741 = vst.msk [vmem:[%s353 + $0xd0] sm:$0xff] %vm2727, %v2562
        %2742 = vst.msk [vmem:[%s353 + $0xe0] sm:$0xff] %vm2727, %v2564
        %2743 = vst.msk [vmem:[%s353 + $0xf0] sm:$0xff] %vm2727, %v2566
        %2744 = vst.msk [vmem:[%s353 + $0x100] sm:$0xff] %vm2727, %v2568
        %2745 = vst.msk [vmem:[%s353 + $0x110] sm:$0xff] %vm2727, %v2570
        %2746 = vst.msk [vmem:[%s353 + $0x120] sm:$0xff] %vm2727, %v2572
        %2747 = vst.msk [vmem:[%s353 + $0x130] sm:$0xff] %vm2727, %v2574
        %2748 = vst.msk [vmem:[%s353 + $0x140] sm:$0xff] %vm2727, %v2576
        %2749 = vst.msk [vmem:[%s353 + $0x150] sm:$0xff] %vm2727, %v2578
        %2750 = vst.msk [vmem:[%s353 + $0x160] sm:$0xff] %vm2727, %v2580
        %2751 = vst.msk [vmem:[%s353 + $0x170] sm:$0xff] %vm2727, %v2582
        %2752 = vst.msk [vmem:[%s353 + $0x180] sm:$0xff] %vm2727, %v2584
        %2753 = vst.msk [vmem:[%s353 + $0x190] sm:$0xff] %vm2727, %v2586
        %2754 = vst.msk [vmem:[%s353 + $0x1a0] sm:$0xff] %vm2727, %v2588
        %2755 = vst.msk [vmem:[%s353 + $0x1b0] sm:$0xff] %vm2727, %v2590
        %2756 = vst.msk [vmem:[%s353 + $0x1c0] sm:$0xff] %vm2727, %v2592
        %2757 = vst.msk [vmem:[%s353 + $0x1d0] sm:$0xff] %vm2727, %v2594
        %2758 = vst.msk [vmem:[%s353 + $0x1e0] sm:$0xff] %vm2727, %v2596
        %2759 = vst.msk [vmem:[%s353 + $0x1f0] sm:$0xff] %vm2727, %v2598
        %2760 = vst.msk [vmem:[%s353 + $0x200] sm:$0xff] %vm2727, %v2600
        %2761 = vst.msk [vmem:[%s353 + $0x210] sm:$0xff] %vm2727, %v2602
        %2762 = vst.msk [vmem:[%s353 + $0x220] sm:$0xff] %vm2727, %v2604
        %2763 = vst.msk [vmem:[%s353 + $0x230] sm:$0xff] %vm2727, %v2606
        %2764 = vst.msk [vmem:[%s353 + $0x240] sm:$0xff] %vm2727, %v2608
        %2765 = vst.msk [vmem:[%s353 + $0x250] sm:$0xff] %vm2727, %v2610
        %2766 = vst.msk [vmem:[%s353 + $0x260] sm:$0xff] %vm2727, %v2612
        %2767 = vst.msk [vmem:[%s353 + $0x270] sm:$0xff] %vm2727, %v2614
        %2768 = vst.msk [vmem:[%s353 + $0x280] sm:$0xff] %vm2727, %v2616
        %2769 = vst.msk [vmem:[%s353 + $0x290] sm:$0xff] %vm2727, %v2618
        %2770 = vst.msk [vmem:[%s353 + $0x2a0] sm:$0xff] %vm2727, %v2620
        %2771 = vst.msk [vmem:[%s353 + $0x2b0] sm:$0xff] %vm2727, %v2622
        %2772 = vst.msk [vmem:[%s353 + $0x2c0] sm:$0xff] %vm2727, %v2624
        %2773 = vst.msk [vmem:[%s353 + $0x2d0] sm:$0xff] %vm2727, %v2626
        %2774 = vst.msk [vmem:[%s353 + $0x2e0] sm:$0xff] %vm2727, %v2628
        %2775 = vst.msk [vmem:[%s353 + $0x2f0] sm:$0xff] %vm2727, %v2630
        %2776 = vst.msk [vmem:[%s353 + $0x300] sm:$0xff] %vm2727, %v2632
        %2777 = vst.msk [vmem:[%s353 + $0x310] sm:$0xff] %vm2727, %v2634
        %2778 = vst.msk [vmem:[%s353 + $0x320] sm:$0xff] %vm2727, %v2636
        %2779 = vst.msk [vmem:[%s353 + $0x330] sm:$0xff] %vm2727, %v2638
        %2780 = vst.msk [vmem:[%s353 + $0x340] sm:$0xff] %vm2727, %v2640
        %2781 = vst.msk [vmem:[%s353 + $0x350] sm:$0xff] %vm2727, %v2642
        %2782 = vst.msk [vmem:[%s353 + $0x360] sm:$0xff] %vm2727, %v2644
        %2783 = vst.msk [vmem:[%s353 + $0x370] sm:$0xff] %vm2727, %v2646
        %2784 = vst.msk [vmem:[%s353 + $0x380] sm:$0xff] %vm2727, %v2648
        %2785 = vst.msk [vmem:[%s353 + $0x390] sm:$0xff] %vm2727, %v2650
        %2786 = vst.msk [vmem:[%s353 + $0x3a0] sm:$0xff] %vm2727, %v2652
        %2787 = vst.msk [vmem:[%s353 + $0x3b0] sm:$0xff] %vm2727, %v2654
        %2788 = vst.msk [vmem:[%s353 + $0x3c0] sm:$0xff] %vm2727, %v2656
        %2789 = vst.msk [vmem:[%s353 + $0x3d0] sm:$0xff] %vm2727, %v2658
        %2790 = vst.msk [vmem:[%s353 + $0x3e0] sm:$0xff] %vm2727, %v2660
        %2791 = vst.msk [vmem:[%s353 + $0x3f0] sm:$0xff] %vm2727, %v2662
        %v2792 = vpack.c.bf16 %v2408, %v2407
        %v2793 = vpack.c.bf16 %v2410, %v2409
        %v2794 = vpack.c.bf16 %v2412, %v2411
        %v2795 = vpack.c.bf16 %v2414, %v2413
        %v2796 = vpack.c.bf16 %v2416, %v2415
        %v2797 = vpack.c.bf16 %v2418, %v2417
        %v2798 = vpack.c.bf16 %v2420, %v2419
        %v2799 = vpack.c.bf16 %v2422, %v2421
        %v2800 = vpack.c.bf16 %v2424, %v2423
        %v2801 = vpack.c.bf16 %v2426, %v2425
        %v2802 = vpack.c.bf16 %v2428, %v2427
        %v2803 = vpack.c.bf16 %v2430, %v2429
        %v2804 = vpack.c.bf16 %v2432, %v2431
        %v2805 = vpack.c.bf16 %v2434, %v2433
        %v2806 = vpack.c.bf16 %v2436, %v2435
        %v2807 = vpack.c.bf16 %v2438, %v2437
        %v2808 = vpack.c.bf16 %v2440, %v2439
        %v2809 = vpack.c.bf16 %v2442, %v2441
        %v2810 = vpack.c.bf16 %v2444, %v2443
        %v2811 = vpack.c.bf16 %v2446, %v2445
        %v2812 = vpack.c.bf16 %v2448, %v2447
        %v2813 = vpack.c.bf16 %v2450, %v2449
        %v2814 = vpack.c.bf16 %v2452, %v2451
        %v2815 = vpack.c.bf16 %v2454, %v2453
        %v2816 = vpack.c.bf16 %v2456, %v2455
        %v2817 = vpack.c.bf16 %v2458, %v2457
        %v2818 = vpack.c.bf16 %v2460, %v2459
        %v2819 = vpack.c.bf16 %v2462, %v2461
        %v2820 = vpack.c.bf16 %v2464, %v2463
        %v2821 = vpack.c.bf16 %v2466, %v2465
        %v2822 = vpack.c.bf16 %v2468, %v2467
        %v2823 = vpack.c.bf16 %v2470, %v2469
        %v2824 = vld [vmem:[%s4] sm:$0xf]
        %v2825 = vld [vmem:[%s4 + $0x4] sm:$0xf]
        %v2826 = vld [vmem:[%s4 + $0x8] sm:$0xf]
        %v2827 = vld [vmem:[%s4 + $0xc] sm:$0xf]
        %v2828 = vld [vmem:[%s4 + $0x10] sm:$0xf]
        %v2829 = vld [vmem:[%s4 + $0x14] sm:$0xf]
        %v2830 = vld [vmem:[%s4 + $0x18] sm:$0xf]
        %v2831 = vld [vmem:[%s4 + $0x1c] sm:$0xf]
        %v2832 = vld [vmem:[%s4 + $0x20] sm:$0xf]
        %v2833 = vld [vmem:[%s4 + $0x24] sm:$0xf]
        %v2834 = vld [vmem:[%s4 + $0x28] sm:$0xf]
        %v2835 = vld [vmem:[%s4 + $0x2c] sm:$0xf]
        %v2836 = vld [vmem:[%s4 + $0x30] sm:$0xf]
        %v2837 = vld [vmem:[%s4 + $0x34] sm:$0xf]
        %v2838 = vld [vmem:[%s4 + $0x38] sm:$0xf]
        %v2839 = vld [vmem:[%s4 + $0x3c] sm:$0xf]
        %v2840 = vld [vmem:[%s9 + $0x3] sm:$0x1]
        %v2841 = vlaneseq
        %v2842 = vshrl.u32 %v2841, 7
        %v2843 = vsub.s32 0, %v2842
        %v2844 = vrot.slane %v2840, %v2843
        %v2861 = vunpack.c.l.b16 %v2824
        %v2862 = vunpack.c.l.b16 %v2825
        %v2863 = vunpack.c.l.b16 %v2826
        %v2864 = vunpack.c.l.b16 %v2827
        %v2865 = vunpack.c.l.b16 %v2828
        %v2866 = vunpack.c.l.b16 %v2829
        %v2867 = vunpack.c.l.b16 %v2830
        %v2868 = vunpack.c.l.b16 %v2831
        %v2869 = vunpack.c.l.b16 %v2832
        %v2870 = vunpack.c.l.b16 %v2833
        %v2871 = vunpack.c.l.b16 %v2834
        %v2872 = vunpack.c.l.b16 %v2835
        %v2873 = vunpack.c.l.b16 %v2836
        %v2874 = vunpack.c.l.b16 %v2837
        %v2875 = vunpack.c.l.b16 %v2838
        %v2876 = vunpack.c.l.b16 %v2839
        %v2877 = vpack.c.b16 %v2862, %v2861
        %v2878 = vpack.c.b16 %v2864, %v2863
        %v2879 = vpack.c.b16 %v2866, %v2865
        %v2880 = vpack.c.b16 %v2868, %v2867
        %v2881 = vpack.c.b16 %v2870, %v2869
        %v2882 = vpack.c.b16 %v2872, %v2871
        %v2883 = vpack.c.b16 %v2874, %v2873
        %v2884 = vpack.c.b16 %v2876, %v2875
        %2893 = vmatprep.subr.bf16.mxu0 0
        %2894 = vmatpush1.bf16.msra.mxu0 %v2884
        %2895 = vmatprep.subr.bf16.mxu0 0
        %2896 = vmatpush1.bf16.msra.mxu0 %v2883
        %2897 = vmatprep.subr.bf16.mxu0 0
        %2898 = vmatpush1.bf16.msra.mxu0 %v2882
        %2899 = vmatprep.subr.bf16.mxu0 0
        %2900 = vmatpush1.bf16.msra.mxu0 %v2881
        %2901 = vmatprep.subr.bf16.mxu0 0
        %2902 = vmatpush1.bf16.msra.mxu0 %v2880
        %2903 = vmatprep.subr.bf16.mxu0 0
        %2904 = vmatpush1.bf16.msra.mxu0 %v2879
        %2905 = vmatprep.subr.bf16.mxu0 0
        %2906 = vmatpush1.bf16.msra.mxu0 %v2878
        %2907 = vmatprep.subr.bf16.mxu0 0
        %2908 = vmatpush1.bf16.msra.mxu0 %v2877
        %2909 = vmatprep.subr.bf16.mxu0 0
        %2910 = vmatpush2.bf16.msra.mxu0 0
        %2911 = vmatprep.subr.bf16.mxu0 0
        %2912 = vmatpush2.bf16.msra.mxu0 0
        %2913 = vmatprep.subr.bf16.mxu0 0
        %2914 = vmatpush2.bf16.msra.mxu0 0
        %2915 = vmatprep.subr.bf16.mxu0 0
        %2916 = vmatpush2.bf16.msra.mxu0 0
        %2917 = vmatprep.subr.bf16.mxu0 0
        %2918 = vmatpush2.bf16.msra.mxu0 0
        %2919 = vmatprep.subr.bf16.mxu0 0
        %2920 = vmatpush2.bf16.msra.mxu0 0
        %2921 = vmatprep.subr.bf16.mxu0 0
        %2922 = vmatpush2.bf16.msra.mxu0 0
        %2923 = vmatprep.subr.bf16.mxu0 0
        %2924 = vmatpush2.bf16.msra.mxu0 0
        %2925 = vmatprep.mubr.bf16.mxu0 0
        %2926 = vmatmul.mubr.bf16.gmra.mxu0 %v2792
        %v2927 = vpop.f32.mrf.mxu0
        %v2928 = vadd.f32 %v2844, %v2927
        %v2929 = vpop.f32.mrf.mxu0
        %v2930 = vpop.f32.mrf.mxu0
        %v2931 = vadd.f32 %v2844, %v2930
        %v2932 = vpop.f32.mrf.mxu0
        %2933 = vmatprep.mubr.bf16.mxu0 0
        %2934 = vmatmul.mubr.bf16.gmra.mxu0 %v2793
        %v2935 = vpop.f32.mrf.mxu0
        %v2936 = vadd.f32 %v2844, %v2935
        %v2937 = vpop.f32.mrf.mxu0
        %v2938 = vpop.f32.mrf.mxu0
        %v2939 = vadd.f32 %v2844, %v2938
        %v2940 = vpop.f32.mrf.mxu0
        %2941 = vmatprep.mubr.bf16.mxu0 0
        %2942 = vmatmul.mubr.bf16.gmra.mxu0 %v2794
        %v2943 = vpop.f32.mrf.mxu0
        %v2944 = vadd.f32 %v2844, %v2943
        %v2945 = vpop.f32.mrf.mxu0
        %v2946 = vpop.f32.mrf.mxu0
        %v2947 = vadd.f32 %v2844, %v2946
        %v2948 = vpop.f32.mrf.mxu0
        %2949 = vmatprep.mubr.bf16.mxu0 0
        %2950 = vmatmul.mubr.bf16.gmra.mxu0 %v2795
        %v2951 = vpop.f32.mrf.mxu0
        %v2952 = vadd.f32 %v2844, %v2951
        %v2953 = vpop.f32.mrf.mxu0
        %v2954 = vpop.f32.mrf.mxu0
        %v2955 = vadd.f32 %v2844, %v2954
        %v2956 = vpop.f32.mrf.mxu0
        %2957 = vmatprep.mubr.bf16.mxu0 0
        %2958 = vmatmul.mubr.bf16.gmra.mxu0 %v2796
        %v2959 = vpop.f32.mrf.mxu0
        %v2960 = vadd.f32 %v2844, %v2959
        %v2961 = vpop.f32.mrf.mxu0
        %v2962 = vpop.f32.mrf.mxu0
        %v2963 = vadd.f32 %v2844, %v2962
        %v2964 = vpop.f32.mrf.mxu0
        %2965 = vmatprep.mubr.bf16.mxu0 0
        %2966 = vmatmul.mubr.bf16.gmra.mxu0 %v2797
        %v2967 = vpop.f32.mrf.mxu0
        %v2968 = vadd.f32 %v2844, %v2967
        %v2969 = vpop.f32.mrf.mxu0
        %v2970 = vpop.f32.mrf.mxu0
        %v2971 = vadd.f32 %v2844, %v2970
        %v2972 = vpop.f32.mrf.mxu0
        %2973 = vmatprep.mubr.bf16.mxu0 0
        %2974 = vmatmul.mubr.bf16.gmra.mxu0 %v2798
        %v2975 = vpop.f32.mrf.mxu0
        %v2976 = vadd.f32 %v2844, %v2975
        %v2977 = vpop.f32.mrf.mxu0
        %v2978 = vpop.f32.mrf.mxu0
        %v2979 = vadd.f32 %v2844, %v2978
        %v2980 = vpop.f32.mrf.mxu0
        %2981 = vmatprep.mubr.bf16.mxu0 0
        %2982 = vmatmul.mubr.bf16.gmra.mxu0 %v2799
        %v2983 = vpop.f32.mrf.mxu0
        %v2984 = vadd.f32 %v2844, %v2983
        %v2985 = vpop.f32.mrf.mxu0
        %v2986 = vpop.f32.mrf.mxu0
        %v2987 = vadd.f32 %v2844, %v2986
        %v2988 = vpop.f32.mrf.mxu0
        %2989 = vmatprep.mubr.bf16.mxu0 0
        %2990 = vmatmul.mubr.bf16.gmra.mxu0 %v2800
        %v2991 = vpop.f32.mrf.mxu0
        %v2992 = vadd.f32 %v2844, %v2991
        %v2993 = vpop.f32.mrf.mxu0
        %v2994 = vpop.f32.mrf.mxu0
        %v2995 = vadd.f32 %v2844, %v2994
        %v2996 = vpop.f32.mrf.mxu0
        %2997 = vmatprep.mubr.bf16.mxu0 0
        %2998 = vmatmul.mubr.bf16.gmra.mxu0 %v2801
        %v2999 = vpop.f32.mrf.mxu0
        %v3000 = vadd.f32 %v2844, %v2999
        %v3001 = vpop.f32.mrf.mxu0
        %v3002 = vpop.f32.mrf.mxu0
        %v3003 = vadd.f32 %v2844, %v3002
        %v3004 = vpop.f32.mrf.mxu0
        %3005 = vmatprep.mubr.bf16.mxu0 0
        %3006 = vmatmul.mubr.bf16.gmra.mxu0 %v2802
        %v3007 = vpop.f32.mrf.mxu0
        %v3008 = vadd.f32 %v2844, %v3007
        %v3009 = vpop.f32.mrf.mxu0
        %v3010 = vpop.f32.mrf.mxu0
        %v3011 = vadd.f32 %v2844, %v3010
        %v3012 = vpop.f32.mrf.mxu0
        %3013 = vmatprep.mubr.bf16.mxu0 0
        %3014 = vmatmul.mubr.bf16.gmra.mxu0 %v2803
        %v3015 = vpop.f32.mrf.mxu0
        %v3016 = vadd.f32 %v2844, %v3015
        %v3017 = vpop.f32.mrf.mxu0
        %v3018 = vpop.f32.mrf.mxu0
        %v3019 = vadd.f32 %v2844, %v3018
        %v3020 = vpop.f32.mrf.mxu0
        %3021 = vmatprep.mubr.bf16.mxu0 0
        %3022 = vmatmul.mubr.bf16.gmra.mxu0 %v2804
        %v3023 = vpop.f32.mrf.mxu0
        %v3024 = vadd.f32 %v2844, %v3023
        %v3025 = vpop.f32.mrf.mxu0
        %v3026 = vpop.f32.mrf.mxu0
        %v3027 = vadd.f32 %v2844, %v3026
        %v3028 = vpop.f32.mrf.mxu0
        %3029 = vmatprep.mubr.bf16.mxu0 0
        %3030 = vmatmul.mubr.bf16.gmra.mxu0 %v2805
        %v3031 = vpop.f32.mrf.mxu0
        %v3032 = vadd.f32 %v2844, %v3031
        %v3033 = vpop.f32.mrf.mxu0
        %v3034 = vpop.f32.mrf.mxu0
        %v3035 = vadd.f32 %v2844, %v3034
        %v3036 = vpop.f32.mrf.mxu0
        %3037 = vmatprep.mubr.bf16.mxu0 0
        %3038 = vmatmul.mubr.bf16.gmra.mxu0 %v2806
        %v3039 = vpop.f32.mrf.mxu0
        %v3040 = vadd.f32 %v2844, %v3039
        %v3041 = vpop.f32.mrf.mxu0
        %v3042 = vpop.f32.mrf.mxu0
        %v3043 = vadd.f32 %v2844, %v3042
        %v3044 = vpop.f32.mrf.mxu0
        %3045 = vmatprep.mubr.bf16.mxu0 0
        %3046 = vmatmul.mubr.bf16.gmra.mxu0 %v2807
        %v3047 = vpop.f32.mrf.mxu0
        %v3048 = vadd.f32 %v2844, %v3047
        %v3049 = vpop.f32.mrf.mxu0
        %v3050 = vpop.f32.mrf.mxu0
        %v3051 = vadd.f32 %v2844, %v3050
        %v3052 = vpop.f32.mrf.mxu0
        %3053 = vmatprep.mubr.bf16.mxu0 0
        %3054 = vmatmul.mubr.bf16.gmra.mxu0 %v2808
        %v3055 = vpop.f32.mrf.mxu0
        %v3056 = vadd.f32 %v2844, %v3055
        %v3057 = vpop.f32.mrf.mxu0
        %v3058 = vpop.f32.mrf.mxu0
        %v3059 = vadd.f32 %v2844, %v3058
        %v3060 = vpop.f32.mrf.mxu0
        %3061 = vmatprep.mubr.bf16.mxu0 0
        %3062 = vmatmul.mubr.bf16.gmra.mxu0 %v2809
        %v3063 = vpop.f32.mrf.mxu0
        %v3064 = vadd.f32 %v2844, %v3063
        %v3065 = vpop.f32.mrf.mxu0
        %v3066 = vpop.f32.mrf.mxu0
        %v3067 = vadd.f32 %v2844, %v3066
        %v3068 = vpop.f32.mrf.mxu0
        %3069 = vmatprep.mubr.bf16.mxu0 0
        %3070 = vmatmul.mubr.bf16.gmra.mxu0 %v2810
        %v3071 = vpop.f32.mrf.mxu0
        %v3072 = vadd.f32 %v2844, %v3071
        %v3073 = vpop.f32.mrf.mxu0
        %v3074 = vpop.f32.mrf.mxu0
        %v3075 = vadd.f32 %v2844, %v3074
        %v3076 = vpop.f32.mrf.mxu0
        %3077 = vmatprep.mubr.bf16.mxu0 0
        %3078 = vmatmul.mubr.bf16.gmra.mxu0 %v2811
        %v3079 = vpop.f32.mrf.mxu0
        %v3080 = vadd.f32 %v2844, %v3079
        %v3081 = vpop.f32.mrf.mxu0
        %v3082 = vpop.f32.mrf.mxu0
        %v3083 = vadd.f32 %v2844, %v3082
        %v3084 = vpop.f32.mrf.mxu0
        %3085 = vmatprep.mubr.bf16.mxu0 0
        %3086 = vmatmul.mubr.bf16.gmra.mxu0 %v2812
        %v3087 = vpop.f32.mrf.mxu0
        %v3088 = vadd.f32 %v2844, %v3087
        %v3089 = vpop.f32.mrf.mxu0
        %v3090 = vpop.f32.mrf.mxu0
        %v3091 = vadd.f32 %v2844, %v3090
        %v3092 = vpop.f32.mrf.mxu0
        %3093 = vmatprep.mubr.bf16.mxu0 0
        %3094 = vmatmul.mubr.bf16.gmra.mxu0 %v2813
        %v3095 = vpop.f32.mrf.mxu0
        %v3096 = vadd.f32 %v2844, %v3095
        %v3097 = vpop.f32.mrf.mxu0
        %v3098 = vpop.f32.mrf.mxu0
        %v3099 = vadd.f32 %v2844, %v3098
        %v3100 = vpop.f32.mrf.mxu0
        %3101 = vmatprep.mubr.bf16.mxu0 0
        %3102 = vmatmul.mubr.bf16.gmra.mxu0 %v2814
        %v3103 = vpop.f32.mrf.mxu0
        %v3104 = vadd.f32 %v2844, %v3103
        %v3105 = vpop.f32.mrf.mxu0
        %v3106 = vpop.f32.mrf.mxu0
        %v3107 = vadd.f32 %v2844, %v3106
        %v3108 = vpop.f32.mrf.mxu0
        %3109 = vmatprep.mubr.bf16.mxu0 0
        %3110 = vmatmul.mubr.bf16.gmra.mxu0 %v2815
        %v3111 = vpop.f32.mrf.mxu0
        %v3112 = vadd.f32 %v2844, %v3111
        %v3113 = vpop.f32.mrf.mxu0
        %v3114 = vpop.f32.mrf.mxu0
        %v3115 = vadd.f32 %v2844, %v3114
        %v3116 = vpop.f32.mrf.mxu0
        %3117 = vmatprep.mubr.bf16.mxu0 0
        %3118 = vmatmul.mubr.bf16.gmra.mxu0 %v2816
        %v3119 = vpop.f32.mrf.mxu0
        %v3120 = vadd.f32 %v2844, %v3119
        %v3121 = vpop.f32.mrf.mxu0
        %v3122 = vpop.f32.mrf.mxu0
        %v3123 = vadd.f32 %v2844, %v3122
        %v3124 = vpop.f32.mrf.mxu0
        %3125 = vmatprep.mubr.bf16.mxu0 0
        %3126 = vmatmul.mubr.bf16.gmra.mxu0 %v2817
        %v3127 = vpop.f32.mrf.mxu0
        %v3128 = vadd.f32 %v2844, %v3127
        %v3129 = vpop.f32.mrf.mxu0
        %v3130 = vpop.f32.mrf.mxu0
        %v3131 = vadd.f32 %v2844, %v3130
        %v3132 = vpop.f32.mrf.mxu0
        %3133 = vmatprep.mubr.bf16.mxu0 0
        %3134 = vmatmul.mubr.bf16.gmra.mxu0 %v2818
        %v3135 = vpop.f32.mrf.mxu0
        %v3136 = vadd.f32 %v2844, %v3135
        %v3137 = vpop.f32.mrf.mxu0
        %v3138 = vpop.f32.mrf.mxu0
        %v3139 = vadd.f32 %v2844, %v3138
        %v3140 = vpop.f32.mrf.mxu0
        %3141 = vmatprep.mubr.bf16.mxu0 0
        %3142 = vmatmul.mubr.bf16.gmra.mxu0 %v2819
        %v3143 = vpop.f32.mrf.mxu0
        %v3144 = vadd.f32 %v2844, %v3143
        %v3145 = vpop.f32.mrf.mxu0
        %v3146 = vpop.f32.mrf.mxu0
        %v3147 = vadd.f32 %v2844, %v3146
        %v3148 = vpop.f32.mrf.mxu0
        %3149 = vmatprep.mubr.bf16.mxu0 0
        %3150 = vmatmul.mubr.bf16.gmra.mxu0 %v2820
        %v3151 = vpop.f32.mrf.mxu0
        %v3152 = vadd.f32 %v2844, %v3151
        %v3153 = vpop.f32.mrf.mxu0
        %v3154 = vpop.f32.mrf.mxu0
        %v3155 = vadd.f32 %v2844, %v3154
        %v3156 = vpop.f32.mrf.mxu0
        %3157 = vmatprep.mubr.bf16.mxu0 0
        %3158 = vmatmul.mubr.bf16.gmra.mxu0 %v2821
        %v3159 = vpop.f32.mrf.mxu0
        %v3160 = vadd.f32 %v2844, %v3159
        %v3161 = vpop.f32.mrf.mxu0
        %v3162 = vpop.f32.mrf.mxu0
        %v3163 = vadd.f32 %v2844, %v3162
        %v3164 = vpop.f32.mrf.mxu0
        %3165 = vmatprep.mubr.bf16.mxu0 0
        %3166 = vmatmul.mubr.bf16.gmra.mxu0 %v2822
        %v3167 = vpop.f32.mrf.mxu0
        %v3168 = vadd.f32 %v2844, %v3167
        %v3169 = vpop.f32.mrf.mxu0
        %v3170 = vpop.f32.mrf.mxu0
        %v3171 = vadd.f32 %v2844, %v3170
        %v3172 = vpop.f32.mrf.mxu0
        %3173 = vmatprep.mubr.bf16.mxu0 0
        %3174 = vmatmul.mubr.bf16.gmra.mxu0 %v2823
        %v3175 = vpop.f32.mrf.mxu0
        %v3176 = vadd.f32 %v2844, %v3175
        %v3177 = vpop.f32.mrf.mxu0
        %v3178 = vpop.f32.mrf.mxu0
        %v3179 = vadd.f32 %v2844, %v3178
        %v3180 = vpop.f32.mrf.mxu0
        %3181 = vdwg.mxu0
        %vm3182 = vcmask 261120
        %3183 = vst.msk [vmem:[%s353 + $0x8] sm:$0xff] %vm3182, %v2928
        %3184 = vst.msk [vmem:[%s353 + $0x18] sm:$0xff] %vm3182, %v2931
        %3185 = vst.msk [vmem:[%s353 + $0x28] sm:$0xff] %vm3182, %v2936
        %3186 = vst.msk [vmem:[%s353 + $0x38] sm:$0xff] %vm3182, %v2939
        %3187 = vst.msk [vmem:[%s353 + $0x48] sm:$0xff] %vm3182, %v2944
        %3188 = vst.msk [vmem:[%s353 + $0x58] sm:$0xff] %vm3182, %v2947
        %3189 = vst.msk [vmem:[%s353 + $0x68] sm:$0xff] %vm3182, %v2952
        %3190 = vst.msk [vmem:[%s353 + $0x78] sm:$0xff] %vm3182, %v2955
        %3191 = vst.msk [vmem:[%s353 + $0x88] sm:$0xff] %vm3182, %v2960
        %3192 = vst.msk [vmem:[%s353 + $0x98] sm:$0xff] %vm3182, %v2963
        %3193 = vst.msk [vmem:[%s353 + $0xa8] sm:$0xff] %vm3182, %v2968
        %3194 = vst.msk [vmem:[%s353 + $0xb8] sm:$0xff] %vm3182, %v2971
        %3195 = vst.msk [vmem:[%s353 + $0xc8] sm:$0xff] %vm3182, %v2976
        %3196 = vst.msk [vmem:[%s353 + $0xd8] sm:$0xff] %vm3182, %v2979
        %3197 = vst.msk [vmem:[%s353 + $0xe8] sm:$0xff] %vm3182, %v2984
        %3198 = vst.msk [vmem:[%s353 + $0xf8] sm:$0xff] %vm3182, %v2987
        %3199 = vst.msk [vmem:[%s353 + $0x108] sm:$0xff] %vm3182, %v2992
        %3200 = vst.msk [vmem:[%s353 + $0x118] sm:$0xff] %vm3182, %v2995
        %3201 = vst.msk [vmem:[%s353 + $0x128] sm:$0xff] %vm3182, %v3000
        %3202 = vst.msk [vmem:[%s353 + $0x138] sm:$0xff] %vm3182, %v3003
        %3203 = vst.msk [vmem:[%s353 + $0x148] sm:$0xff] %vm3182, %v3008
        %3204 = vst.msk [vmem:[%s353 + $0x158] sm:$0xff] %vm3182, %v3011
        %3205 = vst.msk [vmem:[%s353 + $0x168] sm:$0xff] %vm3182, %v3016
        %3206 = vst.msk [vmem:[%s353 + $0x178] sm:$0xff] %vm3182, %v3019
        %3207 = vst.msk [vmem:[%s353 + $0x188] sm:$0xff] %vm3182, %v3024
        %3208 = vst.msk [vmem:[%s353 + $0x198] sm:$0xff] %vm3182, %v3027
        %3209 = vst.msk [vmem:[%s353 + $0x1a8] sm:$0xff] %vm3182, %v3032
        %3210 = vst.msk [vmem:[%s353 + $0x1b8] sm:$0xff] %vm3182, %v3035
        %3211 = vst.msk [vmem:[%s353 + $0x1c8] sm:$0xff] %vm3182, %v3040
        %3212 = vst.msk [vmem:[%s353 + $0x1d8] sm:$0xff] %vm3182, %v3043
        %3213 = vst.msk [vmem:[%s353 + $0x1e8] sm:$0xff] %vm3182, %v3048
        %3214 = vst.msk [vmem:[%s353 + $0x1f8] sm:$0xff] %vm3182, %v3051
        %3215 = vst.msk [vmem:[%s353 + $0x208] sm:$0xff] %vm3182, %v3056
        %3216 = vst.msk [vmem:[%s353 + $0x218] sm:$0xff] %vm3182, %v3059
        %3217 = vst.msk [vmem:[%s353 + $0x228] sm:$0xff] %vm3182, %v3064
        %3218 = vst.msk [vmem:[%s353 + $0x238] sm:$0xff] %vm3182, %v3067
        %3219 = vst.msk [vmem:[%s353 + $0x248] sm:$0xff] %vm3182, %v3072
        %3220 = vst.msk [vmem:[%s353 + $0x258] sm:$0xff] %vm3182, %v3075
        %3221 = vst.msk [vmem:[%s353 + $0x268] sm:$0xff] %vm3182, %v3080
        %3222 = vst.msk [vmem:[%s353 + $0x278] sm:$0xff] %vm3182, %v3083
        %3223 = vst.msk [vmem:[%s353 + $0x288] sm:$0xff] %vm3182, %v3088
        %3224 = vst.msk [vmem:[%s353 + $0x298] sm:$0xff] %vm3182, %v3091
        %3225 = vst.msk [vmem:[%s353 + $0x2a8] sm:$0xff] %vm3182, %v3096
        %3226 = vst.msk [vmem:[%s353 + $0x2b8] sm:$0xff] %vm3182, %v3099
        %3227 = vst.msk [vmem:[%s353 + $0x2c8] sm:$0xff] %vm3182, %v3104
        %3228 = vst.msk [vmem:[%s353 + $0x2d8] sm:$0xff] %vm3182, %v3107
        %3229 = vst.msk [vmem:[%s353 + $0x2e8] sm:$0xff] %vm3182, %v3112
        %3230 = vst.msk [vmem:[%s353 + $0x2f8] sm:$0xff] %vm3182, %v3115
        %3231 = vst.msk [vmem:[%s353 + $0x308] sm:$0xff] %vm3182, %v3120
        %3232 = vst.msk [vmem:[%s353 + $0x318] sm:$0xff] %vm3182, %v3123
        %3233 = vst.msk [vmem:[%s353 + $0x328] sm:$0xff] %vm3182, %v3128
        %3234 = vst.msk [vmem:[%s353 + $0x338] sm:$0xff] %vm3182, %v3131
        %3235 = vst.msk [vmem:[%s353 + $0x348] sm:$0xff] %vm3182, %v3136
        %3236 = vst.msk [vmem:[%s353 + $0x358] sm:$0xff] %vm3182, %v3139
        %3237 = vst.msk [vmem:[%s353 + $0x368] sm:$0xff] %vm3182, %v3144
        %3238 = vst.msk [vmem:[%s353 + $0x378] sm:$0xff] %vm3182, %v3147
        %3239 = vst.msk [vmem:[%s353 + $0x388] sm:$0xff] %vm3182, %v3152
        %3240 = vst.msk [vmem:[%s353 + $0x398] sm:$0xff] %vm3182, %v3155
        %3241 = vst.msk [vmem:[%s353 + $0x3a8] sm:$0xff] %vm3182, %v3160
        %3242 = vst.msk [vmem:[%s353 + $0x3b8] sm:$0xff] %vm3182, %v3163
        %3243 = vst.msk [vmem:[%s353 + $0x3c8] sm:$0xff] %vm3182, %v3168
        %3244 = vst.msk [vmem:[%s353 + $0x3d8] sm:$0xff] %vm3182, %v3171
        %3245 = vst.msk [vmem:[%s353 + $0x3e8] sm:$0xff] %vm3182, %v3176
        %3246 = vst.msk [vmem:[%s353 + $0x3f8] sm:$0xff] %vm3182, %v3179
        %v3247 = vpack.c.bf16 %v2931, %v2928
        %v3248 = vpack.c.bf16 %v2939, %v2936
        %v3249 = vpack.c.bf16 %v2947, %v2944
        %v3250 = vpack.c.bf16 %v2955, %v2952
        %v3251 = vpack.c.bf16 %v2963, %v2960
        %v3252 = vpack.c.bf16 %v2971, %v2968
        %v3253 = vpack.c.bf16 %v2979, %v2976
        %v3254 = vpack.c.bf16 %v2987, %v2984
        %v3255 = vpack.c.bf16 %v2995, %v2992
        %v3256 = vpack.c.bf16 %v3003, %v3000
        %v3257 = vpack.c.bf16 %v3011, %v3008
        %v3258 = vpack.c.bf16 %v3019, %v3016
        %v3259 = vpack.c.bf16 %v3027, %v3024
        %v3260 = vpack.c.bf16 %v3035, %v3032
        %v3261 = vpack.c.bf16 %v3043, %v3040
        %v3262 = vpack.c.bf16 %v3051, %v3048
        %v3263 = vpack.c.bf16 %v3059, %v3056
        %v3264 = vpack.c.bf16 %v3067, %v3064
        %v3265 = vpack.c.bf16 %v3075, %v3072
        %v3266 = vpack.c.bf16 %v3083, %v3080
        %v3267 = vpack.c.bf16 %v3091, %v3088
        %v3268 = vpack.c.bf16 %v3099, %v3096
        %v3269 = vpack.c.bf16 %v3107, %v3104
        %v3270 = vpack.c.bf16 %v3115, %v3112
        %v3271 = vpack.c.bf16 %v3123, %v3120
        %v3272 = vpack.c.bf16 %v3131, %v3128
        %v3273 = vpack.c.bf16 %v3139, %v3136
        %v3274 = vpack.c.bf16 %v3147, %v3144
        %v3275 = vpack.c.bf16 %v3155, %v3152
        %v3276 = vpack.c.bf16 %v3163, %v3160
        %v3277 = vpack.c.bf16 %v3171, %v3168
        %v3278 = vpack.c.bf16 %v3179, %v3176
        %v3279 = vld [vmem:[%s5] sm:$0xf]
        %v3280 = vld [vmem:[%s5 + $0x4] sm:$0xf]
        %v3281 = vld [vmem:[%s5 + $0x8] sm:$0xf]
        %v3282 = vld [vmem:[%s5 + $0xc] sm:$0xf]
        %v3283 = vld [vmem:[%s5 + $0x10] sm:$0xf]
        %v3284 = vld [vmem:[%s5 + $0x14] sm:$0xf]
        %v3285 = vld [vmem:[%s5 + $0x18] sm:$0xf]
        %v3286 = vld [vmem:[%s5 + $0x1c] sm:$0xf]
        %v3287 = vld [vmem:[%s5 + $0x20] sm:$0xf]
        %v3288 = vld [vmem:[%s5 + $0x24] sm:$0xf]
        %v3289 = vld [vmem:[%s5 + $0x28] sm:$0xf]
        %v3290 = vld [vmem:[%s5 + $0x2c] sm:$0xf]
        %v3291 = vld [vmem:[%s5 + $0x30] sm:$0xf]
        %v3292 = vld [vmem:[%s5 + $0x34] sm:$0xf]
        %v3293 = vld [vmem:[%s5 + $0x38] sm:$0xf]
        %v3294 = vld [vmem:[%s5 + $0x3c] sm:$0xf]
        %v3295 = vld [vmem:[%s9 + $0x4] sm:$0x1]
        %v3296 = vlaneseq
        %v3297 = vshrl.u32 %v3296, 7
        %v3298 = vsub.s32 0, %v3297
        %v3299 = vrot.slane %v3295, %v3298
        %v3316 = vunpack.c.l.b16 %v3279
        %v3317 = vunpack.c.l.b16 %v3280
        %v3318 = vunpack.c.l.b16 %v3281
        %v3319 = vunpack.c.l.b16 %v3282
        %v3320 = vunpack.c.l.b16 %v3283
        %v3321 = vunpack.c.l.b16 %v3284
        %v3322 = vunpack.c.l.b16 %v3285
        %v3323 = vunpack.c.l.b16 %v3286
        %v3324 = vunpack.c.l.b16 %v3287
        %v3325 = vunpack.c.l.b16 %v3288
        %v3326 = vunpack.c.l.b16 %v3289
        %v3327 = vunpack.c.l.b16 %v3290
        %v3328 = vunpack.c.l.b16 %v3291
        %v3329 = vunpack.c.l.b16 %v3292
        %v3330 = vunpack.c.l.b16 %v3293
        %v3331 = vunpack.c.l.b16 %v3294
        %v3332 = vpack.c.b16 %v3317, %v3316
        %v3333 = vpack.c.b16 %v3319, %v3318
        %v3334 = vpack.c.b16 %v3321, %v3320
        %v3335 = vpack.c.b16 %v3323, %v3322
        %v3336 = vpack.c.b16 %v3325, %v3324
        %v3337 = vpack.c.b16 %v3327, %v3326
        %v3338 = vpack.c.b16 %v3329, %v3328
        %v3339 = vpack.c.b16 %v3331, %v3330
        %3348 = vmatprep.subr.bf16.mxu0 0
        %3349 = vmatpush1.bf16.msra.mxu0 %v3339
        %3350 = vmatprep.subr.bf16.mxu0 0
        %3351 = vmatpush1.bf16.msra.mxu0 %v3338
        %3352 = vmatprep.subr.bf16.mxu0 0
        %3353 = vmatpush1.bf16.msra.mxu0 %v3337
        %3354 = vmatprep.subr.bf16.mxu0 0
        %3355 = vmatpush1.bf16.msra.mxu0 %v3336
        %3356 = vmatprep.subr.bf16.mxu0 0
        %3357 = vmatpush1.bf16.msra.mxu0 %v3335
        %3358 = vmatprep.subr.bf16.mxu0 0
        %3359 = vmatpush1.bf16.msra.mxu0 %v3334
        %3360 = vmatprep.subr.bf16.mxu0 0
        %3361 = vmatpush1.bf16.msra.mxu0 %v3333
        %3362 = vmatprep.subr.bf16.mxu0 0
        %3363 = vmatpush1.bf16.msra.mxu0 %v3332
        %3364 = vmatprep.subr.bf16.mxu0 0
        %3365 = vmatpush2.bf16.msra.mxu0 0
        %3366 = vmatprep.subr.bf16.mxu0 0
        %3367 = vmatpush2.bf16.msra.mxu0 0
        %3368 = vmatprep.subr.bf16.mxu0 0
        %3369 = vmatpush2.bf16.msra.mxu0 0
        %3370 = vmatprep.subr.bf16.mxu0 0
        %3371 = vmatpush2.bf16.msra.mxu0 0
        %3372 = vmatprep.subr.bf16.mxu0 0
        %3373 = vmatpush2.bf16.msra.mxu0 0
        %3374 = vmatprep.subr.bf16.mxu0 0
        %3375 = vmatpush2.bf16.msra.mxu0 0
        %3376 = vmatprep.subr.bf16.mxu0 0
        %3377 = vmatpush2.bf16.msra.mxu0 0
        %3378 = vmatprep.subr.bf16.mxu0 0
        %3379 = vmatpush2.bf16.msra.mxu0 0
        %3380 = vmatprep.mubr.bf16.mxu0 0
        %3381 = vmatmul.mubr.bf16.gmra.mxu0 %v3247
        %v3382 = vpop.f32.mrf.mxu0
        %v3383 = vadd.f32 %v3299, %v3382
        %v3384 = vpop.f32.mrf.mxu0
        %v3385 = vpop.f32.mrf.mxu0
        %v3386 = vadd.f32 %v3299, %v3385
        %v3387 = vpop.f32.mrf.mxu0
        %3388 = vmatprep.mubr.bf16.mxu0 0
        %3389 = vmatmul.mubr.bf16.gmra.mxu0 %v3248
        %v3390 = vpop.f32.mrf.mxu0
        %v3391 = vadd.f32 %v3299, %v3390
        %v3392 = vpop.f32.mrf.mxu0
        %v3393 = vpop.f32.mrf.mxu0
        %v3394 = vadd.f32 %v3299, %v3393
        %v3395 = vpop.f32.mrf.mxu0
        %3396 = vmatprep.mubr.bf16.mxu0 0
        %3397 = vmatmul.mubr.bf16.gmra.mxu0 %v3249
        %v3398 = vpop.f32.mrf.mxu0
        %v3399 = vadd.f32 %v3299, %v3398
        %v3400 = vpop.f32.mrf.mxu0
        %v3401 = vpop.f32.mrf.mxu0
        %v3402 = vadd.f32 %v3299, %v3401
        %v3403 = vpop.f32.mrf.mxu0
        %3404 = vmatprep.mubr.bf16.mxu0 0
        %3405 = vmatmul.mubr.bf16.gmra.mxu0 %v3250
        %v3406 = vpop.f32.mrf.mxu0
        %v3407 = vadd.f32 %v3299, %v3406
        %v3408 = vpop.f32.mrf.mxu0
        %v3409 = vpop.f32.mrf.mxu0
        %v3410 = vadd.f32 %v3299, %v3409
        %v3411 = vpop.f32.mrf.mxu0
        %3412 = vmatprep.mubr.bf16.mxu0 0
        %3413 = vmatmul.mubr.bf16.gmra.mxu0 %v3251
        %v3414 = vpop.f32.mrf.mxu0
        %v3415 = vadd.f32 %v3299, %v3414
        %v3416 = vpop.f32.mrf.mxu0
        %v3417 = vpop.f32.mrf.mxu0
        %v3418 = vadd.f32 %v3299, %v3417
        %v3419 = vpop.f32.mrf.mxu0
        %3420 = vmatprep.mubr.bf16.mxu0 0
        %3421 = vmatmul.mubr.bf16.gmra.mxu0 %v3252
        %v3422 = vpop.f32.mrf.mxu0
        %v3423 = vadd.f32 %v3299, %v3422
        %v3424 = vpop.f32.mrf.mxu0
        %v3425 = vpop.f32.mrf.mxu0
        %v3426 = vadd.f32 %v3299, %v3425
        %v3427 = vpop.f32.mrf.mxu0
        %3428 = vmatprep.mubr.bf16.mxu0 0
        %3429 = vmatmul.mubr.bf16.gmra.mxu0 %v3253
        %v3430 = vpop.f32.mrf.mxu0
        %v3431 = vadd.f32 %v3299, %v3430
        %v3432 = vpop.f32.mrf.mxu0
        %v3433 = vpop.f32.mrf.mxu0
        %v3434 = vadd.f32 %v3299, %v3433
        %v3435 = vpop.f32.mrf.mxu0
        %3436 = vmatprep.mubr.bf16.mxu0 0
        %3437 = vmatmul.mubr.bf16.gmra.mxu0 %v3254
        %v3438 = vpop.f32.mrf.mxu0
        %v3439 = vadd.f32 %v3299, %v3438
        %v3440 = vpop.f32.mrf.mxu0
        %v3441 = vpop.f32.mrf.mxu0
        %v3442 = vadd.f32 %v3299, %v3441
        %v3443 = vpop.f32.mrf.mxu0
        %3444 = vmatprep.mubr.bf16.mxu0 0
        %3445 = vmatmul.mubr.bf16.gmra.mxu0 %v3255
        %v3446 = vpop.f32.mrf.mxu0
        %v3447 = vadd.f32 %v3299, %v3446
        %v3448 = vpop.f32.mrf.mxu0
        %v3449 = vpop.f32.mrf.mxu0
        %v3450 = vadd.f32 %v3299, %v3449
        %v3451 = vpop.f32.mrf.mxu0
        %3452 = vmatprep.mubr.bf16.mxu0 0
        %3453 = vmatmul.mubr.bf16.gmra.mxu0 %v3256
        %v3454 = vpop.f32.mrf.mxu0
        %v3455 = vadd.f32 %v3299, %v3454
        %v3456 = vpop.f32.mrf.mxu0
        %v3457 = vpop.f32.mrf.mxu0
        %v3458 = vadd.f32 %v3299, %v3457
        %v3459 = vpop.f32.mrf.mxu0
        %3460 = vmatprep.mubr.bf16.mxu0 0
        %3461 = vmatmul.mubr.bf16.gmra.mxu0 %v3257
        %v3462 = vpop.f32.mrf.mxu0
        %v3463 = vadd.f32 %v3299, %v3462
        %v3464 = vpop.f32.mrf.mxu0
        %v3465 = vpop.f32.mrf.mxu0
        %v3466 = vadd.f32 %v3299, %v3465
        %v3467 = vpop.f32.mrf.mxu0
        %3468 = vmatprep.mubr.bf16.mxu0 0
        %3469 = vmatmul.mubr.bf16.gmra.mxu0 %v3258
        %v3470 = vpop.f32.mrf.mxu0
        %v3471 = vadd.f32 %v3299, %v3470
        %v3472 = vpop.f32.mrf.mxu0
        %v3473 = vpop.f32.mrf.mxu0
        %v3474 = vadd.f32 %v3299, %v3473
        %v3475 = vpop.f32.mrf.mxu0
        %3476 = vmatprep.mubr.bf16.mxu0 0
        %3477 = vmatmul.mubr.bf16.gmra.mxu0 %v3259
        %v3478 = vpop.f32.mrf.mxu0
        %v3479 = vadd.f32 %v3299, %v3478
        %v3480 = vpop.f32.mrf.mxu0
        %v3481 = vpop.f32.mrf.mxu0
        %v3482 = vadd.f32 %v3299, %v3481
        %v3483 = vpop.f32.mrf.mxu0
        %3484 = vmatprep.mubr.bf16.mxu0 0
        %3485 = vmatmul.mubr.bf16.gmra.mxu0 %v3260
        %v3486 = vpop.f32.mrf.mxu0
        %v3487 = vadd.f32 %v3299, %v3486
        %v3488 = vpop.f32.mrf.mxu0
        %v3489 = vpop.f32.mrf.mxu0
        %v3490 = vadd.f32 %v3299, %v3489
        %v3491 = vpop.f32.mrf.mxu0
        %3492 = vmatprep.mubr.bf16.mxu0 0
        %3493 = vmatmul.mubr.bf16.gmra.mxu0 %v3261
        %v3494 = vpop.f32.mrf.mxu0
        %v3495 = vadd.f32 %v3299, %v3494
        %v3496 = vpop.f32.mrf.mxu0
        %v3497 = vpop.f32.mrf.mxu0
        %v3498 = vadd.f32 %v3299, %v3497
        %v3499 = vpop.f32.mrf.mxu0
        %3500 = vmatprep.mubr.bf16.mxu0 0
        %3501 = vmatmul.mubr.bf16.gmra.mxu0 %v3262
        %v3502 = vpop.f32.mrf.mxu0
        %v3503 = vadd.f32 %v3299, %v3502
        %v3504 = vpop.f32.mrf.mxu0
        %v3505 = vpop.f32.mrf.mxu0
        %v3506 = vadd.f32 %v3299, %v3505
        %v3507 = vpop.f32.mrf.mxu0
        %3508 = vmatprep.mubr.bf16.mxu0 0
        %3509 = vmatmul.mubr.bf16.gmra.mxu0 %v3263
        %v3510 = vpop.f32.mrf.mxu0
        %v3511 = vadd.f32 %v3299, %v3510
        %v3512 = vpop.f32.mrf.mxu0
        %v3513 = vpop.f32.mrf.mxu0
        %v3514 = vadd.f32 %v3299, %v3513
        %v3515 = vpop.f32.mrf.mxu0
        %3516 = vmatprep.mubr.bf16.mxu0 0
        %3517 = vmatmul.mubr.bf16.gmra.mxu0 %v3264
        %v3518 = vpop.f32.mrf.mxu0
        %v3519 = vadd.f32 %v3299, %v3518
        %v3520 = vpop.f32.mrf.mxu0
        %v3521 = vpop.f32.mrf.mxu0
        %v3522 = vadd.f32 %v3299, %v3521
        %v3523 = vpop.f32.mrf.mxu0
        %3524 = vmatprep.mubr.bf16.mxu0 0
        %3525 = vmatmul.mubr.bf16.gmra.mxu0 %v3265
        %v3526 = vpop.f32.mrf.mxu0
        %v3527 = vadd.f32 %v3299, %v3526
        %v3528 = vpop.f32.mrf.mxu0
        %v3529 = vpop.f32.mrf.mxu0
        %v3530 = vadd.f32 %v3299, %v3529
        %v3531 = vpop.f32.mrf.mxu0
        %3532 = vmatprep.mubr.bf16.mxu0 0
        %3533 = vmatmul.mubr.bf16.gmra.mxu0 %v3266
        %v3534 = vpop.f32.mrf.mxu0
        %v3535 = vadd.f32 %v3299, %v3534
        %v3536 = vpop.f32.mrf.mxu0
        %v3537 = vpop.f32.mrf.mxu0
        %v3538 = vadd.f32 %v3299, %v3537
        %v3539 = vpop.f32.mrf.mxu0
        %3540 = vmatprep.mubr.bf16.mxu0 0
        %3541 = vmatmul.mubr.bf16.gmra.mxu0 %v3267
        %v3542 = vpop.f32.mrf.mxu0
        %v3543 = vadd.f32 %v3299, %v3542
        %v3544 = vpop.f32.mrf.mxu0
        %v3545 = vpop.f32.mrf.mxu0
        %v3546 = vadd.f32 %v3299, %v3545
        %v3547 = vpop.f32.mrf.mxu0
        %3548 = vmatprep.mubr.bf16.mxu0 0
        %3549 = vmatmul.mubr.bf16.gmra.mxu0 %v3268
        %v3550 = vpop.f32.mrf.mxu0
        %v3551 = vadd.f32 %v3299, %v3550
        %v3552 = vpop.f32.mrf.mxu0
        %v3553 = vpop.f32.mrf.mxu0
        %v3554 = vadd.f32 %v3299, %v3553
        %v3555 = vpop.f32.mrf.mxu0
        %3556 = vmatprep.mubr.bf16.mxu0 0
        %3557 = vmatmul.mubr.bf16.gmra.mxu0 %v3269
        %v3558 = vpop.f32.mrf.mxu0
        %v3559 = vadd.f32 %v3299, %v3558
        %v3560 = vpop.f32.mrf.mxu0
        %v3561 = vpop.f32.mrf.mxu0
        %v3562 = vadd.f32 %v3299, %v3561
        %v3563 = vpop.f32.mrf.mxu0
        %3564 = vmatprep.mubr.bf16.mxu0 0
        %3565 = vmatmul.mubr.bf16.gmra.mxu0 %v3270
        %v3566 = vpop.f32.mrf.mxu0
        %v3567 = vadd.f32 %v3299, %v3566
        %v3568 = vpop.f32.mrf.mxu0
        %v3569 = vpop.f32.mrf.mxu0
        %v3570 = vadd.f32 %v3299, %v3569
        %v3571 = vpop.f32.mrf.mxu0
        %3572 = vmatprep.mubr.bf16.mxu0 0
        %3573 = vmatmul.mubr.bf16.gmra.mxu0 %v3271
        %v3574 = vpop.f32.mrf.mxu0
        %v3575 = vadd.f32 %v3299, %v3574
        %v3576 = vpop.f32.mrf.mxu0
        %v3577 = vpop.f32.mrf.mxu0
        %v3578 = vadd.f32 %v3299, %v3577
        %v3579 = vpop.f32.mrf.mxu0
        %3580 = vmatprep.mubr.bf16.mxu0 0
        %3581 = vmatmul.mubr.bf16.gmra.mxu0 %v3272
        %v3582 = vpop.f32.mrf.mxu0
        %v3583 = vadd.f32 %v3299, %v3582
        %v3584 = vpop.f32.mrf.mxu0
        %v3585 = vpop.f32.mrf.mxu0
        %v3586 = vadd.f32 %v3299, %v3585
        %v3587 = vpop.f32.mrf.mxu0
        %3588 = vmatprep.mubr.bf16.mxu0 0
        %3589 = vmatmul.mubr.bf16.gmra.mxu0 %v3273
        %v3590 = vpop.f32.mrf.mxu0
        %v3591 = vadd.f32 %v3299, %v3590
        %v3592 = vpop.f32.mrf.mxu0
        %v3593 = vpop.f32.mrf.mxu0
        %v3594 = vadd.f32 %v3299, %v3593
        %v3595 = vpop.f32.mrf.mxu0
        %3596 = vmatprep.mubr.bf16.mxu0 0
        %3597 = vmatmul.mubr.bf16.gmra.mxu0 %v3274
        %v3598 = vpop.f32.mrf.mxu0
        %v3599 = vadd.f32 %v3299, %v3598
        %v3600 = vpop.f32.mrf.mxu0
        %v3601 = vpop.f32.mrf.mxu0
        %v3602 = vadd.f32 %v3299, %v3601
        %v3603 = vpop.f32.mrf.mxu0
        %3604 = vmatprep.mubr.bf16.mxu0 0
        %3605 = vmatmul.mubr.bf16.gmra.mxu0 %v3275
        %v3606 = vpop.f32.mrf.mxu0
        %v3607 = vadd.f32 %v3299, %v3606
        %v3608 = vpop.f32.mrf.mxu0
        %v3609 = vpop.f32.mrf.mxu0
        %v3610 = vadd.f32 %v3299, %v3609
        %v3611 = vpop.f32.mrf.mxu0
        %3612 = vmatprep.mubr.bf16.mxu0 0
        %3613 = vmatmul.mubr.bf16.gmra.mxu0 %v3276
        %v3614 = vpop.f32.mrf.mxu0
        %v3615 = vadd.f32 %v3299, %v3614
        %v3616 = vpop.f32.mrf.mxu0
        %v3617 = vpop.f32.mrf.mxu0
        %v3618 = vadd.f32 %v3299, %v3617
        %v3619 = vpop.f32.mrf.mxu0
        %3620 = vmatprep.mubr.bf16.mxu0 0
        %3621 = vmatmul.mubr.bf16.gmra.mxu0 %v3277
        %v3622 = vpop.f32.mrf.mxu0
        %v3623 = vadd.f32 %v3299, %v3622
        %v3624 = vpop.f32.mrf.mxu0
        %v3625 = vpop.f32.mrf.mxu0
        %v3626 = vadd.f32 %v3299, %v3625
        %v3627 = vpop.f32.mrf.mxu0
        %3628 = vmatprep.mubr.bf16.mxu0 0
        %3629 = vmatmul.mubr.bf16.gmra.mxu0 %v3278
        %v3630 = vpop.f32.mrf.mxu0
        %v3631 = vadd.f32 %v3299, %v3630
        %v3632 = vpop.f32.mrf.mxu0
        %v3633 = vpop.f32.mrf.mxu0
        %v3634 = vadd.f32 %v3299, %v3633
        %v3635 = vpop.f32.mrf.mxu0
        %3636 = vdwg.mxu0
        %v3637 = vmax.f32 %v3383, 0.0
        %v3638 = vmax.f32 %v3386, 0.0
        %v3639 = vmax.f32 %v3391, 0.0
        %v3640 = vmax.f32 %v3394, 0.0
        %v3641 = vmax.f32 %v3399, 0.0
        %v3642 = vmax.f32 %v3402, 0.0
        %v3643 = vmax.f32 %v3407, 0.0
        %v3644 = vmax.f32 %v3410, 0.0
        %v3645 = vmax.f32 %v3415, 0.0
        %v3646 = vmax.f32 %v3418, 0.0
        %v3647 = vmax.f32 %v3423, 0.0
        %v3648 = vmax.f32 %v3426, 0.0
        %v3649 = vmax.f32 %v3431, 0.0
        %v3650 = vmax.f32 %v3434, 0.0
        %v3651 = vmax.f32 %v3439, 0.0
        %v3652 = vmax.f32 %v3442, 0.0
        %v3653 = vmax.f32 %v3447, 0.0
        %v3654 = vmax.f32 %v3450, 0.0
        %v3655 = vmax.f32 %v3455, 0.0
        %v3656 = vmax.f32 %v3458, 0.0
        %v3657 = vmax.f32 %v3463, 0.0
        %v3658 = vmax.f32 %v3466, 0.0
        %v3659 = vmax.f32 %v3471, 0.0
        %v3660 = vmax.f32 %v3474, 0.0
        %v3661 = vmax.f32 %v3479, 0.0
        %v3662 = vmax.f32 %v3482, 0.0
        %v3663 = vmax.f32 %v3487, 0.0
        %v3664 = vmax.f32 %v3490, 0.0
        %v3665 = vmax.f32 %v3495, 0.0
        %v3666 = vmax.f32 %v3498, 0.0
        %v3667 = vmax.f32 %v3503, 0.0
        %v3668 = vmax.f32 %v3506, 0.0
        %v3669 = vmax.f32 %v3511, 0.0
        %v3670 = vmax.f32 %v3514, 0.0
        %v3671 = vmax.f32 %v3519, 0.0
        %v3672 = vmax.f32 %v3522, 0.0
        %v3673 = vmax.f32 %v3527, 0.0
        %v3674 = vmax.f32 %v3530, 0.0
        %v3675 = vmax.f32 %v3535, 0.0
        %v3676 = vmax.f32 %v3538, 0.0
        %v3677 = vmax.f32 %v3543, 0.0
        %v3678 = vmax.f32 %v3546, 0.0
        %v3679 = vmax.f32 %v3551, 0.0
        %v3680 = vmax.f32 %v3554, 0.0
        %v3681 = vmax.f32 %v3559, 0.0
        %v3682 = vmax.f32 %v3562, 0.0
        %v3683 = vmax.f32 %v3567, 0.0
        %v3684 = vmax.f32 %v3570, 0.0
        %v3685 = vmax.f32 %v3575, 0.0
        %v3686 = vmax.f32 %v3578, 0.0
        %v3687 = vmax.f32 %v3583, 0.0
        %v3688 = vmax.f32 %v3586, 0.0
        %v3689 = vmax.f32 %v3591, 0.0
        %v3690 = vmax.f32 %v3594, 0.0
        %v3691 = vmax.f32 %v3599, 0.0
        %v3692 = vmax.f32 %v3602, 0.0
        %v3693 = vmax.f32 %v3607, 0.0
        %v3694 = vmax.f32 %v3610, 0.0
        %v3695 = vmax.f32 %v3615, 0.0
        %v3696 = vmax.f32 %v3618, 0.0
        %v3697 = vmax.f32 %v3623, 0.0
        %v3698 = vmax.f32 %v3626, 0.0
        %v3699 = vmax.f32 %v3631, 0.0
        %v3700 = vmax.f32 %v3634, 0.0
        %3765 = vrot.lane.b32.xlu0 %v3637, 32
        %v3766 = vpop.permute.xlu0 %3765
        %3767 = vrot.lane.b32.xlu0 %v3638, 32
        %v3768 = vpop.permute.xlu0 %3767
        %3769 = vrot.lane.b32.xlu0 %v3639, 32
        %v3770 = vpop.permute.xlu0 %3769
        %3771 = vrot.lane.b32.xlu0 %v3640, 32
        %v3772 = vpop.permute.xlu0 %3771
        %3773 = vrot.lane.b32.xlu0 %v3641, 32
        %v3774 = vpop.permute.xlu0 %3773
        %3775 = vrot.lane.b32.xlu0 %v3642, 32
        %v3776 = vpop.permute.xlu0 %3775
        %3777 = vrot.lane.b32.xlu0 %v3643, 32
        %v3778 = vpop.permute.xlu0 %3777
        %3779 = vrot.lane.b32.xlu0 %v3644, 32
        %v3780 = vpop.permute.xlu0 %3779
        %3781 = vrot.lane.b32.xlu0 %v3645, 32
        %v3782 = vpop.permute.xlu0 %3781
        %3783 = vrot.lane.b32.xlu0 %v3646, 32
        %v3784 = vpop.permute.xlu0 %3783
        %3785 = vrot.lane.b32.xlu0 %v3647, 32
        %v3786 = vpop.permute.xlu0 %3785
        %3787 = vrot.lane.b32.xlu0 %v3648, 32
        %v3788 = vpop.permute.xlu0 %3787
        %3789 = vrot.lane.b32.xlu0 %v3649, 32
        %v3790 = vpop.permute.xlu0 %3789
        %3791 = vrot.lane.b32.xlu0 %v3650, 32
        %v3792 = vpop.permute.xlu0 %3791
        %3793 = vrot.lane.b32.xlu0 %v3651, 32
        %v3794 = vpop.permute.xlu0 %3793
        %3795 = vrot.lane.b32.xlu0 %v3652, 32
        %v3796 = vpop.permute.xlu0 %3795
        %3797 = vrot.lane.b32.xlu0 %v3653, 32
        %v3798 = vpop.permute.xlu0 %3797
        %3799 = vrot.lane.b32.xlu0 %v3654, 32
        %v3800 = vpop.permute.xlu0 %3799
        %3801 = vrot.lane.b32.xlu0 %v3655, 32
        %v3802 = vpop.permute.xlu0 %3801
        %3803 = vrot.lane.b32.xlu0 %v3656, 32
        %v3804 = vpop.permute.xlu0 %3803
        %3805 = vrot.lane.b32.xlu0 %v3657, 32
        %v3806 = vpop.permute.xlu0 %3805
        %3807 = vrot.lane.b32.xlu0 %v3658, 32
        %v3808 = vpop.permute.xlu0 %3807
        %3809 = vrot.lane.b32.xlu0 %v3659, 32
        %v3810 = vpop.permute.xlu0 %3809
        %3811 = vrot.lane.b32.xlu0 %v3660, 32
        %v3812 = vpop.permute.xlu0 %3811
        %3813 = vrot.lane.b32.xlu0 %v3661, 32
        %v3814 = vpop.permute.xlu0 %3813
        %3815 = vrot.lane.b32.xlu0 %v3662, 32
        %v3816 = vpop.permute.xlu0 %3815
        %3817 = vrot.lane.b32.xlu0 %v3663, 32
        %v3818 = vpop.permute.xlu0 %3817
        %3819 = vrot.lane.b32.xlu0 %v3664, 32
        %v3820 = vpop.permute.xlu0 %3819
        %3821 = vrot.lane.b32.xlu0 %v3665, 32
        %v3822 = vpop.permute.xlu0 %3821
        %3823 = vrot.lane.b32.xlu0 %v3666, 32
        %v3824 = vpop.permute.xlu0 %3823
        %3825 = vrot.lane.b32.xlu0 %v3667, 32
        %v3826 = vpop.permute.xlu0 %3825
        %3827 = vrot.lane.b32.xlu0 %v3668, 32
        %v3828 = vpop.permute.xlu0 %3827
        %3829 = vrot.lane.b32.xlu0 %v3669, 32
        %v3830 = vpop.permute.xlu0 %3829
        %3831 = vrot.lane.b32.xlu0 %v3670, 32
        %v3832 = vpop.permute.xlu0 %3831
        %3833 = vrot.lane.b32.xlu0 %v3671, 32
        %v3834 = vpop.permute.xlu0 %3833
        %3835 = vrot.lane.b32.xlu0 %v3672, 32
        %v3836 = vpop.permute.xlu0 %3835
        %3837 = vrot.lane.b32.xlu0 %v3673, 32
        %v3838 = vpop.permute.xlu0 %3837
        %3839 = vrot.lane.b32.xlu0 %v3674, 32
        %v3840 = vpop.permute.xlu0 %3839
        %3841 = vrot.lane.b32.xlu0 %v3675, 32
        %v3842 = vpop.permute.xlu0 %3841
        %3843 = vrot.lane.b32.xlu0 %v3676, 32
        %v3844 = vpop.permute.xlu0 %3843
        %3845 = vrot.lane.b32.xlu0 %v3677, 32
        %v3846 = vpop.permute.xlu0 %3845
        %3847 = vrot.lane.b32.xlu0 %v3678, 32
        %v3848 = vpop.permute.xlu0 %3847
        %3849 = vrot.lane.b32.xlu0 %v3679, 32
        %v3850 = vpop.permute.xlu0 %3849
        %3851 = vrot.lane.b32.xlu0 %v3680, 32
        %v3852 = vpop.permute.xlu0 %3851
        %3853 = vrot.lane.b32.xlu0 %v3681, 32
        %v3854 = vpop.permute.xlu0 %3853
        %3855 = vrot.lane.b32.xlu0 %v3682, 32
        %v3856 = vpop.permute.xlu0 %3855
        %3857 = vrot.lane.b32.xlu0 %v3683, 32
        %v3858 = vpop.permute.xlu0 %3857
        %3859 = vrot.lane.b32.xlu0 %v3684, 32
        %v3860 = vpop.permute.xlu0 %3859
        %3861 = vrot.lane.b32.xlu0 %v3685, 32
        %v3862 = vpop.permute.xlu0 %3861
        %3863 = vrot.lane.b32.xlu0 %v3686, 32
        %v3864 = vpop.permute.xlu0 %3863
        %3865 = vrot.lane.b32.xlu0 %v3687, 32
        %v3866 = vpop.permute.xlu0 %3865
        %3867 = vrot.lane.b32.xlu0 %v3688, 32
        %v3868 = vpop.permute.xlu0 %3867
        %3869 = vrot.lane.b32.xlu0 %v3689, 32
        %v3870 = vpop.permute.xlu0 %3869
        %3871 = vrot.lane.b32.xlu0 %v3690, 32
        %v3872 = vpop.permute.xlu0 %3871
        %3873 = vrot.lane.b32.xlu0 %v3691, 32
        %v3874 = vpop.permute.xlu0 %3873
        %3875 = vrot.lane.b32.xlu0 %v3692, 32
        %v3876 = vpop.permute.xlu0 %3875
        %3877 = vrot.lane.b32.xlu0 %v3693, 32
        %v3878 = vpop.permute.xlu0 %3877
        %3879 = vrot.lane.b32.xlu0 %v3694, 32
        %v3880 = vpop.permute.xlu0 %3879
        %3881 = vrot.lane.b32.xlu0 %v3695, 32
        %v3882 = vpop.permute.xlu0 %3881
        %3883 = vrot.lane.b32.xlu0 %v3696, 32
        %v3884 = vpop.permute.xlu0 %3883
        %3885 = vrot.lane.b32.xlu0 %v3697, 32
        %v3886 = vpop.permute.xlu0 %3885
        %3887 = vrot.lane.b32.xlu0 %v3698, 32
        %v3888 = vpop.permute.xlu0 %3887
        %3889 = vrot.lane.b32.xlu0 %v3699, 32
        %v3890 = vpop.permute.xlu0 %3889
        %3891 = vrot.lane.b32.xlu0 %v3700, 32
        %v3892 = vpop.permute.xlu0 %3891
        %3957 = vst.msk [vmem:[%s353 + $0x8] sm:$0xff] %vm1177, %v3766
        %3958 = vst.msk [vmem:[%s353 + $0x18] sm:$0xff] %vm1177, %v3768
        %3959 = vst.msk [vmem:[%s353 + $0x28] sm:$0xff] %vm1177, %v3770
        %3960 = vst.msk [vmem:[%s353 + $0x38] sm:$0xff] %vm1177, %v3772
        %3961 = vst.msk [vmem:[%s353 + $0x48] sm:$0xff] %vm1177, %v3774
        %3962 = vst.msk [vmem:[%s353 + $0x58] sm:$0xff] %vm1177, %v3776
        %3963 = vst.msk [vmem:[%s353 + $0x68] sm:$0xff] %vm1177, %v3778
        %3964 = vst.msk [vmem:[%s353 + $0x78] sm:$0xff] %vm1177, %v3780
        %3965 = vst.msk [vmem:[%s353 + $0x88] sm:$0xff] %vm1177, %v3782
        %3966 = vst.msk [vmem:[%s353 + $0x98] sm:$0xff] %vm1177, %v3784
        %3967 = vst.msk [vmem:[%s353 + $0xa8] sm:$0xff] %vm1177, %v3786
        %3968 = vst.msk [vmem:[%s353 + $0xb8] sm:$0xff] %vm1177, %v3788
        %3969 = vst.msk [vmem:[%s353 + $0xc8] sm:$0xff] %vm1177, %v3790
        %3970 = vst.msk [vmem:[%s353 + $0xd8] sm:$0xff] %vm1177, %v3792
        %3971 = vst.msk [vmem:[%s353 + $0xe8] sm:$0xff] %vm1177, %v3794
        %3972 = vst.msk [vmem:[%s353 + $0xf8] sm:$0xff] %vm1177, %v3796
        %3973 = vst.msk [vmem:[%s353 + $0x108] sm:$0xff] %vm1177, %v3798
        %3974 = vst.msk [vmem:[%s353 + $0x118] sm:$0xff] %vm1177, %v3800
        %3975 = vst.msk [vmem:[%s353 + $0x128] sm:$0xff] %vm1177, %v3802
        %3976 = vst.msk [vmem:[%s353 + $0x138] sm:$0xff] %vm1177, %v3804
        %3977 = vst.msk [vmem:[%s353 + $0x148] sm:$0xff] %vm1177, %v3806
        %3978 = vst.msk [vmem:[%s353 + $0x158] sm:$0xff] %vm1177, %v3808
        %3979 = vst.msk [vmem:[%s353 + $0x168] sm:$0xff] %vm1177, %v3810
        %3980 = vst.msk [vmem:[%s353 + $0x178] sm:$0xff] %vm1177, %v3812
        %3981 = vst.msk [vmem:[%s353 + $0x188] sm:$0xff] %vm1177, %v3814
        %3982 = vst.msk [vmem:[%s353 + $0x198] sm:$0xff] %vm1177, %v3816
        %3983 = vst.msk [vmem:[%s353 + $0x1a8] sm:$0xff] %vm1177, %v3818
        %3984 = vst.msk [vmem:[%s353 + $0x1b8] sm:$0xff] %vm1177, %v3820
        %3985 = vst.msk [vmem:[%s353 + $0x1c8] sm:$0xff] %vm1177, %v3822
        %3986 = vst.msk [vmem:[%s353 + $0x1d8] sm:$0xff] %vm1177, %v3824
        %3987 = vst.msk [vmem:[%s353 + $0x1e8] sm:$0xff] %vm1177, %v3826
        %3988 = vst.msk [vmem:[%s353 + $0x1f8] sm:$0xff] %vm1177, %v3828
        %3989 = vst.msk [vmem:[%s353 + $0x208] sm:$0xff] %vm1177, %v3830
        %3990 = vst.msk [vmem:[%s353 + $0x218] sm:$0xff] %vm1177, %v3832
        %3991 = vst.msk [vmem:[%s353 + $0x228] sm:$0xff] %vm1177, %v3834
        %3992 = vst.msk [vmem:[%s353 + $0x238] sm:$0xff] %vm1177, %v3836
        %3993 = vst.msk [vmem:[%s353 + $0x248] sm:$0xff] %vm1177, %v3838
        %3994 = vst.msk [vmem:[%s353 + $0x258] sm:$0xff] %vm1177, %v3840
        %3995 = vst.msk [vmem:[%s353 + $0x268] sm:$0xff] %vm1177, %v3842
        %3996 = vst.msk [vmem:[%s353 + $0x278] sm:$0xff] %vm1177, %v3844
        %3997 = vst.msk [vmem:[%s353 + $0x288] sm:$0xff] %vm1177, %v3846
        %3998 = vst.msk [vmem:[%s353 + $0x298] sm:$0xff] %vm1177, %v3848
        %3999 = vst.msk [vmem:[%s353 + $0x2a8] sm:$0xff] %vm1177, %v3850
        %4000 = vst.msk [vmem:[%s353 + $0x2b8] sm:$0xff] %vm1177, %v3852
        %4001 = vst.msk [vmem:[%s353 + $0x2c8] sm:$0xff] %vm1177, %v3854
        %4002 = vst.msk [vmem:[%s353 + $0x2d8] sm:$0xff] %vm1177, %v3856
        %4003 = vst.msk [vmem:[%s353 + $0x2e8] sm:$0xff] %vm1177, %v3858
        %4004 = vst.msk [vmem:[%s353 + $0x2f8] sm:$0xff] %vm1177, %v3860
        %4005 = vst.msk [vmem:[%s353 + $0x308] sm:$0xff] %vm1177, %v3862
        %4006 = vst.msk [vmem:[%s353 + $0x318] sm:$0xff] %vm1177, %v3864
        %4007 = vst.msk [vmem:[%s353 + $0x328] sm:$0xff] %vm1177, %v3866
        %4008 = vst.msk [vmem:[%s353 + $0x338] sm:$0xff] %vm1177, %v3868
        %4009 = vst.msk [vmem:[%s353 + $0x348] sm:$0xff] %vm1177, %v3870
        %4010 = vst.msk [vmem:[%s353 + $0x358] sm:$0xff] %vm1177, %v3872
        %4011 = vst.msk [vmem:[%s353 + $0x368] sm:$0xff] %vm1177, %v3874
        %4012 = vst.msk [vmem:[%s353 + $0x378] sm:$0xff] %vm1177, %v3876
        %4013 = vst.msk [vmem:[%s353 + $0x388] sm:$0xff] %vm1177, %v3878
        %4014 = vst.msk [vmem:[%s353 + $0x398] sm:$0xff] %vm1177, %v3880
        %4015 = vst.msk [vmem:[%s353 + $0x3a8] sm:$0xff] %vm1177, %v3882
        %4016 = vst.msk [vmem:[%s353 + $0x3b8] sm:$0xff] %vm1177, %v3884
        %4017 = vst.msk [vmem:[%s353 + $0x3c8] sm:$0xff] %vm1177, %v3886
        %4018 = vst.msk [vmem:[%s353 + $0x3d8] sm:$0xff] %vm1177, %v3888
        %4019 = vst.msk [vmem:[%s353 + $0x3e8] sm:$0xff] %vm1177, %v3890
        %4020 = vst.msk [vmem:[%s353 + $0x3f8] sm:$0xff] %vm1177, %v3892
        %v4021 = vpack.c.bf16 %v3638, %v3637
        %v4022 = vpack.c.bf16 %v3640, %v3639
        %v4023 = vpack.c.bf16 %v3642, %v3641
        %v4024 = vpack.c.bf16 %v3644, %v3643
        %v4025 = vpack.c.bf16 %v3646, %v3645
        %v4026 = vpack.c.bf16 %v3648, %v3647
        %v4027 = vpack.c.bf16 %v3650, %v3649
        %v4028 = vpack.c.bf16 %v3652, %v3651
        %v4029 = vpack.c.bf16 %v3654, %v3653
        %v4030 = vpack.c.bf16 %v3656, %v3655
        %v4031 = vpack.c.bf16 %v3658, %v3657
        %v4032 = vpack.c.bf16 %v3660, %v3659
        %v4033 = vpack.c.bf16 %v3662, %v3661
        %v4034 = vpack.c.bf16 %v3664, %v3663
        %v4035 = vpack.c.bf16 %v3666, %v3665
        %v4036 = vpack.c.bf16 %v3668, %v3667
        %v4037 = vpack.c.bf16 %v3670, %v3669
        %v4038 = vpack.c.bf16 %v3672, %v3671
        %v4039 = vpack.c.bf16 %v3674, %v3673
        %v4040 = vpack.c.bf16 %v3676, %v3675
        %v4041 = vpack.c.bf16 %v3678, %v3677
        %v4042 = vpack.c.bf16 %v3680, %v3679
        %v4043 = vpack.c.bf16 %v3682, %v3681
        %v4044 = vpack.c.bf16 %v3684, %v3683
        %v4045 = vpack.c.bf16 %v3686, %v3685
        %v4046 = vpack.c.bf16 %v3688, %v3687
        %v4047 = vpack.c.bf16 %v3690, %v3689
        %v4048 = vpack.c.bf16 %v3692, %v3691
        %v4049 = vpack.c.bf16 %v3694, %v3693
        %v4050 = vpack.c.bf16 %v3696, %v3695
        %v4051 = vpack.c.bf16 %v3698, %v3697
        %v4052 = vpack.c.bf16 %v3700, %v3699
        %v4053 = vld [vmem:[%s6] sm:$0xf]
        %v4054 = vld [vmem:[%s6 + $0x4] sm:$0xf]
        %v4055 = vld [vmem:[%s6 + $0x8] sm:$0xf]
        %v4056 = vld [vmem:[%s6 + $0xc] sm:$0xf]
        %v4057 = vld [vmem:[%s6 + $0x10] sm:$0xf]
        %v4058 = vld [vmem:[%s6 + $0x14] sm:$0xf]
        %v4059 = vld [vmem:[%s6 + $0x18] sm:$0xf]
        %v4060 = vld [vmem:[%s6 + $0x1c] sm:$0xf]
        %v4061 = vld [vmem:[%s6 + $0x20] sm:$0xf]
        %v4062 = vld [vmem:[%s6 + $0x24] sm:$0xf]
        %v4063 = vld [vmem:[%s6 + $0x28] sm:$0xf]
        %v4064 = vld [vmem:[%s6 + $0x2c] sm:$0xf]
        %v4065 = vld [vmem:[%s6 + $0x30] sm:$0xf]
        %v4066 = vld [vmem:[%s6 + $0x34] sm:$0xf]
        %v4067 = vld [vmem:[%s6 + $0x38] sm:$0xf]
        %v4068 = vld [vmem:[%s6 + $0x3c] sm:$0xf]
        %v4069 = vld [vmem:[%s9 + $0x5] sm:$0x1]
        %v4070 = vlaneseq
        %v4071 = vshrl.u32 %v4070, 7
        %v4072 = vsub.s32 0, %v4071
        %v4073 = vrot.slane %v4069, %v4072
        %v4090 = vunpack.c.l.b16 %v4053
        %v4091 = vunpack.c.l.b16 %v4054
        %v4092 = vunpack.c.l.b16 %v4055
        %v4093 = vunpack.c.l.b16 %v4056
        %v4094 = vunpack.c.l.b16 %v4057
        %v4095 = vunpack.c.l.b16 %v4058
        %v4096 = vunpack.c.l.b16 %v4059
        %v4097 = vunpack.c.l.b16 %v4060
        %v4098 = vunpack.c.l.b16 %v4061
        %v4099 = vunpack.c.l.b16 %v4062
        %v4100 = vunpack.c.l.b16 %v4063
        %v4101 = vunpack.c.l.b16 %v4064
        %v4102 = vunpack.c.l.b16 %v4065
        %v4103 = vunpack.c.l.b16 %v4066
        %v4104 = vunpack.c.l.b16 %v4067
        %v4105 = vunpack.c.l.b16 %v4068
        %v4106 = vpack.c.b16 %v4091, %v4090
        %v4107 = vpack.c.b16 %v4093, %v4092
        %v4108 = vpack.c.b16 %v4095, %v4094
        %v4109 = vpack.c.b16 %v4097, %v4096
        %v4110 = vpack.c.b16 %v4099, %v4098
        %v4111 = vpack.c.b16 %v4101, %v4100
        %v4112 = vpack.c.b16 %v4103, %v4102
        %v4113 = vpack.c.b16 %v4105, %v4104
        %4122 = vmatprep.subr.bf16.mxu0 0
        %4123 = vmatpush1.bf16.msra.mxu0 %v4113
        %4124 = vmatprep.subr.bf16.mxu0 0
        %4125 = vmatpush1.bf16.msra.mxu0 %v4112
        %4126 = vmatprep.subr.bf16.mxu0 0
        %4127 = vmatpush1.bf16.msra.mxu0 %v4111
        %4128 = vmatprep.subr.bf16.mxu0 0
        %4129 = vmatpush1.bf16.msra.mxu0 %v4110
        %4130 = vmatprep.subr.bf16.mxu0 0
        %4131 = vmatpush1.bf16.msra.mxu0 %v4109
        %4132 = vmatprep.subr.bf16.mxu0 0
        %4133 = vmatpush1.bf16.msra.mxu0 %v4108
        %4134 = vmatprep.subr.bf16.mxu0 0
        %4135 = vmatpush1.bf16.msra.mxu0 %v4107
        %4136 = vmatprep.subr.bf16.mxu0 0
        %4137 = vmatpush1.bf16.msra.mxu0 %v4106
        %4138 = vmatprep.subr.bf16.mxu0 0
        %4139 = vmatpush2.bf16.msra.mxu0 0
        %4140 = vmatprep.subr.bf16.mxu0 0
        %4141 = vmatpush2.bf16.msra.mxu0 0
        %4142 = vmatprep.subr.bf16.mxu0 0
        %4143 = vmatpush2.bf16.msra.mxu0 0
        %4144 = vmatprep.subr.bf16.mxu0 0
        %4145 = vmatpush2.bf16.msra.mxu0 0
        %4146 = vmatprep.subr.bf16.mxu0 0
        %4147 = vmatpush2.bf16.msra.mxu0 0
        %4148 = vmatprep.subr.bf16.mxu0 0
        %4149 = vmatpush2.bf16.msra.mxu0 0
        %4150 = vmatprep.subr.bf16.mxu0 0
        %4151 = vmatpush2.bf16.msra.mxu0 0
        %4152 = vmatprep.subr.bf16.mxu0 0
        %4153 = vmatpush2.bf16.msra.mxu0 0
        %4154 = vmatprep.mubr.bf16.mxu0 0
        %4155 = vmatmul.mubr.bf16.gmra.mxu0 %v4021
        %v4156 = vpop.f32.mrf.mxu0
        %v4157 = vadd.f32 %v4073, %v4156
        %v4158 = vpop.f32.mrf.mxu0
        %v4159 = vpop.f32.mrf.mxu0
        %v4160 = vadd.f32 %v4073, %v4159
        %v4161 = vpop.f32.mrf.mxu0
        %4162 = vmatprep.mubr.bf16.mxu0 0
        %4163 = vmatmul.mubr.bf16.gmra.mxu0 %v4022
        %v4164 = vpop.f32.mrf.mxu0
        %v4165 = vadd.f32 %v4073, %v4164
        %v4166 = vpop.f32.mrf.mxu0
        %v4167 = vpop.f32.mrf.mxu0
        %v4168 = vadd.f32 %v4073, %v4167
        %v4169 = vpop.f32.mrf.mxu0
        %4170 = vmatprep.mubr.bf16.mxu0 0
        %4171 = vmatmul.mubr.bf16.gmra.mxu0 %v4023
        %v4172 = vpop.f32.mrf.mxu0
        %v4173 = vadd.f32 %v4073, %v4172
        %v4174 = vpop.f32.mrf.mxu0
        %v4175 = vpop.f32.mrf.mxu0
        %v4176 = vadd.f32 %v4073, %v4175
        %v4177 = vpop.f32.mrf.mxu0
        %4178 = vmatprep.mubr.bf16.mxu0 0
        %4179 = vmatmul.mubr.bf16.gmra.mxu0 %v4024
        %v4180 = vpop.f32.mrf.mxu0
        %v4181 = vadd.f32 %v4073, %v4180
        %v4182 = vpop.f32.mrf.mxu0
        %v4183 = vpop.f32.mrf.mxu0
        %v4184 = vadd.f32 %v4073, %v4183
        %v4185 = vpop.f32.mrf.mxu0
        %4186 = vmatprep.mubr.bf16.mxu0 0
        %4187 = vmatmul.mubr.bf16.gmra.mxu0 %v4025
        %v4188 = vpop.f32.mrf.mxu0
        %v4189 = vadd.f32 %v4073, %v4188
        %v4190 = vpop.f32.mrf.mxu0
        %v4191 = vpop.f32.mrf.mxu0
        %v4192 = vadd.f32 %v4073, %v4191
        %v4193 = vpop.f32.mrf.mxu0
        %4194 = vmatprep.mubr.bf16.mxu0 0
        %4195 = vmatmul.mubr.bf16.gmra.mxu0 %v4026
        %v4196 = vpop.f32.mrf.mxu0
        %v4197 = vadd.f32 %v4073, %v4196
        %v4198 = vpop.f32.mrf.mxu0
        %v4199 = vpop.f32.mrf.mxu0
        %v4200 = vadd.f32 %v4073, %v4199
        %v4201 = vpop.f32.mrf.mxu0
        %4202 = vmatprep.mubr.bf16.mxu0 0
        %4203 = vmatmul.mubr.bf16.gmra.mxu0 %v4027
        %v4204 = vpop.f32.mrf.mxu0
        %v4205 = vadd.f32 %v4073, %v4204
        %v4206 = vpop.f32.mrf.mxu0
        %v4207 = vpop.f32.mrf.mxu0
        %v4208 = vadd.f32 %v4073, %v4207
        %v4209 = vpop.f32.mrf.mxu0
        %4210 = vmatprep.mubr.bf16.mxu0 0
        %4211 = vmatmul.mubr.bf16.gmra.mxu0 %v4028
        %v4212 = vpop.f32.mrf.mxu0
        %v4213 = vadd.f32 %v4073, %v4212
        %v4214 = vpop.f32.mrf.mxu0
        %v4215 = vpop.f32.mrf.mxu0
        %v4216 = vadd.f32 %v4073, %v4215
        %v4217 = vpop.f32.mrf.mxu0
        %4218 = vmatprep.mubr.bf16.mxu0 0
        %4219 = vmatmul.mubr.bf16.gmra.mxu0 %v4029
        %v4220 = vpop.f32.mrf.mxu0
        %v4221 = vadd.f32 %v4073, %v4220
        %v4222 = vpop.f32.mrf.mxu0
        %v4223 = vpop.f32.mrf.mxu0
        %v4224 = vadd.f32 %v4073, %v4223
        %v4225 = vpop.f32.mrf.mxu0
        %4226 = vmatprep.mubr.bf16.mxu0 0
        %4227 = vmatmul.mubr.bf16.gmra.mxu0 %v4030
        %v4228 = vpop.f32.mrf.mxu0
        %v4229 = vadd.f32 %v4073, %v4228
        %v4230 = vpop.f32.mrf.mxu0
        %v4231 = vpop.f32.mrf.mxu0
        %v4232 = vadd.f32 %v4073, %v4231
        %v4233 = vpop.f32.mrf.mxu0
        %4234 = vmatprep.mubr.bf16.mxu0 0
        %4235 = vmatmul.mubr.bf16.gmra.mxu0 %v4031
        %v4236 = vpop.f32.mrf.mxu0
        %v4237 = vadd.f32 %v4073, %v4236
        %v4238 = vpop.f32.mrf.mxu0
        %v4239 = vpop.f32.mrf.mxu0
        %v4240 = vadd.f32 %v4073, %v4239
        %v4241 = vpop.f32.mrf.mxu0
        %4242 = vmatprep.mubr.bf16.mxu0 0
        %4243 = vmatmul.mubr.bf16.gmra.mxu0 %v4032
        %v4244 = vpop.f32.mrf.mxu0
        %v4245 = vadd.f32 %v4073, %v4244
        %v4246 = vpop.f32.mrf.mxu0
        %v4247 = vpop.f32.mrf.mxu0
        %v4248 = vadd.f32 %v4073, %v4247
        %v4249 = vpop.f32.mrf.mxu0
        %4250 = vmatprep.mubr.bf16.mxu0 0
        %4251 = vmatmul.mubr.bf16.gmra.mxu0 %v4033
        %v4252 = vpop.f32.mrf.mxu0
        %v4253 = vadd.f32 %v4073, %v4252
        %v4254 = vpop.f32.mrf.mxu0
        %v4255 = vpop.f32.mrf.mxu0
        %v4256 = vadd.f32 %v4073, %v4255
        %v4257 = vpop.f32.mrf.mxu0
        %4258 = vmatprep.mubr.bf16.mxu0 0
        %4259 = vmatmul.mubr.bf16.gmra.mxu0 %v4034
        %v4260 = vpop.f32.mrf.mxu0
        %v4261 = vadd.f32 %v4073, %v4260
        %v4262 = vpop.f32.mrf.mxu0
        %v4263 = vpop.f32.mrf.mxu0
        %v4264 = vadd.f32 %v4073, %v4263
        %v4265 = vpop.f32.mrf.mxu0
        %4266 = vmatprep.mubr.bf16.mxu0 0
        %4267 = vmatmul.mubr.bf16.gmra.mxu0 %v4035
        %v4268 = vpop.f32.mrf.mxu0
        %v4269 = vadd.f32 %v4073, %v4268
        %v4270 = vpop.f32.mrf.mxu0
        %v4271 = vpop.f32.mrf.mxu0
        %v4272 = vadd.f32 %v4073, %v4271
        %v4273 = vpop.f32.mrf.mxu0
        %4274 = vmatprep.mubr.bf16.mxu0 0
        %4275 = vmatmul.mubr.bf16.gmra.mxu0 %v4036
        %v4276 = vpop.f32.mrf.mxu0
        %v4277 = vadd.f32 %v4073, %v4276
        %v4278 = vpop.f32.mrf.mxu0
        %v4279 = vpop.f32.mrf.mxu0
        %v4280 = vadd.f32 %v4073, %v4279
        %v4281 = vpop.f32.mrf.mxu0
        %4282 = vmatprep.mubr.bf16.mxu0 0
        %4283 = vmatmul.mubr.bf16.gmra.mxu0 %v4037
        %v4284 = vpop.f32.mrf.mxu0
        %v4285 = vadd.f32 %v4073, %v4284
        %v4286 = vpop.f32.mrf.mxu0
        %v4287 = vpop.f32.mrf.mxu0
        %v4288 = vadd.f32 %v4073, %v4287
        %v4289 = vpop.f32.mrf.mxu0
        %4290 = vmatprep.mubr.bf16.mxu0 0
        %4291 = vmatmul.mubr.bf16.gmra.mxu0 %v4038
        %v4292 = vpop.f32.mrf.mxu0
        %v4293 = vadd.f32 %v4073, %v4292
        %v4294 = vpop.f32.mrf.mxu0
        %v4295 = vpop.f32.mrf.mxu0
        %v4296 = vadd.f32 %v4073, %v4295
        %v4297 = vpop.f32.mrf.mxu0
        %4298 = vmatprep.mubr.bf16.mxu0 0
        %4299 = vmatmul.mubr.bf16.gmra.mxu0 %v4039
        %v4300 = vpop.f32.mrf.mxu0
        %v4301 = vadd.f32 %v4073, %v4300
        %v4302 = vpop.f32.mrf.mxu0
        %v4303 = vpop.f32.mrf.mxu0
        %v4304 = vadd.f32 %v4073, %v4303
        %v4305 = vpop.f32.mrf.mxu0
        %4306 = vmatprep.mubr.bf16.mxu0 0
        %4307 = vmatmul.mubr.bf16.gmra.mxu0 %v4040
        %v4308 = vpop.f32.mrf.mxu0
        %v4309 = vadd.f32 %v4073, %v4308
        %v4310 = vpop.f32.mrf.mxu0
        %v4311 = vpop.f32.mrf.mxu0
        %v4312 = vadd.f32 %v4073, %v4311
        %v4313 = vpop.f32.mrf.mxu0
        %4314 = vmatprep.mubr.bf16.mxu0 0
        %4315 = vmatmul.mubr.bf16.gmra.mxu0 %v4041
        %v4316 = vpop.f32.mrf.mxu0
        %v4317 = vadd.f32 %v4073, %v4316
        %v4318 = vpop.f32.mrf.mxu0
        %v4319 = vpop.f32.mrf.mxu0
        %v4320 = vadd.f32 %v4073, %v4319
        %v4321 = vpop.f32.mrf.mxu0
        %4322 = vmatprep.mubr.bf16.mxu0 0
        %4323 = vmatmul.mubr.bf16.gmra.mxu0 %v4042
        %v4324 = vpop.f32.mrf.mxu0
        %v4325 = vadd.f32 %v4073, %v4324
        %v4326 = vpop.f32.mrf.mxu0
        %v4327 = vpop.f32.mrf.mxu0
        %v4328 = vadd.f32 %v4073, %v4327
        %v4329 = vpop.f32.mrf.mxu0
        %4330 = vmatprep.mubr.bf16.mxu0 0
        %4331 = vmatmul.mubr.bf16.gmra.mxu0 %v4043
        %v4332 = vpop.f32.mrf.mxu0
        %v4333 = vadd.f32 %v4073, %v4332
        %v4334 = vpop.f32.mrf.mxu0
        %v4335 = vpop.f32.mrf.mxu0
        %v4336 = vadd.f32 %v4073, %v4335
        %v4337 = vpop.f32.mrf.mxu0
        %4338 = vmatprep.mubr.bf16.mxu0 0
        %4339 = vmatmul.mubr.bf16.gmra.mxu0 %v4044
        %v4340 = vpop.f32.mrf.mxu0
        %v4341 = vadd.f32 %v4073, %v4340
        %v4342 = vpop.f32.mrf.mxu0
        %v4343 = vpop.f32.mrf.mxu0
        %v4344 = vadd.f32 %v4073, %v4343
        %v4345 = vpop.f32.mrf.mxu0
        %4346 = vmatprep.mubr.bf16.mxu0 0
        %4347 = vmatmul.mubr.bf16.gmra.mxu0 %v4045
        %v4348 = vpop.f32.mrf.mxu0
        %v4349 = vadd.f32 %v4073, %v4348
        %v4350 = vpop.f32.mrf.mxu0
        %v4351 = vpop.f32.mrf.mxu0
        %v4352 = vadd.f32 %v4073, %v4351
        %v4353 = vpop.f32.mrf.mxu0
        %4354 = vmatprep.mubr.bf16.mxu0 0
        %4355 = vmatmul.mubr.bf16.gmra.mxu0 %v4046
        %v4356 = vpop.f32.mrf.mxu0
        %v4357 = vadd.f32 %v4073, %v4356
        %v4358 = vpop.f32.mrf.mxu0
        %v4359 = vpop.f32.mrf.mxu0
        %v4360 = vadd.f32 %v4073, %v4359
        %v4361 = vpop.f32.mrf.mxu0
        %4362 = vmatprep.mubr.bf16.mxu0 0
        %4363 = vmatmul.mubr.bf16.gmra.mxu0 %v4047
        %v4364 = vpop.f32.mrf.mxu0
        %v4365 = vadd.f32 %v4073, %v4364
        %v4366 = vpop.f32.mrf.mxu0
        %v4367 = vpop.f32.mrf.mxu0
        %v4368 = vadd.f32 %v4073, %v4367
        %v4369 = vpop.f32.mrf.mxu0
        %4370 = vmatprep.mubr.bf16.mxu0 0
        %4371 = vmatmul.mubr.bf16.gmra.mxu0 %v4048
        %v4372 = vpop.f32.mrf.mxu0
        %v4373 = vadd.f32 %v4073, %v4372
        %v4374 = vpop.f32.mrf.mxu0
        %v4375 = vpop.f32.mrf.mxu0
        %v4376 = vadd.f32 %v4073, %v4375
        %v4377 = vpop.f32.mrf.mxu0
        %4378 = vmatprep.mubr.bf16.mxu0 0
        %4379 = vmatmul.mubr.bf16.gmra.mxu0 %v4049
        %v4380 = vpop.f32.mrf.mxu0
        %v4381 = vadd.f32 %v4073, %v4380
        %v4382 = vpop.f32.mrf.mxu0
        %v4383 = vpop.f32.mrf.mxu0
        %v4384 = vadd.f32 %v4073, %v4383
        %v4385 = vpop.f32.mrf.mxu0
        %4386 = vmatprep.mubr.bf16.mxu0 0
        %4387 = vmatmul.mubr.bf16.gmra.mxu0 %v4050
        %v4388 = vpop.f32.mrf.mxu0
        %v4389 = vadd.f32 %v4073, %v4388
        %v4390 = vpop.f32.mrf.mxu0
        %v4391 = vpop.f32.mrf.mxu0
        %v4392 = vadd.f32 %v4073, %v4391
        %v4393 = vpop.f32.mrf.mxu0
        %4394 = vmatprep.mubr.bf16.mxu0 0
        %4395 = vmatmul.mubr.bf16.gmra.mxu0 %v4051
        %v4396 = vpop.f32.mrf.mxu0
        %v4397 = vadd.f32 %v4073, %v4396
        %v4398 = vpop.f32.mrf.mxu0
        %v4399 = vpop.f32.mrf.mxu0
        %v4400 = vadd.f32 %v4073, %v4399
        %v4401 = vpop.f32.mrf.mxu0
        %4402 = vmatprep.mubr.bf16.mxu0 0
        %4403 = vmatmul.mubr.bf16.gmra.mxu0 %v4052
        %v4404 = vpop.f32.mrf.mxu0
        %v4405 = vadd.f32 %v4073, %v4404
        %v4406 = vpop.f32.mrf.mxu0
        %v4407 = vpop.f32.mrf.mxu0
        %v4408 = vadd.f32 %v4073, %v4407
        %v4409 = vpop.f32.mrf.mxu0
        %4410 = vdwg.mxu0
        %v4411 = vmax.f32 %v4157, 0.0
        %v4412 = vmax.f32 %v4160, 0.0
        %v4413 = vmax.f32 %v4165, 0.0
        %v4414 = vmax.f32 %v4168, 0.0
        %v4415 = vmax.f32 %v4173, 0.0
        %v4416 = vmax.f32 %v4176, 0.0
        %v4417 = vmax.f32 %v4181, 0.0
        %v4418 = vmax.f32 %v4184, 0.0
        %v4419 = vmax.f32 %v4189, 0.0
        %v4420 = vmax.f32 %v4192, 0.0
        %v4421 = vmax.f32 %v4197, 0.0
        %v4422 = vmax.f32 %v4200, 0.0
        %v4423 = vmax.f32 %v4205, 0.0
        %v4424 = vmax.f32 %v4208, 0.0
        %v4425 = vmax.f32 %v4213, 0.0
        %v4426 = vmax.f32 %v4216, 0.0
        %v4427 = vmax.f32 %v4221, 0.0
        %v4428 = vmax.f32 %v4224, 0.0
        %v4429 = vmax.f32 %v4229, 0.0
        %v4430 = vmax.f32 %v4232, 0.0
        %v4431 = vmax.f32 %v4237, 0.0
        %v4432 = vmax.f32 %v4240, 0.0
        %v4433 = vmax.f32 %v4245, 0.0
        %v4434 = vmax.f32 %v4248, 0.0
        %v4435 = vmax.f32 %v4253, 0.0
        %v4436 = vmax.f32 %v4256, 0.0
        %v4437 = vmax.f32 %v4261, 0.0
        %v4438 = vmax.f32 %v4264, 0.0
        %v4439 = vmax.f32 %v4269, 0.0
        %v4440 = vmax.f32 %v4272, 0.0
        %v4441 = vmax.f32 %v4277, 0.0
        %v4442 = vmax.f32 %v4280, 0.0
        %v4443 = vmax.f32 %v4285, 0.0
        %v4444 = vmax.f32 %v4288, 0.0
        %v4445 = vmax.f32 %v4293, 0.0
        %v4446 = vmax.f32 %v4296, 0.0
        %v4447 = vmax.f32 %v4301, 0.0
        %v4448 = vmax.f32 %v4304, 0.0
        %v4449 = vmax.f32 %v4309, 0.0
        %v4450 = vmax.f32 %v4312, 0.0
        %v4451 = vmax.f32 %v4317, 0.0
        %v4452 = vmax.f32 %v4320, 0.0
        %v4453 = vmax.f32 %v4325, 0.0
        %v4454 = vmax.f32 %v4328, 0.0
        %v4455 = vmax.f32 %v4333, 0.0
        %v4456 = vmax.f32 %v4336, 0.0
        %v4457 = vmax.f32 %v4341, 0.0
        %v4458 = vmax.f32 %v4344, 0.0
        %v4459 = vmax.f32 %v4349, 0.0
        %v4460 = vmax.f32 %v4352, 0.0
        %v4461 = vmax.f32 %v4357, 0.0
        %v4462 = vmax.f32 %v4360, 0.0
        %v4463 = vmax.f32 %v4365, 0.0
        %v4464 = vmax.f32 %v4368, 0.0
        %v4465 = vmax.f32 %v4373, 0.0
        %v4466 = vmax.f32 %v4376, 0.0
        %v4467 = vmax.f32 %v4381, 0.0
        %v4468 = vmax.f32 %v4384, 0.0
        %v4469 = vmax.f32 %v4389, 0.0
        %v4470 = vmax.f32 %v4392, 0.0
        %v4471 = vmax.f32 %v4397, 0.0
        %v4472 = vmax.f32 %v4400, 0.0
        %v4473 = vmax.f32 %v4405, 0.0
        %v4474 = vmax.f32 %v4408, 0.0
        %4539 = vrot.lane.b32.xlu0 %v4411, 64
        %v4540 = vpop.permute.xlu0 %4539
        %4541 = vrot.lane.b32.xlu0 %v4412, 64
        %v4542 = vpop.permute.xlu0 %4541
        %4543 = vrot.lane.b32.xlu0 %v4413, 64
        %v4544 = vpop.permute.xlu0 %4543
        %4545 = vrot.lane.b32.xlu0 %v4414, 64
        %v4546 = vpop.permute.xlu0 %4545
        %4547 = vrot.lane.b32.xlu0 %v4415, 64
        %v4548 = vpop.permute.xlu0 %4547
        %4549 = vrot.lane.b32.xlu0 %v4416, 64
        %v4550 = vpop.permute.xlu0 %4549
        %4551 = vrot.lane.b32.xlu0 %v4417, 64
        %v4552 = vpop.permute.xlu0 %4551
        %4553 = vrot.lane.b32.xlu0 %v4418, 64
        %v4554 = vpop.permute.xlu0 %4553
        %4555 = vrot.lane.b32.xlu0 %v4419, 64
        %v4556 = vpop.permute.xlu0 %4555
        %4557 = vrot.lane.b32.xlu0 %v4420, 64
        %v4558 = vpop.permute.xlu0 %4557
        %4559 = vrot.lane.b32.xlu0 %v4421, 64
        %v4560 = vpop.permute.xlu0 %4559
        %4561 = vrot.lane.b32.xlu0 %v4422, 64
        %v4562 = vpop.permute.xlu0 %4561
        %4563 = vrot.lane.b32.xlu0 %v4423, 64
        %v4564 = vpop.permute.xlu0 %4563
        %4565 = vrot.lane.b32.xlu0 %v4424, 64
        %v4566 = vpop.permute.xlu0 %4565
        %4567 = vrot.lane.b32.xlu0 %v4425, 64
        %v4568 = vpop.permute.xlu0 %4567
        %4569 = vrot.lane.b32.xlu0 %v4426, 64
        %v4570 = vpop.permute.xlu0 %4569
        %4571 = vrot.lane.b32.xlu0 %v4427, 64
        %v4572 = vpop.permute.xlu0 %4571
        %4573 = vrot.lane.b32.xlu0 %v4428, 64
        %v4574 = vpop.permute.xlu0 %4573
        %4575 = vrot.lane.b32.xlu0 %v4429, 64
        %v4576 = vpop.permute.xlu0 %4575
        %4577 = vrot.lane.b32.xlu0 %v4430, 64
        %v4578 = vpop.permute.xlu0 %4577
        %4579 = vrot.lane.b32.xlu0 %v4431, 64
        %v4580 = vpop.permute.xlu0 %4579
        %4581 = vrot.lane.b32.xlu0 %v4432, 64
        %v4582 = vpop.permute.xlu0 %4581
        %4583 = vrot.lane.b32.xlu0 %v4433, 64
        %v4584 = vpop.permute.xlu0 %4583
        %4585 = vrot.lane.b32.xlu0 %v4434, 64
        %v4586 = vpop.permute.xlu0 %4585
        %4587 = vrot.lane.b32.xlu0 %v4435, 64
        %v4588 = vpop.permute.xlu0 %4587
        %4589 = vrot.lane.b32.xlu0 %v4436, 64
        %v4590 = vpop.permute.xlu0 %4589
        %4591 = vrot.lane.b32.xlu0 %v4437, 64
        %v4592 = vpop.permute.xlu0 %4591
        %4593 = vrot.lane.b32.xlu0 %v4438, 64
        %v4594 = vpop.permute.xlu0 %4593
        %4595 = vrot.lane.b32.xlu0 %v4439, 64
        %v4596 = vpop.permute.xlu0 %4595
        %4597 = vrot.lane.b32.xlu0 %v4440, 64
        %v4598 = vpop.permute.xlu0 %4597
        %4599 = vrot.lane.b32.xlu0 %v4441, 64
        %v4600 = vpop.permute.xlu0 %4599
        %4601 = vrot.lane.b32.xlu0 %v4442, 64
        %v4602 = vpop.permute.xlu0 %4601
        %4603 = vrot.lane.b32.xlu0 %v4443, 64
        %v4604 = vpop.permute.xlu0 %4603
        %4605 = vrot.lane.b32.xlu0 %v4444, 64
        %v4606 = vpop.permute.xlu0 %4605
        %4607 = vrot.lane.b32.xlu0 %v4445, 64
        %v4608 = vpop.permute.xlu0 %4607
        %4609 = vrot.lane.b32.xlu0 %v4446, 64
        %v4610 = vpop.permute.xlu0 %4609
        %4611 = vrot.lane.b32.xlu0 %v4447, 64
        %v4612 = vpop.permute.xlu0 %4611
        %4613 = vrot.lane.b32.xlu0 %v4448, 64
        %v4614 = vpop.permute.xlu0 %4613
        %4615 = vrot.lane.b32.xlu0 %v4449, 64
        %v4616 = vpop.permute.xlu0 %4615
        %4617 = vrot.lane.b32.xlu0 %v4450, 64
        %v4618 = vpop.permute.xlu0 %4617
        %4619 = vrot.lane.b32.xlu0 %v4451, 64
        %v4620 = vpop.permute.xlu0 %4619
        %4621 = vrot.lane.b32.xlu0 %v4452, 64
        %v4622 = vpop.permute.xlu0 %4621
        %4623 = vrot.lane.b32.xlu0 %v4453, 64
        %v4624 = vpop.permute.xlu0 %4623
        %4625 = vrot.lane.b32.xlu0 %v4454, 64
        %v4626 = vpop.permute.xlu0 %4625
        %4627 = vrot.lane.b32.xlu0 %v4455, 64
        %v4628 = vpop.permute.xlu0 %4627
        %4629 = vrot.lane.b32.xlu0 %v4456, 64
        %v4630 = vpop.permute.xlu0 %4629
        %4631 = vrot.lane.b32.xlu0 %v4457, 64
        %v4632 = vpop.permute.xlu0 %4631
        %4633 = vrot.lane.b32.xlu0 %v4458, 64
        %v4634 = vpop.permute.xlu0 %4633
        %4635 = vrot.lane.b32.xlu0 %v4459, 64
        %v4636 = vpop.permute.xlu0 %4635
        %4637 = vrot.lane.b32.xlu0 %v4460, 64
        %v4638 = vpop.permute.xlu0 %4637
        %4639 = vrot.lane.b32.xlu0 %v4461, 64
        %v4640 = vpop.permute.xlu0 %4639
        %4641 = vrot.lane.b32.xlu0 %v4462, 64
        %v4642 = vpop.permute.xlu0 %4641
        %4643 = vrot.lane.b32.xlu0 %v4463, 64
        %v4644 = vpop.permute.xlu0 %4643
        %4645 = vrot.lane.b32.xlu0 %v4464, 64
        %v4646 = vpop.permute.xlu0 %4645
        %4647 = vrot.lane.b32.xlu0 %v4465, 64
        %v4648 = vpop.permute.xlu0 %4647
        %4649 = vrot.lane.b32.xlu0 %v4466, 64
        %v4650 = vpop.permute.xlu0 %4649
        %4651 = vrot.lane.b32.xlu0 %v4467, 64
        %v4652 = vpop.permute.xlu0 %4651
        %4653 = vrot.lane.b32.xlu0 %v4468, 64
        %v4654 = vpop.permute.xlu0 %4653
        %4655 = vrot.lane.b32.xlu0 %v4469, 64
        %v4656 = vpop.permute.xlu0 %4655
        %4657 = vrot.lane.b32.xlu0 %v4470, 64
        %v4658 = vpop.permute.xlu0 %4657
        %4659 = vrot.lane.b32.xlu0 %v4471, 64
        %v4660 = vpop.permute.xlu0 %4659
        %4661 = vrot.lane.b32.xlu0 %v4472, 64
        %v4662 = vpop.permute.xlu0 %4661
        %4663 = vrot.lane.b32.xlu0 %v4473, 64
        %v4664 = vpop.permute.xlu0 %4663
        %4665 = vrot.lane.b32.xlu0 %v4474, 64
        %v4666 = vpop.permute.xlu0 %4665
        %4731 = vst.msk [vmem:[%s353 + $0x8] sm:$0xff] %vm1952, %v4540
        %4732 = vst.msk [vmem:[%s353 + $0x18] sm:$0xff] %vm1952, %v4542
        %4733 = vst.msk [vmem:[%s353 + $0x28] sm:$0xff] %vm1952, %v4544
        %4734 = vst.msk [vmem:[%s353 + $0x38] sm:$0xff] %vm1952, %v4546
        %4735 = vst.msk [vmem:[%s353 + $0x48] sm:$0xff] %vm1952, %v4548
        %4736 = vst.msk [vmem:[%s353 + $0x58] sm:$0xff] %vm1952, %v4550
        %4737 = vst.msk [vmem:[%s353 + $0x68] sm:$0xff] %vm1952, %v4552
        %4738 = vst.msk [vmem:[%s353 + $0x78] sm:$0xff] %vm1952, %v4554
        %4739 = vst.msk [vmem:[%s353 + $0x88] sm:$0xff] %vm1952, %v4556
        %4740 = vst.msk [vmem:[%s353 + $0x98] sm:$0xff] %vm1952, %v4558
        %4741 = vst.msk [vmem:[%s353 + $0xa8] sm:$0xff] %vm1952, %v4560
        %4742 = vst.msk [vmem:[%s353 + $0xb8] sm:$0xff] %vm1952, %v4562
        %4743 = vst.msk [vmem:[%s353 + $0xc8] sm:$0xff] %vm1952, %v4564
        %4744 = vst.msk [vmem:[%s353 + $0xd8] sm:$0xff] %vm1952, %v4566
        %4745 = vst.msk [vmem:[%s353 + $0xe8] sm:$0xff] %vm1952, %v4568
        %4746 = vst.msk [vmem:[%s353 + $0xf8] sm:$0xff] %vm1952, %v4570
        %4747 = vst.msk [vmem:[%s353 + $0x108] sm:$0xff] %vm1952, %v4572
        %4748 = vst.msk [vmem:[%s353 + $0x118] sm:$0xff] %vm1952, %v4574
        %4749 = vst.msk [vmem:[%s353 + $0x128] sm:$0xff] %vm1952, %v4576
        %4750 = vst.msk [vmem:[%s353 + $0x138] sm:$0xff] %vm1952, %v4578
        %4751 = vst.msk [vmem:[%s353 + $0x148] sm:$0xff] %vm1952, %v4580
        %4752 = vst.msk [vmem:[%s353 + $0x158] sm:$0xff] %vm1952, %v4582
        %4753 = vst.msk [vmem:[%s353 + $0x168] sm:$0xff] %vm1952, %v4584
        %4754 = vst.msk [vmem:[%s353 + $0x178] sm:$0xff] %vm1952, %v4586
        %4755 = vst.msk [vmem:[%s353 + $0x188] sm:$0xff] %vm1952, %v4588
        %4756 = vst.msk [vmem:[%s353 + $0x198] sm:$0xff] %vm1952, %v4590
        %4757 = vst.msk [vmem:[%s353 + $0x1a8] sm:$0xff] %vm1952, %v4592
        %4758 = vst.msk [vmem:[%s353 + $0x1b8] sm:$0xff] %vm1952, %v4594
        %4759 = vst.msk [vmem:[%s353 + $0x1c8] sm:$0xff] %vm1952, %v4596
        %4760 = vst.msk [vmem:[%s353 + $0x1d8] sm:$0xff] %vm1952, %v4598
        %4761 = vst.msk [vmem:[%s353 + $0x1e8] sm:$0xff] %vm1952, %v4600
        %4762 = vst.msk [vmem:[%s353 + $0x1f8] sm:$0xff] %vm1952, %v4602
        %4763 = vst.msk [vmem:[%s353 + $0x208] sm:$0xff] %vm1952, %v4604
        %4764 = vst.msk [vmem:[%s353 + $0x218] sm:$0xff] %vm1952, %v4606
        %4765 = vst.msk [vmem:[%s353 + $0x228] sm:$0xff] %vm1952, %v4608
        %4766 = vst.msk [vmem:[%s353 + $0x238] sm:$0xff] %vm1952, %v4610
        %4767 = vst.msk [vmem:[%s353 + $0x248] sm:$0xff] %vm1952, %v4612
        %4768 = vst.msk [vmem:[%s353 + $0x258] sm:$0xff] %vm1952, %v4614
        %4769 = vst.msk [vmem:[%s353 + $0x268] sm:$0xff] %vm1952, %v4616
        %4770 = vst.msk [vmem:[%s353 + $0x278] sm:$0xff] %vm1952, %v4618
        %4771 = vst.msk [vmem:[%s353 + $0x288] sm:$0xff] %vm1952, %v4620
        %4772 = vst.msk [vmem:[%s353 + $0x298] sm:$0xff] %vm1952, %v4622
        %4773 = vst.msk [vmem:[%s353 + $0x2a8] sm:$0xff] %vm1952, %v4624
        %4774 = vst.msk [vmem:[%s353 + $0x2b8] sm:$0xff] %vm1952, %v4626
        %4775 = vst.msk [vmem:[%s353 + $0x2c8] sm:$0xff] %vm1952, %v4628
        %4776 = vst.msk [vmem:[%s353 + $0x2d8] sm:$0xff] %vm1952, %v4630
        %4777 = vst.msk [vmem:[%s353 + $0x2e8] sm:$0xff] %vm1952, %v4632
        %4778 = vst.msk [vmem:[%s353 + $0x2f8] sm:$0xff] %vm1952, %v4634
        %4779 = vst.msk [vmem:[%s353 + $0x308] sm:$0xff] %vm1952, %v4636
        %4780 = vst.msk [vmem:[%s353 + $0x318] sm:$0xff] %vm1952, %v4638
        %4781 = vst.msk [vmem:[%s353 + $0x328] sm:$0xff] %vm1952, %v4640
        %4782 = vst.msk [vmem:[%s353 + $0x338] sm:$0xff] %vm1952, %v4642
        %4783 = vst.msk [vmem:[%s353 + $0x348] sm:$0xff] %vm1952, %v4644
        %4784 = vst.msk [vmem:[%s353 + $0x358] sm:$0xff] %vm1952, %v4646
        %4785 = vst.msk [vmem:[%s353 + $0x368] sm:$0xff] %vm1952, %v4648
        %4786 = vst.msk [vmem:[%s353 + $0x378] sm:$0xff] %vm1952, %v4650
        %4787 = vst.msk [vmem:[%s353 + $0x388] sm:$0xff] %vm1952, %v4652
        %4788 = vst.msk [vmem:[%s353 + $0x398] sm:$0xff] %vm1952, %v4654
        %4789 = vst.msk [vmem:[%s353 + $0x3a8] sm:$0xff] %vm1952, %v4656
        %4790 = vst.msk [vmem:[%s353 + $0x3b8] sm:$0xff] %vm1952, %v4658
        %4791 = vst.msk [vmem:[%s353 + $0x3c8] sm:$0xff] %vm1952, %v4660
        %4792 = vst.msk [vmem:[%s353 + $0x3d8] sm:$0xff] %vm1952, %v4662
        %4793 = vst.msk [vmem:[%s353 + $0x3e8] sm:$0xff] %vm1952, %v4664
        %4794 = vst.msk [vmem:[%s353 + $0x3f8] sm:$0xff] %vm1952, %v4666
        %v4795 = vpack.c.bf16 %v4412, %v4411
        %v4796 = vpack.c.bf16 %v4414, %v4413
        %v4797 = vpack.c.bf16 %v4416, %v4415
        %v4798 = vpack.c.bf16 %v4418, %v4417
        %v4799 = vpack.c.bf16 %v4420, %v4419
        %v4800 = vpack.c.bf16 %v4422, %v4421
        %v4801 = vpack.c.bf16 %v4424, %v4423
        %v4802 = vpack.c.bf16 %v4426, %v4425
        %v4803 = vpack.c.bf16 %v4428, %v4427
        %v4804 = vpack.c.bf16 %v4430, %v4429
        %v4805 = vpack.c.bf16 %v4432, %v4431
        %v4806 = vpack.c.bf16 %v4434, %v4433
        %v4807 = vpack.c.bf16 %v4436, %v4435
        %v4808 = vpack.c.bf16 %v4438, %v4437
        %v4809 = vpack.c.bf16 %v4440, %v4439
        %v4810 = vpack.c.bf16 %v4442, %v4441
        %v4811 = vpack.c.bf16 %v4444, %v4443
        %v4812 = vpack.c.bf16 %v4446, %v4445
        %v4813 = vpack.c.bf16 %v4448, %v4447
        %v4814 = vpack.c.bf16 %v4450, %v4449
        %v4815 = vpack.c.bf16 %v4452, %v4451
        %v4816 = vpack.c.bf16 %v4454, %v4453
        %v4817 = vpack.c.bf16 %v4456, %v4455
        %v4818 = vpack.c.bf16 %v4458, %v4457
        %v4819 = vpack.c.bf16 %v4460, %v4459
        %v4820 = vpack.c.bf16 %v4462, %v4461
        %v4821 = vpack.c.bf16 %v4464, %v4463
        %v4822 = vpack.c.bf16 %v4466, %v4465
        %v4823 = vpack.c.bf16 %v4468, %v4467
        %v4824 = vpack.c.bf16 %v4470, %v4469
        %v4825 = vpack.c.bf16 %v4472, %v4471
        %v4826 = vpack.c.bf16 %v4474, %v4473
        %v4827 = vld [vmem:[%s7] sm:$0xf]
        %v4828 = vld [vmem:[%s7 + $0x4] sm:$0xf]
        %v4829 = vld [vmem:[%s7 + $0x8] sm:$0xf]
        %v4830 = vld [vmem:[%s7 + $0xc] sm:$0xf]
        %v4831 = vld [vmem:[%s7 + $0x10] sm:$0xf]
        %v4832 = vld [vmem:[%s7 + $0x14] sm:$0xf]
        %v4833 = vld [vmem:[%s7 + $0x18] sm:$0xf]
        %v4834 = vld [vmem:[%s7 + $0x1c] sm:$0xf]
        %v4835 = vld [vmem:[%s7 + $0x20] sm:$0xf]
        %v4836 = vld [vmem:[%s7 + $0x24] sm:$0xf]
        %v4837 = vld [vmem:[%s7 + $0x28] sm:$0xf]
        %v4838 = vld [vmem:[%s7 + $0x2c] sm:$0xf]
        %v4839 = vld [vmem:[%s7 + $0x30] sm:$0xf]
        %v4840 = vld [vmem:[%s7 + $0x34] sm:$0xf]
        %v4841 = vld [vmem:[%s7 + $0x38] sm:$0xf]
        %v4842 = vld [vmem:[%s7 + $0x3c] sm:$0xf]
        %v4843 = vld [vmem:[%s9 + $0x6] sm:$0x1]
        %v4844 = vlaneseq
        %v4845 = vshrl.u32 %v4844, 7
        %v4846 = vsub.s32 0, %v4845
        %v4847 = vrot.slane %v4843, %v4846
        %v4864 = vunpack.c.l.b16 %v4827
        %v4865 = vunpack.c.l.b16 %v4828
        %v4866 = vunpack.c.l.b16 %v4829
        %v4867 = vunpack.c.l.b16 %v4830
        %v4868 = vunpack.c.l.b16 %v4831
        %v4869 = vunpack.c.l.b16 %v4832
        %v4870 = vunpack.c.l.b16 %v4833
        %v4871 = vunpack.c.l.b16 %v4834
        %v4872 = vunpack.c.l.b16 %v4835
        %v4873 = vunpack.c.l.b16 %v4836
        %v4874 = vunpack.c.l.b16 %v4837
        %v4875 = vunpack.c.l.b16 %v4838
        %v4876 = vunpack.c.l.b16 %v4839
        %v4877 = vunpack.c.l.b16 %v4840
        %v4878 = vunpack.c.l.b16 %v4841
        %v4879 = vunpack.c.l.b16 %v4842
        %v4880 = vpack.c.b16 %v4865, %v4864
        %v4881 = vpack.c.b16 %v4867, %v4866
        %v4882 = vpack.c.b16 %v4869, %v4868
        %v4883 = vpack.c.b16 %v4871, %v4870
        %v4884 = vpack.c.b16 %v4873, %v4872
        %v4885 = vpack.c.b16 %v4875, %v4874
        %v4886 = vpack.c.b16 %v4877, %v4876
        %v4887 = vpack.c.b16 %v4879, %v4878
        %4896 = vmatprep.subr.bf16.mxu0 0
        %4897 = vmatpush1.bf16.msra.mxu0 %v4887
        %4898 = vmatprep.subr.bf16.mxu0 0
        %4899 = vmatpush1.bf16.msra.mxu0 %v4886
        %4900 = vmatprep.subr.bf16.mxu0 0
        %4901 = vmatpush1.bf16.msra.mxu0 %v4885
        %4902 = vmatprep.subr.bf16.mxu0 0
        %4903 = vmatpush1.bf16.msra.mxu0 %v4884
        %4904 = vmatprep.subr.bf16.mxu0 0
        %4905 = vmatpush1.bf16.msra.mxu0 %v4883
        %4906 = vmatprep.subr.bf16.mxu0 0
        %4907 = vmatpush1.bf16.msra.mxu0 %v4882
        %4908 = vmatprep.subr.bf16.mxu0 0
        %4909 = vmatpush1.bf16.msra.mxu0 %v4881
        %4910 = vmatprep.subr.bf16.mxu0 0
        %4911 = vmatpush1.bf16.msra.mxu0 %v4880
        %4912 = vmatprep.subr.bf16.mxu0 0
        %4913 = vmatpush2.bf16.msra.mxu0 0
        %4914 = vmatprep.subr.bf16.mxu0 0
        %4915 = vmatpush2.bf16.msra.mxu0 0
        %4916 = vmatprep.subr.bf16.mxu0 0
        %4917 = vmatpush2.bf16.msra.mxu0 0
        %4918 = vmatprep.subr.bf16.mxu0 0
        %4919 = vmatpush2.bf16.msra.mxu0 0
        %4920 = vmatprep.subr.bf16.mxu0 0
        %4921 = vmatpush2.bf16.msra.mxu0 0
        %4922 = vmatprep.subr.bf16.mxu0 0
        %4923 = vmatpush2.bf16.msra.mxu0 0
        %4924 = vmatprep.subr.bf16.mxu0 0
        %4925 = vmatpush2.bf16.msra.mxu0 0
        %4926 = vmatprep.subr.bf16.mxu0 0
        %4927 = vmatpush2.bf16.msra.mxu0 0
        %4928 = vmatprep.mubr.bf16.mxu0 0
        %4929 = vmatmul.mubr.bf16.gmra.mxu0 %v4795
        %v4930 = vpop.f32.mrf.mxu0
        %v4931 = vadd.f32 %v4847, %v4930
        %v4932 = vpop.f32.mrf.mxu0
        %v4933 = vpop.f32.mrf.mxu0
        %v4934 = vadd.f32 %v4847, %v4933
        %v4935 = vpop.f32.mrf.mxu0
        %4936 = vmatprep.mubr.bf16.mxu0 0
        %4937 = vmatmul.mubr.bf16.gmra.mxu0 %v4796
        %v4938 = vpop.f32.mrf.mxu0
        %v4939 = vadd.f32 %v4847, %v4938
        %v4940 = vpop.f32.mrf.mxu0
        %v4941 = vpop.f32.mrf.mxu0
        %v4942 = vadd.f32 %v4847, %v4941
        %v4943 = vpop.f32.mrf.mxu0
        %4944 = vmatprep.mubr.bf16.mxu0 0
        %4945 = vmatmul.mubr.bf16.gmra.mxu0 %v4797
        %v4946 = vpop.f32.mrf.mxu0
        %v4947 = vadd.f32 %v4847, %v4946
        %v4948 = vpop.f32.mrf.mxu0
        %v4949 = vpop.f32.mrf.mxu0
        %v4950 = vadd.f32 %v4847, %v4949
        %v4951 = vpop.f32.mrf.mxu0
        %4952 = vmatprep.mubr.bf16.mxu0 0
        %4953 = vmatmul.mubr.bf16.gmra.mxu0 %v4798
        %v4954 = vpop.f32.mrf.mxu0
        %v4955 = vadd.f32 %v4847, %v4954
        %v4956 = vpop.f32.mrf.mxu0
        %v4957 = vpop.f32.mrf.mxu0
        %v4958 = vadd.f32 %v4847, %v4957
        %v4959 = vpop.f32.mrf.mxu0
        %4960 = vmatprep.mubr.bf16.mxu0 0
        %4961 = vmatmul.mubr.bf16.gmra.mxu0 %v4799
        %v4962 = vpop.f32.mrf.mxu0
        %v4963 = vadd.f32 %v4847, %v4962
        %v4964 = vpop.f32.mrf.mxu0
        %v4965 = vpop.f32.mrf.mxu0
        %v4966 = vadd.f32 %v4847, %v4965
        %v4967 = vpop.f32.mrf.mxu0
        %4968 = vmatprep.mubr.bf16.mxu0 0
        %4969 = vmatmul.mubr.bf16.gmra.mxu0 %v4800
        %v4970 = vpop.f32.mrf.mxu0
        %v4971 = vadd.f32 %v4847, %v4970
        %v4972 = vpop.f32.mrf.mxu0
        %v4973 = vpop.f32.mrf.mxu0
        %v4974 = vadd.f32 %v4847, %v4973
        %v4975 = vpop.f32.mrf.mxu0
        %4976 = vmatprep.mubr.bf16.mxu0 0
        %4977 = vmatmul.mubr.bf16.gmra.mxu0 %v4801
        %v4978 = vpop.f32.mrf.mxu0
        %v4979 = vadd.f32 %v4847, %v4978
        %v4980 = vpop.f32.mrf.mxu0
        %v4981 = vpop.f32.mrf.mxu0
        %v4982 = vadd.f32 %v4847, %v4981
        %v4983 = vpop.f32.mrf.mxu0
        %4984 = vmatprep.mubr.bf16.mxu0 0
        %4985 = vmatmul.mubr.bf16.gmra.mxu0 %v4802
        %v4986 = vpop.f32.mrf.mxu0
        %v4987 = vadd.f32 %v4847, %v4986
        %v4988 = vpop.f32.mrf.mxu0
        %v4989 = vpop.f32.mrf.mxu0
        %v4990 = vadd.f32 %v4847, %v4989
        %v4991 = vpop.f32.mrf.mxu0
        %4992 = vmatprep.mubr.bf16.mxu0 0
        %4993 = vmatmul.mubr.bf16.gmra.mxu0 %v4803
        %v4994 = vpop.f32.mrf.mxu0
        %v4995 = vadd.f32 %v4847, %v4994
        %v4996 = vpop.f32.mrf.mxu0
        %v4997 = vpop.f32.mrf.mxu0
        %v4998 = vadd.f32 %v4847, %v4997
        %v4999 = vpop.f32.mrf.mxu0
        %5000 = vmatprep.mubr.bf16.mxu0 0
        %5001 = vmatmul.mubr.bf16.gmra.mxu0 %v4804
        %v5002 = vpop.f32.mrf.mxu0
        %v5003 = vadd.f32 %v4847, %v5002
        %v5004 = vpop.f32.mrf.mxu0
        %v5005 = vpop.f32.mrf.mxu0
        %v5006 = vadd.f32 %v4847, %v5005
        %v5007 = vpop.f32.mrf.mxu0
        %5008 = vmatprep.mubr.bf16.mxu0 0
        %5009 = vmatmul.mubr.bf16.gmra.mxu0 %v4805
        %v5010 = vpop.f32.mrf.mxu0
        %v5011 = vadd.f32 %v4847, %v5010
        %v5012 = vpop.f32.mrf.mxu0
        %v5013 = vpop.f32.mrf.mxu0
        %v5014 = vadd.f32 %v4847, %v5013
        %v5015 = vpop.f32.mrf.mxu0
        %5016 = vmatprep.mubr.bf16.mxu0 0
        %5017 = vmatmul.mubr.bf16.gmra.mxu0 %v4806
        %v5018 = vpop.f32.mrf.mxu0
        %v5019 = vadd.f32 %v4847, %v5018
        %v5020 = vpop.f32.mrf.mxu0
        %v5021 = vpop.f32.mrf.mxu0
        %v5022 = vadd.f32 %v4847, %v5021
        %v5023 = vpop.f32.mrf.mxu0
        %5024 = vmatprep.mubr.bf16.mxu0 0
        %5025 = vmatmul.mubr.bf16.gmra.mxu0 %v4807
        %v5026 = vpop.f32.mrf.mxu0
        %v5027 = vadd.f32 %v4847, %v5026
        %v5028 = vpop.f32.mrf.mxu0
        %v5029 = vpop.f32.mrf.mxu0
        %v5030 = vadd.f32 %v4847, %v5029
        %v5031 = vpop.f32.mrf.mxu0
        %5032 = vmatprep.mubr.bf16.mxu0 0
        %5033 = vmatmul.mubr.bf16.gmra.mxu0 %v4808
        %v5034 = vpop.f32.mrf.mxu0
        %v5035 = vadd.f32 %v4847, %v5034
        %v5036 = vpop.f32.mrf.mxu0
        %v5037 = vpop.f32.mrf.mxu0
        %v5038 = vadd.f32 %v4847, %v5037
        %v5039 = vpop.f32.mrf.mxu0
        %5040 = vmatprep.mubr.bf16.mxu0 0
        %5041 = vmatmul.mubr.bf16.gmra.mxu0 %v4809
        %v5042 = vpop.f32.mrf.mxu0
        %v5043 = vadd.f32 %v4847, %v5042
        %v5044 = vpop.f32.mrf.mxu0
        %v5045 = vpop.f32.mrf.mxu0
        %v5046 = vadd.f32 %v4847, %v5045
        %v5047 = vpop.f32.mrf.mxu0
        %5048 = vmatprep.mubr.bf16.mxu0 0
        %5049 = vmatmul.mubr.bf16.gmra.mxu0 %v4810
        %v5050 = vpop.f32.mrf.mxu0
        %v5051 = vadd.f32 %v4847, %v5050
        %v5052 = vpop.f32.mrf.mxu0
        %v5053 = vpop.f32.mrf.mxu0
        %v5054 = vadd.f32 %v4847, %v5053
        %v5055 = vpop.f32.mrf.mxu0
        %5056 = vmatprep.mubr.bf16.mxu0 0
        %5057 = vmatmul.mubr.bf16.gmra.mxu0 %v4811
        %v5058 = vpop.f32.mrf.mxu0
        %v5059 = vadd.f32 %v4847, %v5058
        %v5060 = vpop.f32.mrf.mxu0
        %v5061 = vpop.f32.mrf.mxu0
        %v5062 = vadd.f32 %v4847, %v5061
        %v5063 = vpop.f32.mrf.mxu0
        %5064 = vmatprep.mubr.bf16.mxu0 0
        %5065 = vmatmul.mubr.bf16.gmra.mxu0 %v4812
        %v5066 = vpop.f32.mrf.mxu0
        %v5067 = vadd.f32 %v4847, %v5066
        %v5068 = vpop.f32.mrf.mxu0
        %v5069 = vpop.f32.mrf.mxu0
        %v5070 = vadd.f32 %v4847, %v5069
        %v5071 = vpop.f32.mrf.mxu0
        %5072 = vmatprep.mubr.bf16.mxu0 0
        %5073 = vmatmul.mubr.bf16.gmra.mxu0 %v4813
        %v5074 = vpop.f32.mrf.mxu0
        %v5075 = vadd.f32 %v4847, %v5074
        %v5076 = vpop.f32.mrf.mxu0
        %v5077 = vpop.f32.mrf.mxu0
        %v5078 = vadd.f32 %v4847, %v5077
        %v5079 = vpop.f32.mrf.mxu0
        %5080 = vmatprep.mubr.bf16.mxu0 0
        %5081 = vmatmul.mubr.bf16.gmra.mxu0 %v4814
        %v5082 = vpop.f32.mrf.mxu0
        %v5083 = vadd.f32 %v4847, %v5082
        %v5084 = vpop.f32.mrf.mxu0
        %v5085 = vpop.f32.mrf.mxu0
        %v5086 = vadd.f32 %v4847, %v5085
        %v5087 = vpop.f32.mrf.mxu0
        %5088 = vmatprep.mubr.bf16.mxu0 0
        %5089 = vmatmul.mubr.bf16.gmra.mxu0 %v4815
        %v5090 = vpop.f32.mrf.mxu0
        %v5091 = vadd.f32 %v4847, %v5090
        %v5092 = vpop.f32.mrf.mxu0
        %v5093 = vpop.f32.mrf.mxu0
        %v5094 = vadd.f32 %v4847, %v5093
        %v5095 = vpop.f32.mrf.mxu0
        %5096 = vmatprep.mubr.bf16.mxu0 0
        %5097 = vmatmul.mubr.bf16.gmra.mxu0 %v4816
        %v5098 = vpop.f32.mrf.mxu0
        %v5099 = vadd.f32 %v4847, %v5098
        %v5100 = vpop.f32.mrf.mxu0
        %v5101 = vpop.f32.mrf.mxu0
        %v5102 = vadd.f32 %v4847, %v5101
        %v5103 = vpop.f32.mrf.mxu0
        %5104 = vmatprep.mubr.bf16.mxu0 0
        %5105 = vmatmul.mubr.bf16.gmra.mxu0 %v4817
        %v5106 = vpop.f32.mrf.mxu0
        %v5107 = vadd.f32 %v4847, %v5106
        %v5108 = vpop.f32.mrf.mxu0
        %v5109 = vpop.f32.mrf.mxu0
        %v5110 = vadd.f32 %v4847, %v5109
        %v5111 = vpop.f32.mrf.mxu0
        %5112 = vmatprep.mubr.bf16.mxu0 0
        %5113 = vmatmul.mubr.bf16.gmra.mxu0 %v4818
        %v5114 = vpop.f32.mrf.mxu0
        %v5115 = vadd.f32 %v4847, %v5114
        %v5116 = vpop.f32.mrf.mxu0
        %v5117 = vpop.f32.mrf.mxu0
        %v5118 = vadd.f32 %v4847, %v5117
        %v5119 = vpop.f32.mrf.mxu0
        %5120 = vmatprep.mubr.bf16.mxu0 0
        %5121 = vmatmul.mubr.bf16.gmra.mxu0 %v4819
        %v5122 = vpop.f32.mrf.mxu0
        %v5123 = vadd.f32 %v4847, %v5122
        %v5124 = vpop.f32.mrf.mxu0
        %v5125 = vpop.f32.mrf.mxu0
        %v5126 = vadd.f32 %v4847, %v5125
        %v5127 = vpop.f32.mrf.mxu0
        %5128 = vmatprep.mubr.bf16.mxu0 0
        %5129 = vmatmul.mubr.bf16.gmra.mxu0 %v4820
        %v5130 = vpop.f32.mrf.mxu0
        %v5131 = vadd.f32 %v4847, %v5130
        %v5132 = vpop.f32.mrf.mxu0
        %v5133 = vpop.f32.mrf.mxu0
        %v5134 = vadd.f32 %v4847, %v5133
        %v5135 = vpop.f32.mrf.mxu0
        %5136 = vmatprep.mubr.bf16.mxu0 0
        %5137 = vmatmul.mubr.bf16.gmra.mxu0 %v4821
        %v5138 = vpop.f32.mrf.mxu0
        %v5139 = vadd.f32 %v4847, %v5138
        %v5140 = vpop.f32.mrf.mxu0
        %v5141 = vpop.f32.mrf.mxu0
        %v5142 = vadd.f32 %v4847, %v5141
        %v5143 = vpop.f32.mrf.mxu0
        %5144 = vmatprep.mubr.bf16.mxu0 0
        %5145 = vmatmul.mubr.bf16.gmra.mxu0 %v4822
        %v5146 = vpop.f32.mrf.mxu0
        %v5147 = vadd.f32 %v4847, %v5146
        %v5148 = vpop.f32.mrf.mxu0
        %v5149 = vpop.f32.mrf.mxu0
        %v5150 = vadd.f32 %v4847, %v5149
        %v5151 = vpop.f32.mrf.mxu0
        %5152 = vmatprep.mubr.bf16.mxu0 0
        %5153 = vmatmul.mubr.bf16.gmra.mxu0 %v4823
        %v5154 = vpop.f32.mrf.mxu0
        %v5155 = vadd.f32 %v4847, %v5154
        %v5156 = vpop.f32.mrf.mxu0
        %v5157 = vpop.f32.mrf.mxu0
        %v5158 = vadd.f32 %v4847, %v5157
        %v5159 = vpop.f32.mrf.mxu0
        %5160 = vmatprep.mubr.bf16.mxu0 0
        %5161 = vmatmul.mubr.bf16.gmra.mxu0 %v4824
        %v5162 = vpop.f32.mrf.mxu0
        %v5163 = vadd.f32 %v4847, %v5162
        %v5164 = vpop.f32.mrf.mxu0
        %v5165 = vpop.f32.mrf.mxu0
        %v5166 = vadd.f32 %v4847, %v5165
        %v5167 = vpop.f32.mrf.mxu0
        %5168 = vmatprep.mubr.bf16.mxu0 0
        %5169 = vmatmul.mubr.bf16.gmra.mxu0 %v4825
        %v5170 = vpop.f32.mrf.mxu0
        %v5171 = vadd.f32 %v4847, %v5170
        %v5172 = vpop.f32.mrf.mxu0
        %v5173 = vpop.f32.mrf.mxu0
        %v5174 = vadd.f32 %v4847, %v5173
        %v5175 = vpop.f32.mrf.mxu0
        %5176 = vmatprep.mubr.bf16.mxu0 0
        %5177 = vmatmul.mubr.bf16.gmra.mxu0 %v4826
        %v5178 = vpop.f32.mrf.mxu0
        %v5179 = vadd.f32 %v4847, %v5178
        %v5180 = vpop.f32.mrf.mxu0
        %v5181 = vpop.f32.mrf.mxu0
        %v5182 = vadd.f32 %v4847, %v5181
        %v5183 = vpop.f32.mrf.mxu0
        %5184 = vdwg.mxu0
        %v5185 = vmax.f32 %v4931, 0.0
        %v5186 = vmax.f32 %v4934, 0.0
        %v5187 = vmax.f32 %v4939, 0.0
        %v5188 = vmax.f32 %v4942, 0.0
        %v5189 = vmax.f32 %v4947, 0.0
        %v5190 = vmax.f32 %v4950, 0.0
        %v5191 = vmax.f32 %v4955, 0.0
        %v5192 = vmax.f32 %v4958, 0.0
        %v5193 = vmax.f32 %v4963, 0.0
        %v5194 = vmax.f32 %v4966, 0.0
        %v5195 = vmax.f32 %v4971, 0.0
        %v5196 = vmax.f32 %v4974, 0.0
        %v5197 = vmax.f32 %v4979, 0.0
        %v5198 = vmax.f32 %v4982, 0.0
        %v5199 = vmax.f32 %v4987, 0.0
        %v5200 = vmax.f32 %v4990, 0.0
        %v5201 = vmax.f32 %v4995, 0.0
        %v5202 = vmax.f32 %v4998, 0.0
        %v5203 = vmax.f32 %v5003, 0.0
        %v5204 = vmax.f32 %v5006, 0.0
        %v5205 = vmax.f32 %v5011, 0.0
        %v5206 = vmax.f32 %v5014, 0.0
        %v5207 = vmax.f32 %v5019, 0.0
        %v5208 = vmax.f32 %v5022, 0.0
        %v5209 = vmax.f32 %v5027, 0.0
        %v5210 = vmax.f32 %v5030, 0.0
        %v5211 = vmax.f32 %v5035, 0.0
        %v5212 = vmax.f32 %v5038, 0.0
        %v5213 = vmax.f32 %v5043, 0.0
        %v5214 = vmax.f32 %v5046, 0.0
        %v5215 = vmax.f32 %v5051, 0.0
        %v5216 = vmax.f32 %v5054, 0.0
        %v5217 = vmax.f32 %v5059, 0.0
        %v5218 = vmax.f32 %v5062, 0.0
        %v5219 = vmax.f32 %v5067, 0.0
        %v5220 = vmax.f32 %v5070, 0.0
        %v5221 = vmax.f32 %v5075, 0.0
        %v5222 = vmax.f32 %v5078, 0.0
        %v5223 = vmax.f32 %v5083, 0.0
        %v5224 = vmax.f32 %v5086, 0.0
        %v5225 = vmax.f32 %v5091, 0.0
        %v5226 = vmax.f32 %v5094, 0.0
        %v5227 = vmax.f32 %v5099, 0.0
        %v5228 = vmax.f32 %v5102, 0.0
        %v5229 = vmax.f32 %v5107, 0.0
        %v5230 = vmax.f32 %v5110, 0.0
        %v5231 = vmax.f32 %v5115, 0.0
        %v5232 = vmax.f32 %v5118, 0.0
        %v5233 = vmax.f32 %v5123, 0.0
        %v5234 = vmax.f32 %v5126, 0.0
        %v5235 = vmax.f32 %v5131, 0.0
        %v5236 = vmax.f32 %v5134, 0.0
        %v5237 = vmax.f32 %v5139, 0.0
        %v5238 = vmax.f32 %v5142, 0.0
        %v5239 = vmax.f32 %v5147, 0.0
        %v5240 = vmax.f32 %v5150, 0.0
        %v5241 = vmax.f32 %v5155, 0.0
        %v5242 = vmax.f32 %v5158, 0.0
        %v5243 = vmax.f32 %v5163, 0.0
        %v5244 = vmax.f32 %v5166, 0.0
        %v5245 = vmax.f32 %v5171, 0.0
        %v5246 = vmax.f32 %v5174, 0.0
        %v5247 = vmax.f32 %v5179, 0.0
        %v5248 = vmax.f32 %v5182, 0.0
        %5313 = vrot.lane.b32.xlu0 %v5185, 96
        %v5314 = vpop.permute.xlu0 %5313
        %5315 = vrot.lane.b32.xlu0 %v5186, 96
        %v5316 = vpop.permute.xlu0 %5315
        %5317 = vrot.lane.b32.xlu0 %v5187, 96
        %v5318 = vpop.permute.xlu0 %5317
        %5319 = vrot.lane.b32.xlu0 %v5188, 96
        %v5320 = vpop.permute.xlu0 %5319
        %5321 = vrot.lane.b32.xlu0 %v5189, 96
        %v5322 = vpop.permute.xlu0 %5321
        %5323 = vrot.lane.b32.xlu0 %v5190, 96
        %v5324 = vpop.permute.xlu0 %5323
        %5325 = vrot.lane.b32.xlu0 %v5191, 96
        %v5326 = vpop.permute.xlu0 %5325
        %5327 = vrot.lane.b32.xlu0 %v5192, 96
        %v5328 = vpop.permute.xlu0 %5327
        %5329 = vrot.lane.b32.xlu0 %v5193, 96
        %v5330 = vpop.permute.xlu0 %5329
        %5331 = vrot.lane.b32.xlu0 %v5194, 96
        %v5332 = vpop.permute.xlu0 %5331
        %5333 = vrot.lane.b32.xlu0 %v5195, 96
        %v5334 = vpop.permute.xlu0 %5333
        %5335 = vrot.lane.b32.xlu0 %v5196, 96
        %v5336 = vpop.permute.xlu0 %5335
        %5337 = vrot.lane.b32.xlu0 %v5197, 96
        %v5338 = vpop.permute.xlu0 %5337
        %5339 = vrot.lane.b32.xlu0 %v5198, 96
        %v5340 = vpop.permute.xlu0 %5339
        %5341 = vrot.lane.b32.xlu0 %v5199, 96
        %v5342 = vpop.permute.xlu0 %5341
        %5343 = vrot.lane.b32.xlu0 %v5200, 96
        %v5344 = vpop.permute.xlu0 %5343
        %5345 = vrot.lane.b32.xlu0 %v5201, 96
        %v5346 = vpop.permute.xlu0 %5345
        %5347 = vrot.lane.b32.xlu0 %v5202, 96
        %v5348 = vpop.permute.xlu0 %5347
        %5349 = vrot.lane.b32.xlu0 %v5203, 96
        %v5350 = vpop.permute.xlu0 %5349
        %5351 = vrot.lane.b32.xlu0 %v5204, 96
        %v5352 = vpop.permute.xlu0 %5351
        %5353 = vrot.lane.b32.xlu0 %v5205, 96
        %v5354 = vpop.permute.xlu0 %5353
        %5355 = vrot.lane.b32.xlu0 %v5206, 96
        %v5356 = vpop.permute.xlu0 %5355
        %5357 = vrot.lane.b32.xlu0 %v5207, 96
        %v5358 = vpop.permute.xlu0 %5357
        %5359 = vrot.lane.b32.xlu0 %v5208, 96
        %v5360 = vpop.permute.xlu0 %5359
        %5361 = vrot.lane.b32.xlu0 %v5209, 96
        %v5362 = vpop.permute.xlu0 %5361
        %5363 = vrot.lane.b32.xlu0 %v5210, 96
        %v5364 = vpop.permute.xlu0 %5363
        %5365 = vrot.lane.b32.xlu0 %v5211, 96
        %v5366 = vpop.permute.xlu0 %5365
        %5367 = vrot.lane.b32.xlu0 %v5212, 96
        %v5368 = vpop.permute.xlu0 %5367
        %5369 = vrot.lane.b32.xlu0 %v5213, 96
        %v5370 = vpop.permute.xlu0 %5369
        %5371 = vrot.lane.b32.xlu0 %v5214, 96
        %v5372 = vpop.permute.xlu0 %5371
        %5373 = vrot.lane.b32.xlu0 %v5215, 96
        %v5374 = vpop.permute.xlu0 %5373
        %5375 = vrot.lane.b32.xlu0 %v5216, 96
        %v5376 = vpop.permute.xlu0 %5375
        %5377 = vrot.lane.b32.xlu0 %v5217, 96
        %v5378 = vpop.permute.xlu0 %5377
        %5379 = vrot.lane.b32.xlu0 %v5218, 96
        %v5380 = vpop.permute.xlu0 %5379
        %5381 = vrot.lane.b32.xlu0 %v5219, 96
        %v5382 = vpop.permute.xlu0 %5381
        %5383 = vrot.lane.b32.xlu0 %v5220, 96
        %v5384 = vpop.permute.xlu0 %5383
        %5385 = vrot.lane.b32.xlu0 %v5221, 96
        %v5386 = vpop.permute.xlu0 %5385
        %5387 = vrot.lane.b32.xlu0 %v5222, 96
        %v5388 = vpop.permute.xlu0 %5387
        %5389 = vrot.lane.b32.xlu0 %v5223, 96
        %v5390 = vpop.permute.xlu0 %5389
        %5391 = vrot.lane.b32.xlu0 %v5224, 96
        %v5392 = vpop.permute.xlu0 %5391
        %5393 = vrot.lane.b32.xlu0 %v5225, 96
        %v5394 = vpop.permute.xlu0 %5393
        %5395 = vrot.lane.b32.xlu0 %v5226, 96
        %v5396 = vpop.permute.xlu0 %5395
        %5397 = vrot.lane.b32.xlu0 %v5227, 96
        %v5398 = vpop.permute.xlu0 %5397
        %5399 = vrot.lane.b32.xlu0 %v5228, 96
        %v5400 = vpop.permute.xlu0 %5399
        %5401 = vrot.lane.b32.xlu0 %v5229, 96
        %v5402 = vpop.permute.xlu0 %5401
        %5403 = vrot.lane.b32.xlu0 %v5230, 96
        %v5404 = vpop.permute.xlu0 %5403
        %5405 = vrot.lane.b32.xlu0 %v5231, 96
        %v5406 = vpop.permute.xlu0 %5405
        %5407 = vrot.lane.b32.xlu0 %v5232, 96
        %v5408 = vpop.permute.xlu0 %5407
        %5409 = vrot.lane.b32.xlu0 %v5233, 96
        %v5410 = vpop.permute.xlu0 %5409
        %5411 = vrot.lane.b32.xlu0 %v5234, 96
        %v5412 = vpop.permute.xlu0 %5411
        %5413 = vrot.lane.b32.xlu0 %v5235, 96
        %v5414 = vpop.permute.xlu0 %5413
        %5415 = vrot.lane.b32.xlu0 %v5236, 96
        %v5416 = vpop.permute.xlu0 %5415
        %5417 = vrot.lane.b32.xlu0 %v5237, 96
        %v5418 = vpop.permute.xlu0 %5417
        %5419 = vrot.lane.b32.xlu0 %v5238, 96
        %v5420 = vpop.permute.xlu0 %5419
        %5421 = vrot.lane.b32.xlu0 %v5239, 96
        %v5422 = vpop.permute.xlu0 %5421
        %5423 = vrot.lane.b32.xlu0 %v5240, 96
        %v5424 = vpop.permute.xlu0 %5423
        %5425 = vrot.lane.b32.xlu0 %v5241, 96
        %v5426 = vpop.permute.xlu0 %5425
        %5427 = vrot.lane.b32.xlu0 %v5242, 96
        %v5428 = vpop.permute.xlu0 %5427
        %5429 = vrot.lane.b32.xlu0 %v5243, 96
        %v5430 = vpop.permute.xlu0 %5429
        %5431 = vrot.lane.b32.xlu0 %v5244, 96
        %v5432 = vpop.permute.xlu0 %5431
        %5433 = vrot.lane.b32.xlu0 %v5245, 96
        %v5434 = vpop.permute.xlu0 %5433
        %5435 = vrot.lane.b32.xlu0 %v5246, 96
        %v5436 = vpop.permute.xlu0 %5435
        %5437 = vrot.lane.b32.xlu0 %v5247, 96
        %v5438 = vpop.permute.xlu0 %5437
        %5439 = vrot.lane.b32.xlu0 %v5248, 96
        %v5440 = vpop.permute.xlu0 %5439
        %5505 = vst.msk [vmem:[%s353 + $0x8] sm:$0xff] %vm2727, %v5314
        %5506 = vst.msk [vmem:[%s353 + $0x18] sm:$0xff] %vm2727, %v5316
        %5507 = vst.msk [vmem:[%s353 + $0x28] sm:$0xff] %vm2727, %v5318
        %5508 = vst.msk [vmem:[%s353 + $0x38] sm:$0xff] %vm2727, %v5320
        %5509 = vst.msk [vmem:[%s353 + $0x48] sm:$0xff] %vm2727, %v5322
        %5510 = vst.msk [vmem:[%s353 + $0x58] sm:$0xff] %vm2727, %v5324
        %5511 = vst.msk [vmem:[%s353 + $0x68] sm:$0xff] %vm2727, %v5326
        %5512 = vst.msk [vmem:[%s353 + $0x78] sm:$0xff] %vm2727, %v5328
        %5513 = vst.msk [vmem:[%s353 + $0x88] sm:$0xff] %vm2727, %v5330
        %5514 = vst.msk [vmem:[%s353 + $0x98] sm:$0xff] %vm2727, %v5332
        %5515 = vst.msk [vmem:[%s353 + $0xa8] sm:$0xff] %vm2727, %v5334
        %5516 = vst.msk [vmem:[%s353 + $0xb8] sm:$0xff] %vm2727, %v5336
        %5517 = vst.msk [vmem:[%s353 + $0xc8] sm:$0xff] %vm2727, %v5338
        %5518 = vst.msk [vmem:[%s353 + $0xd8] sm:$0xff] %vm2727, %v5340
        %5519 = vst.msk [vmem:[%s353 + $0xe8] sm:$0xff] %vm2727, %v5342
        %5520 = vst.msk [vmem:[%s353 + $0xf8] sm:$0xff] %vm2727, %v5344
        %5521 = vst.msk [vmem:[%s353 + $0x108] sm:$0xff] %vm2727, %v5346
        %5522 = vst.msk [vmem:[%s353 + $0x118] sm:$0xff] %vm2727, %v5348
        %5523 = vst.msk [vmem:[%s353 + $0x128] sm:$0xff] %vm2727, %v5350
        %5524 = vst.msk [vmem:[%s353 + $0x138] sm:$0xff] %vm2727, %v5352
        %5525 = vst.msk [vmem:[%s353 + $0x148] sm:$0xff] %vm2727, %v5354
        %5526 = vst.msk [vmem:[%s353 + $0x158] sm:$0xff] %vm2727, %v5356
        %5527 = vst.msk [vmem:[%s353 + $0x168] sm:$0xff] %vm2727, %v5358
        %5528 = vst.msk [vmem:[%s353 + $0x178] sm:$0xff] %vm2727, %v5360
        %5529 = vst.msk [vmem:[%s353 + $0x188] sm:$0xff] %vm2727, %v5362
        %5530 = vst.msk [vmem:[%s353 + $0x198] sm:$0xff] %vm2727, %v5364
        %5531 = vst.msk [vmem:[%s353 + $0x1a8] sm:$0xff] %vm2727, %v5366
        %5532 = vst.msk [vmem:[%s353 + $0x1b8] sm:$0xff] %vm2727, %v5368
        %5533 = vst.msk [vmem:[%s353 + $0x1c8] sm:$0xff] %vm2727, %v5370
        %5534 = vst.msk [vmem:[%s353 + $0x1d8] sm:$0xff] %vm2727, %v5372
        %5535 = vst.msk [vmem:[%s353 + $0x1e8] sm:$0xff] %vm2727, %v5374
        %5536 = vst.msk [vmem:[%s353 + $0x1f8] sm:$0xff] %vm2727, %v5376
        %5537 = vst.msk [vmem:[%s353 + $0x208] sm:$0xff] %vm2727, %v5378
        %5538 = vst.msk [vmem:[%s353 + $0x218] sm:$0xff] %vm2727, %v5380
        %5539 = vst.msk [vmem:[%s353 + $0x228] sm:$0xff] %vm2727, %v5382
        %5540 = vst.msk [vmem:[%s353 + $0x238] sm:$0xff] %vm2727, %v5384
        %5541 = vst.msk [vmem:[%s353 + $0x248] sm:$0xff] %vm2727, %v5386
        %5542 = vst.msk [vmem:[%s353 + $0x258] sm:$0xff] %vm2727, %v5388
        %5543 = vst.msk [vmem:[%s353 + $0x268] sm:$0xff] %vm2727, %v5390
        %5544 = vst.msk [vmem:[%s353 + $0x278] sm:$0xff] %vm2727, %v5392
        %5545 = vst.msk [vmem:[%s353 + $0x288] sm:$0xff] %vm2727, %v5394
        %5546 = vst.msk [vmem:[%s353 + $0x298] sm:$0xff] %vm2727, %v5396
        %5547 = vst.msk [vmem:[%s353 + $0x2a8] sm:$0xff] %vm2727, %v5398
        %5548 = vst.msk [vmem:[%s353 + $0x2b8] sm:$0xff] %vm2727, %v5400
        %5549 = vst.msk [vmem:[%s353 + $0x2c8] sm:$0xff] %vm2727, %v5402
        %5550 = vst.msk [vmem:[%s353 + $0x2d8] sm:$0xff] %vm2727, %v5404
        %5551 = vst.msk [vmem:[%s353 + $0x2e8] sm:$0xff] %vm2727, %v5406
        %5552 = vst.msk [vmem:[%s353 + $0x2f8] sm:$0xff] %vm2727, %v5408
        %5553 = vst.msk [vmem:[%s353 + $0x308] sm:$0xff] %vm2727, %v5410
        %5554 = vst.msk [vmem:[%s353 + $0x318] sm:$0xff] %vm2727, %v5412
        %5555 = vst.msk [vmem:[%s353 + $0x328] sm:$0xff] %vm2727, %v5414
        %5556 = vst.msk [vmem:[%s353 + $0x338] sm:$0xff] %vm2727, %v5416
        %5557 = vst.msk [vmem:[%s353 + $0x348] sm:$0xff] %vm2727, %v5418
        %5558 = vst.msk [vmem:[%s353 + $0x358] sm:$0xff] %vm2727, %v5420
        %5559 = vst.msk [vmem:[%s353 + $0x368] sm:$0xff] %vm2727, %v5422
        %5560 = vst.msk [vmem:[%s353 + $0x378] sm:$0xff] %vm2727, %v5424
        %5561 = vst.msk [vmem:[%s353 + $0x388] sm:$0xff] %vm2727, %v5426
        %5562 = vst.msk [vmem:[%s353 + $0x398] sm:$0xff] %vm2727, %v5428
        %5563 = vst.msk [vmem:[%s353 + $0x3a8] sm:$0xff] %vm2727, %v5430
        %5564 = vst.msk [vmem:[%s353 + $0x3b8] sm:$0xff] %vm2727, %v5432
        %5565 = vst.msk [vmem:[%s353 + $0x3c8] sm:$0xff] %vm2727, %v5434
        %5566 = vst.msk [vmem:[%s353 + $0x3d8] sm:$0xff] %vm2727, %v5436
        %5567 = vst.msk [vmem:[%s353 + $0x3e8] sm:$0xff] %vm2727, %v5438
        %5568 = vst.msk [vmem:[%s353 + $0x3f8] sm:$0xff] %vm2727, %v5440
        %v5569 = vpack.c.bf16 %v5186, %v5185
        %v5570 = vpack.c.bf16 %v5188, %v5187
        %v5571 = vpack.c.bf16 %v5190, %v5189
        %v5572 = vpack.c.bf16 %v5192, %v5191
        %v5573 = vpack.c.bf16 %v5194, %v5193
        %v5574 = vpack.c.bf16 %v5196, %v5195
        %v5575 = vpack.c.bf16 %v5198, %v5197
        %v5576 = vpack.c.bf16 %v5200, %v5199
        %v5577 = vpack.c.bf16 %v5202, %v5201
        %v5578 = vpack.c.bf16 %v5204, %v5203
        %v5579 = vpack.c.bf16 %v5206, %v5205
        %v5580 = vpack.c.bf16 %v5208, %v5207
        %v5581 = vpack.c.bf16 %v5210, %v5209
        %v5582 = vpack.c.bf16 %v5212, %v5211
        %v5583 = vpack.c.bf16 %v5214, %v5213
        %v5584 = vpack.c.bf16 %v5216, %v5215
        %v5585 = vpack.c.bf16 %v5218, %v5217
        %v5586 = vpack.c.bf16 %v5220, %v5219
        %v5587 = vpack.c.bf16 %v5222, %v5221
        %v5588 = vpack.c.bf16 %v5224, %v5223
        %v5589 = vpack.c.bf16 %v5226, %v5225
        %v5590 = vpack.c.bf16 %v5228, %v5227
        %v5591 = vpack.c.bf16 %v5230, %v5229
        %v5592 = vpack.c.bf16 %v5232, %v5231
        %v5593 = vpack.c.bf16 %v5234, %v5233
        %v5594 = vpack.c.bf16 %v5236, %v5235
        %v5595 = vpack.c.bf16 %v5238, %v5237
        %v5596 = vpack.c.bf16 %v5240, %v5239
        %v5597 = vpack.c.bf16 %v5242, %v5241
        %v5598 = vpack.c.bf16 %v5244, %v5243
        %v5599 = vpack.c.bf16 %v5246, %v5245
        %v5600 = vpack.c.bf16 %v5248, %v5247
        %v5601 = vld [vmem:[%s8] sm:$0xf]
        %v5602 = vld [vmem:[%s8 + $0x4] sm:$0xf]
        %v5603 = vld [vmem:[%s8 + $0x8] sm:$0xf]
        %v5604 = vld [vmem:[%s8 + $0xc] sm:$0xf]
        %v5605 = vld [vmem:[%s8 + $0x10] sm:$0xf]
        %v5606 = vld [vmem:[%s8 + $0x14] sm:$0xf]
        %v5607 = vld [vmem:[%s8 + $0x18] sm:$0xf]
        %v5608 = vld [vmem:[%s8 + $0x1c] sm:$0xf]
        %v5609 = vld [vmem:[%s8 + $0x20] sm:$0xf]
        %v5610 = vld [vmem:[%s8 + $0x24] sm:$0xf]
        %v5611 = vld [vmem:[%s8 + $0x28] sm:$0xf]
        %v5612 = vld [vmem:[%s8 + $0x2c] sm:$0xf]
        %v5613 = vld [vmem:[%s8 + $0x30] sm:$0xf]
        %v5614 = vld [vmem:[%s8 + $0x34] sm:$0xf]
        %v5615 = vld [vmem:[%s8 + $0x38] sm:$0xf]
        %v5616 = vld [vmem:[%s8 + $0x3c] sm:$0xf]
        %v5617 = vld [vmem:[%s9 + $0x7] sm:$0x1]
        %v5618 = vlaneseq
        %v5619 = vshrl.u32 %v5618, 7
        %v5620 = vsub.s32 0, %v5619
        %v5621 = vrot.slane %v5617, %v5620
        %v5638 = vunpack.c.l.b16 %v5601
        %v5639 = vunpack.c.l.b16 %v5602
        %v5640 = vunpack.c.l.b16 %v5603
        %v5641 = vunpack.c.l.b16 %v5604
        %v5642 = vunpack.c.l.b16 %v5605
        %v5643 = vunpack.c.l.b16 %v5606
        %v5644 = vunpack.c.l.b16 %v5607
        %v5645 = vunpack.c.l.b16 %v5608
        %v5646 = vunpack.c.l.b16 %v5609
        %v5647 = vunpack.c.l.b16 %v5610
        %v5648 = vunpack.c.l.b16 %v5611
        %v5649 = vunpack.c.l.b16 %v5612
        %v5650 = vunpack.c.l.b16 %v5613
        %v5651 = vunpack.c.l.b16 %v5614
        %v5652 = vunpack.c.l.b16 %v5615
        %v5653 = vunpack.c.l.b16 %v5616
        %v5654 = vpack.c.b16 %v5639, %v5638
        %v5655 = vpack.c.b16 %v5641, %v5640
        %v5656 = vpack.c.b16 %v5643, %v5642
        %v5657 = vpack.c.b16 %v5645, %v5644
        %v5658 = vpack.c.b16 %v5647, %v5646
        %v5659 = vpack.c.b16 %v5649, %v5648
        %v5660 = vpack.c.b16 %v5651, %v5650
        %v5661 = vpack.c.b16 %v5653, %v5652
        %5670 = vmatprep.subr.bf16.mxu0 0
        %5671 = vmatpush1.bf16.msra.mxu0 %v5661
        %5672 = vmatprep.subr.bf16.mxu0 0
        %5673 = vmatpush1.bf16.msra.mxu0 %v5660
        %5674 = vmatprep.subr.bf16.mxu0 0
        %5675 = vmatpush1.bf16.msra.mxu0 %v5659
        %5676 = vmatprep.subr.bf16.mxu0 0
        %5677 = vmatpush1.bf16.msra.mxu0 %v5658
        %5678 = vmatprep.subr.bf16.mxu0 0
        %5679 = vmatpush1.bf16.msra.mxu0 %v5657
        %5680 = vmatprep.subr.bf16.mxu0 0
        %5681 = vmatpush1.bf16.msra.mxu0 %v5656
        %5682 = vmatprep.subr.bf16.mxu0 0
        %5683 = vmatpush1.bf16.msra.mxu0 %v5655
        %5684 = vmatprep.subr.bf16.mxu0 0
        %5685 = vmatpush1.bf16.msra.mxu0 %v5654
        %5686 = vmatprep.subr.bf16.mxu0 0
        %5687 = vmatpush2.bf16.msra.mxu0 0
        %5688 = vmatprep.subr.bf16.mxu0 0
        %5689 = vmatpush2.bf16.msra.mxu0 0
        %5690 = vmatprep.subr.bf16.mxu0 0
        %5691 = vmatpush2.bf16.msra.mxu0 0
        %5692 = vmatprep.subr.bf16.mxu0 0
        %5693 = vmatpush2.bf16.msra.mxu0 0
        %5694 = vmatprep.subr.bf16.mxu0 0
        %5695 = vmatpush2.bf16.msra.mxu0 0
        %5696 = vmatprep.subr.bf16.mxu0 0
        %5697 = vmatpush2.bf16.msra.mxu0 0
        %5698 = vmatprep.subr.bf16.mxu0 0
        %5699 = vmatpush2.bf16.msra.mxu0 0
        %5700 = vmatprep.subr.bf16.mxu0 0
        %5701 = vmatpush2.bf16.msra.mxu0 0
        %5702 = vmatprep.mubr.bf16.mxu0 0
        %5703 = vmatmul.mubr.bf16.gmra.mxu0 %v5569
        %v5704 = vpop.f32.mrf.mxu0
        %v5705 = vadd.f32 %v5621, %v5704
        %v5706 = vpop.f32.mrf.mxu0
        %v5707 = vpop.f32.mrf.mxu0
        %v5708 = vadd.f32 %v5621, %v5707
        %v5709 = vpop.f32.mrf.mxu0
        %5710 = vmatprep.mubr.bf16.mxu0 0
        %5711 = vmatmul.mubr.bf16.gmra.mxu0 %v5570
        %v5712 = vpop.f32.mrf.mxu0
        %v5713 = vadd.f32 %v5621, %v5712
        %v5714 = vpop.f32.mrf.mxu0
        %v5715 = vpop.f32.mrf.mxu0
        %v5716 = vadd.f32 %v5621, %v5715
        %v5717 = vpop.f32.mrf.mxu0
        %5718 = vmatprep.mubr.bf16.mxu0 0
        %5719 = vmatmul.mubr.bf16.gmra.mxu0 %v5571
        %v5720 = vpop.f32.mrf.mxu0
        %v5721 = vadd.f32 %v5621, %v5720
        %v5722 = vpop.f32.mrf.mxu0
        %v5723 = vpop.f32.mrf.mxu0
        %v5724 = vadd.f32 %v5621, %v5723
        %v5725 = vpop.f32.mrf.mxu0
        %5726 = vmatprep.mubr.bf16.mxu0 0
        %5727 = vmatmul.mubr.bf16.gmra.mxu0 %v5572
        %v5728 = vpop.f32.mrf.mxu0
        %v5729 = vadd.f32 %v5621, %v5728
        %v5730 = vpop.f32.mrf.mxu0
        %v5731 = vpop.f32.mrf.mxu0
        %v5732 = vadd.f32 %v5621, %v5731
        %v5733 = vpop.f32.mrf.mxu0
        %5734 = vmatprep.mubr.bf16.mxu0 0
        %5735 = vmatmul.mubr.bf16.gmra.mxu0 %v5573
        %v5736 = vpop.f32.mrf.mxu0
        %v5737 = vadd.f32 %v5621, %v5736
        %v5738 = vpop.f32.mrf.mxu0
        %v5739 = vpop.f32.mrf.mxu0
        %v5740 = vadd.f32 %v5621, %v5739
        %v5741 = vpop.f32.mrf.mxu0
        %5742 = vmatprep.mubr.bf16.mxu0 0
        %5743 = vmatmul.mubr.bf16.gmra.mxu0 %v5574
        %v5744 = vpop.f32.mrf.mxu0
        %v5745 = vadd.f32 %v5621, %v5744
        %v5746 = vpop.f32.mrf.mxu0
        %v5747 = vpop.f32.mrf.mxu0
        %v5748 = vadd.f32 %v5621, %v5747
        %v5749 = vpop.f32.mrf.mxu0
        %5750 = vmatprep.mubr.bf16.mxu0 0
        %5751 = vmatmul.mubr.bf16.gmra.mxu0 %v5575
        %v5752 = vpop.f32.mrf.mxu0
        %v5753 = vadd.f32 %v5621, %v5752
        %v5754 = vpop.f32.mrf.mxu0
        %v5755 = vpop.f32.mrf.mxu0
        %v5756 = vadd.f32 %v5621, %v5755
        %v5757 = vpop.f32.mrf.mxu0
        %5758 = vmatprep.mubr.bf16.mxu0 0
        %5759 = vmatmul.mubr.bf16.gmra.mxu0 %v5576
        %v5760 = vpop.f32.mrf.mxu0
        %v5761 = vadd.f32 %v5621, %v5760
        %v5762 = vpop.f32.mrf.mxu0
        %v5763 = vpop.f32.mrf.mxu0
        %v5764 = vadd.f32 %v5621, %v5763
        %v5765 = vpop.f32.mrf.mxu0
        %5766 = vmatprep.mubr.bf16.mxu0 0
        %5767 = vmatmul.mubr.bf16.gmra.mxu0 %v5577
        %v5768 = vpop.f32.mrf.mxu0
        %v5769 = vadd.f32 %v5621, %v5768
        %v5770 = vpop.f32.mrf.mxu0
        %v5771 = vpop.f32.mrf.mxu0
        %v5772 = vadd.f32 %v5621, %v5771
        %v5773 = vpop.f32.mrf.mxu0
        %5774 = vmatprep.mubr.bf16.mxu0 0
        %5775 = vmatmul.mubr.bf16.gmra.mxu0 %v5578
        %v5776 = vpop.f32.mrf.mxu0
        %v5777 = vadd.f32 %v5621, %v5776
        %v5778 = vpop.f32.mrf.mxu0
        %v5779 = vpop.f32.mrf.mxu0
        %v5780 = vadd.f32 %v5621, %v5779
        %v5781 = vpop.f32.mrf.mxu0
        %5782 = vmatprep.mubr.bf16.mxu0 0
        %5783 = vmatmul.mubr.bf16.gmra.mxu0 %v5579
        %v5784 = vpop.f32.mrf.mxu0
        %v5785 = vadd.f32 %v5621, %v5784
        %v5786 = vpop.f32.mrf.mxu0
        %v5787 = vpop.f32.mrf.mxu0
        %v5788 = vadd.f32 %v5621, %v5787
        %v5789 = vpop.f32.mrf.mxu0
        %5790 = vmatprep.mubr.bf16.mxu0 0
        %5791 = vmatmul.mubr.bf16.gmra.mxu0 %v5580
        %v5792 = vpop.f32.mrf.mxu0
        %v5793 = vadd.f32 %v5621, %v5792
        %v5794 = vpop.f32.mrf.mxu0
        %v5795 = vpop.f32.mrf.mxu0
        %v5796 = vadd.f32 %v5621, %v5795
        %v5797 = vpop.f32.mrf.mxu0
        %5798 = vmatprep.mubr.bf16.mxu0 0
        %5799 = vmatmul.mubr.bf16.gmra.mxu0 %v5581
        %v5800 = vpop.f32.mrf.mxu0
        %v5801 = vadd.f32 %v5621, %v5800
        %v5802 = vpop.f32.mrf.mxu0
        %v5803 = vpop.f32.mrf.mxu0
        %v5804 = vadd.f32 %v5621, %v5803
        %v5805 = vpop.f32.mrf.mxu0
        %5806 = vmatprep.mubr.bf16.mxu0 0
        %5807 = vmatmul.mubr.bf16.gmra.mxu0 %v5582
        %v5808 = vpop.f32.mrf.mxu0
        %v5809 = vadd.f32 %v5621, %v5808
        %v5810 = vpop.f32.mrf.mxu0
        %v5811 = vpop.f32.mrf.mxu0
        %v5812 = vadd.f32 %v5621, %v5811
        %v5813 = vpop.f32.mrf.mxu0
        %5814 = vmatprep.mubr.bf16.mxu0 0
        %5815 = vmatmul.mubr.bf16.gmra.mxu0 %v5583
        %v5816 = vpop.f32.mrf.mxu0
        %v5817 = vadd.f32 %v5621, %v5816
        %v5818 = vpop.f32.mrf.mxu0
        %v5819 = vpop.f32.mrf.mxu0
        %v5820 = vadd.f32 %v5621, %v5819
        %v5821 = vpop.f32.mrf.mxu0
        %5822 = vmatprep.mubr.bf16.mxu0 0
        %5823 = vmatmul.mubr.bf16.gmra.mxu0 %v5584
        %v5824 = vpop.f32.mrf.mxu0
        %v5825 = vadd.f32 %v5621, %v5824
        %v5826 = vpop.f32.mrf.mxu0
        %v5827 = vpop.f32.mrf.mxu0
        %v5828 = vadd.f32 %v5621, %v5827
        %v5829 = vpop.f32.mrf.mxu0
        %5830 = vmatprep.mubr.bf16.mxu0 0
        %5831 = vmatmul.mubr.bf16.gmra.mxu0 %v5585
        %v5832 = vpop.f32.mrf.mxu0
        %v5833 = vadd.f32 %v5621, %v5832
        %v5834 = vpop.f32.mrf.mxu0
        %v5835 = vpop.f32.mrf.mxu0
        %v5836 = vadd.f32 %v5621, %v5835
        %v5837 = vpop.f32.mrf.mxu0
        %5838 = vmatprep.mubr.bf16.mxu0 0
        %5839 = vmatmul.mubr.bf16.gmra.mxu0 %v5586
        %v5840 = vpop.f32.mrf.mxu0
        %v5841 = vadd.f32 %v5621, %v5840
        %v5842 = vpop.f32.mrf.mxu0
        %v5843 = vpop.f32.mrf.mxu0
        %v5844 = vadd.f32 %v5621, %v5843
        %v5845 = vpop.f32.mrf.mxu0
        %5846 = vmatprep.mubr.bf16.mxu0 0
        %5847 = vmatmul.mubr.bf16.gmra.mxu0 %v5587
        %v5848 = vpop.f32.mrf.mxu0
        %v5849 = vadd.f32 %v5621, %v5848
        %v5850 = vpop.f32.mrf.mxu0
        %v5851 = vpop.f32.mrf.mxu0
        %v5852 = vadd.f32 %v5621, %v5851
        %v5853 = vpop.f32.mrf.mxu0
        %5854 = vmatprep.mubr.bf16.mxu0 0
        %5855 = vmatmul.mubr.bf16.gmra.mxu0 %v5588
        %v5856 = vpop.f32.mrf.mxu0
        %v5857 = vadd.f32 %v5621, %v5856
        %v5858 = vpop.f32.mrf.mxu0
        %v5859 = vpop.f32.mrf.mxu0
        %v5860 = vadd.f32 %v5621, %v5859
        %v5861 = vpop.f32.mrf.mxu0
        %5862 = vmatprep.mubr.bf16.mxu0 0
        %5863 = vmatmul.mubr.bf16.gmra.mxu0 %v5589
        %v5864 = vpop.f32.mrf.mxu0
        %v5865 = vadd.f32 %v5621, %v5864
        %v5866 = vpop.f32.mrf.mxu0
        %v5867 = vpop.f32.mrf.mxu0
        %v5868 = vadd.f32 %v5621, %v5867
        %v5869 = vpop.f32.mrf.mxu0
        %5870 = vmatprep.mubr.bf16.mxu0 0
        %5871 = vmatmul.mubr.bf16.gmra.mxu0 %v5590
        %v5872 = vpop.f32.mrf.mxu0
        %v5873 = vadd.f32 %v5621, %v5872
        %v5874 = vpop.f32.mrf.mxu0
        %v5875 = vpop.f32.mrf.mxu0
        %v5876 = vadd.f32 %v5621, %v5875
        %v5877 = vpop.f32.mrf.mxu0
        %5878 = vmatprep.mubr.bf16.mxu0 0
        %5879 = vmatmul.mubr.bf16.gmra.mxu0 %v5591
        %v5880 = vpop.f32.mrf.mxu0
        %v5881 = vadd.f32 %v5621, %v5880
        %v5882 = vpop.f32.mrf.mxu0
        %v5883 = vpop.f32.mrf.mxu0
        %v5884 = vadd.f32 %v5621, %v5883
        %v5885 = vpop.f32.mrf.mxu0
        %5886 = vmatprep.mubr.bf16.mxu0 0
        %5887 = vmatmul.mubr.bf16.gmra.mxu0 %v5592
        %v5888 = vpop.f32.mrf.mxu0
        %v5889 = vadd.f32 %v5621, %v5888
        %v5890 = vpop.f32.mrf.mxu0
        %v5891 = vpop.f32.mrf.mxu0
        %v5892 = vadd.f32 %v5621, %v5891
        %v5893 = vpop.f32.mrf.mxu0
        %5894 = vmatprep.mubr.bf16.mxu0 0
        %5895 = vmatmul.mubr.bf16.gmra.mxu0 %v5593
        %v5896 = vpop.f32.mrf.mxu0
        %v5897 = vadd.f32 %v5621, %v5896
        %v5898 = vpop.f32.mrf.mxu0
        %v5899 = vpop.f32.mrf.mxu0
        %v5900 = vadd.f32 %v5621, %v5899
        %v5901 = vpop.f32.mrf.mxu0
        %5902 = vmatprep.mubr.bf16.mxu0 0
        %5903 = vmatmul.mubr.bf16.gmra.mxu0 %v5594
        %v5904 = vpop.f32.mrf.mxu0
        %v5905 = vadd.f32 %v5621, %v5904
        %v5906 = vpop.f32.mrf.mxu0
        %v5907 = vpop.f32.mrf.mxu0
        %v5908 = vadd.f32 %v5621, %v5907
        %v5909 = vpop.f32.mrf.mxu0
        %5910 = vmatprep.mubr.bf16.mxu0 0
        %5911 = vmatmul.mubr.bf16.gmra.mxu0 %v5595
        %v5912 = vpop.f32.mrf.mxu0
        %v5913 = vadd.f32 %v5621, %v5912
        %v5914 = vpop.f32.mrf.mxu0
        %v5915 = vpop.f32.mrf.mxu0
        %v5916 = vadd.f32 %v5621, %v5915
        %v5917 = vpop.f32.mrf.mxu0
        %5918 = vmatprep.mubr.bf16.mxu0 0
        %5919 = vmatmul.mubr.bf16.gmra.mxu0 %v5596
        %v5920 = vpop.f32.mrf.mxu0
        %v5921 = vadd.f32 %v5621, %v5920
        %v5922 = vpop.f32.mrf.mxu0
        %v5923 = vpop.f32.mrf.mxu0
        %v5924 = vadd.f32 %v5621, %v5923
        %v5925 = vpop.f32.mrf.mxu0
        %5926 = vmatprep.mubr.bf16.mxu0 0
        %5927 = vmatmul.mubr.bf16.gmra.mxu0 %v5597
        %v5928 = vpop.f32.mrf.mxu0
        %v5929 = vadd.f32 %v5621, %v5928
        %v5930 = vpop.f32.mrf.mxu0
        %v5931 = vpop.f32.mrf.mxu0
        %v5932 = vadd.f32 %v5621, %v5931
        %v5933 = vpop.f32.mrf.mxu0
        %5934 = vmatprep.mubr.bf16.mxu0 0
        %5935 = vmatmul.mubr.bf16.gmra.mxu0 %v5598
        %v5936 = vpop.f32.mrf.mxu0
        %v5937 = vadd.f32 %v5621, %v5936
        %v5938 = vpop.f32.mrf.mxu0
        %v5939 = vpop.f32.mrf.mxu0
        %v5940 = vadd.f32 %v5621, %v5939
        %v5941 = vpop.f32.mrf.mxu0
        %5942 = vmatprep.mubr.bf16.mxu0 0
        %5943 = vmatmul.mubr.bf16.gmra.mxu0 %v5599
        %v5944 = vpop.f32.mrf.mxu0
        %v5945 = vadd.f32 %v5621, %v5944
        %v5946 = vpop.f32.mrf.mxu0
        %v5947 = vpop.f32.mrf.mxu0
        %v5948 = vadd.f32 %v5621, %v5947
        %v5949 = vpop.f32.mrf.mxu0
        %5950 = vmatprep.mubr.bf16.mxu0 0
        %5951 = vmatmul.mubr.bf16.gmra.mxu0 %v5600
        %v5952 = vpop.f32.mrf.mxu0
        %v5953 = vadd.f32 %v5621, %v5952
        %v5954 = vpop.f32.mrf.mxu0
        %v5955 = vpop.f32.mrf.mxu0
        %v5956 = vadd.f32 %v5621, %v5955
        %v5957 = vpop.f32.mrf.mxu0
        %5958 = vdwg.mxu0
        %5959 = vst.msk [vmem:[%s353] sm:$0xff] %vm3182, %v5705
        %5960 = vst.msk [vmem:[%s353 + $0x10] sm:$0xff] %vm3182, %v5708
        %5961 = vst.msk [vmem:[%s353 + $0x20] sm:$0xff] %vm3182, %v5713
        %5962 = vst.msk [vmem:[%s353 + $0x30] sm:$0xff] %vm3182, %v5716
        %5963 = vst.msk [vmem:[%s353 + $0x40] sm:$0xff] %vm3182, %v5721
        %5964 = vst.msk [vmem:[%s353 + $0x50] sm:$0xff] %vm3182, %v5724
        %5965 = vst.msk [vmem:[%s353 + $0x60] sm:$0xff] %vm3182, %v5729
        %5966 = vst.msk [vmem:[%s353 + $0x70] sm:$0xff] %vm3182, %v5732
        %5967 = vst.msk [vmem:[%s353 + $0x80] sm:$0xff] %vm3182, %v5737
        %5968 = vst.msk [vmem:[%s353 + $0x90] sm:$0xff] %vm3182, %v5740
        %5969 = vst.msk [vmem:[%s353 + $0xa0] sm:$0xff] %vm3182, %v5745
        %5970 = vst.msk [vmem:[%s353 + $0xb0] sm:$0xff] %vm3182, %v5748
        %5971 = vst.msk [vmem:[%s353 + $0xc0] sm:$0xff] %vm3182, %v5753
        %5972 = vst.msk [vmem:[%s353 + $0xd0] sm:$0xff] %vm3182, %v5756
        %5973 = vst.msk [vmem:[%s353 + $0xe0] sm:$0xff] %vm3182, %v5761
        %5974 = vst.msk [vmem:[%s353 + $0xf0] sm:$0xff] %vm3182, %v5764
        %5975 = vst.msk [vmem:[%s353 + $0x100] sm:$0xff] %vm3182, %v5769
        %5976 = vst.msk [vmem:[%s353 + $0x110] sm:$0xff] %vm3182, %v5772
        %5977 = vst.msk [vmem:[%s353 + $0x120] sm:$0xff] %vm3182, %v5777
        %5978 = vst.msk [vmem:[%s353 + $0x130] sm:$0xff] %vm3182, %v5780
        %5979 = vst.msk [vmem:[%s353 + $0x140] sm:$0xff] %vm3182, %v5785
        %5980 = vst.msk [vmem:[%s353 + $0x150] sm:$0xff] %vm3182, %v5788
        %5981 = vst.msk [vmem:[%s353 + $0x160] sm:$0xff] %vm3182, %v5793
        %5982 = vst.msk [vmem:[%s353 + $0x170] sm:$0xff] %vm3182, %v5796
        %5983 = vst.msk [vmem:[%s353 + $0x180] sm:$0xff] %vm3182, %v5801
        %5984 = vst.msk [vmem:[%s353 + $0x190] sm:$0xff] %vm3182, %v5804
        %5985 = vst.msk [vmem:[%s353 + $0x1a0] sm:$0xff] %vm3182, %v5809
        %5986 = vst.msk [vmem:[%s353 + $0x1b0] sm:$0xff] %vm3182, %v5812
        %5987 = vst.msk [vmem:[%s353 + $0x1c0] sm:$0xff] %vm3182, %v5817
        %5988 = vst.msk [vmem:[%s353 + $0x1d0] sm:$0xff] %vm3182, %v5820
        %5989 = vst.msk [vmem:[%s353 + $0x1e0] sm:$0xff] %vm3182, %v5825
        %5990 = vst.msk [vmem:[%s353 + $0x1f0] sm:$0xff] %vm3182, %v5828
        %5991 = vst.msk [vmem:[%s353 + $0x200] sm:$0xff] %vm3182, %v5833
        %5992 = vst.msk [vmem:[%s353 + $0x210] sm:$0xff] %vm3182, %v5836
        %5993 = vst.msk [vmem:[%s353 + $0x220] sm:$0xff] %vm3182, %v5841
        %5994 = vst.msk [vmem:[%s353 + $0x230] sm:$0xff] %vm3182, %v5844
        %5995 = vst.msk [vmem:[%s353 + $0x240] sm:$0xff] %vm3182, %v5849
        %5996 = vst.msk [vmem:[%s353 + $0x250] sm:$0xff] %vm3182, %v5852
        %5997 = vst.msk [vmem:[%s353 + $0x260] sm:$0xff] %vm3182, %v5857
        %5998 = vst.msk [vmem:[%s353 + $0x270] sm:$0xff] %vm3182, %v5860
        %5999 = vst.msk [vmem:[%s353 + $0x280] sm:$0xff] %vm3182, %v5865
        %6000 = vst.msk [vmem:[%s353 + $0x290] sm:$0xff] %vm3182, %v5868
        %6001 = vst.msk [vmem:[%s353 + $0x2a0] sm:$0xff] %vm3182, %v5873
        %6002 = vst.msk [vmem:[%s353 + $0x2b0] sm:$0xff] %vm3182, %v5876
        %6003 = vst.msk [vmem:[%s353 + $0x2c0] sm:$0xff] %vm3182, %v5881
        %6004 = vst.msk [vmem:[%s353 + $0x2d0] sm:$0xff] %vm3182, %v5884
        %6005 = vst.msk [vmem:[%s353 + $0x2e0] sm:$0xff] %vm3182, %v5889
        %6006 = vst.msk [vmem:[%s353 + $0x2f0] sm:$0xff] %vm3182, %v5892
        %6007 = vst.msk [vmem:[%s353 + $0x300] sm:$0xff] %vm3182, %v5897
        %6008 = vst.msk [vmem:[%s353 + $0x310] sm:$0xff] %vm3182, %v5900
        %6009 = vst.msk [vmem:[%s353 + $0x320] sm:$0xff] %vm3182, %v5905
        %6010 = vst.msk [vmem:[%s353 + $0x330] sm:$0xff] %vm3182, %v5908
        %6011 = vst.msk [vmem:[%s353 + $0x340] sm:$0xff] %vm3182, %v5913
        %6012 = vst.msk [vmem:[%s353 + $0x350] sm:$0xff] %vm3182, %v5916
        %6013 = vst.msk [vmem:[%s353 + $0x360] sm:$0xff] %vm3182, %v5921
        %6014 = vst.msk [vmem:[%s353 + $0x370] sm:$0xff] %vm3182, %v5924
        %6015 = vst.msk [vmem:[%s353 + $0x380] sm:$0xff] %vm3182, %v5929
        %6016 = vst.msk [vmem:[%s353 + $0x390] sm:$0xff] %vm3182, %v5932
        %6017 = vst.msk [vmem:[%s353 + $0x3a0] sm:$0xff] %vm3182, %v5937
        %6018 = vst.msk [vmem:[%s353 + $0x3b0] sm:$0xff] %vm3182, %v5940
        %6019 = vst.msk [vmem:[%s353 + $0x3c0] sm:$0xff] %vm3182, %v5945
        %6020 = vst.msk [vmem:[%s353 + $0x3d0] sm:$0xff] %vm3182, %v5948
        %6021 = vst.msk [vmem:[%s353 + $0x3e0] sm:$0xff] %vm3182, %v5953
        %6022 = vst.msk [vmem:[%s353 + $0x3f0] sm:$0xff] %vm3182, %v5956
        %s6023 = sand.u32 %s247, 1
        %s6024 = scalar_lea.sflag [#allocation3], %s6023
        %s6025 = sand.u32 %s247, 1
        %s6026 = smul.addr %s6025, 1024
        %s6027 = scalar_lea.vmem [#allocation2], %s6026
        // Predicated region
        $region61: #{tpu_custom_call.1} parent=59 // pred_check
          %p6028 = pneg %p257
        $region62: #{tpu_custom_call.1} parent=59 // pred_check_branch
          %6030 = sbr.rel (%p6028) target = $region64
        $region63: #{tpu_custom_call.1} parent=59 // pred_region
          %s6031 = smul.u32 64, %s24
          %s6033 = ssub.s32 16384, 16384
          %6034 = vsyncadd %s6024, %s6033
          %s6035 = smul.addr %s6031, 2
          %s6036 = smul.addr %s6035, 128
          %s6037 = scalar_lea.hbm %s10, %s6036
          %s6038 = sshll.u32 %s6027, 4
          %s6039 = int_to_ptr.vmem [resolvable:$true] %s6038
          %6044 = dma.vmem_to_hbm [thread:$0]  %s6039, 16384, %s6037, %s6024, 256, 256, 16
        $region64: #{tpu_custom_call.1} parent=59 // pred_fallthru
          _
      $region60: #{tpu_custom_call.1} parent=5 // pred_fallthru
        _
      %p6045 = scmp.le.s32.totalorder 2, %s19
      // Predicated region
      $region65: #{tpu_custom_call.1} parent=5 // pred_check
        %p6046 = pneg %p6045
      $region66: #{tpu_custom_call.1} parent=5 // pred_check_branch
        %6048 = sbr.rel (%p6046) target = $region68
      $region67: #{tpu_custom_call.1} parent=5 // pred_region
        %s6049 = ssub.s32 %s19, 2
        // Predicated region
        $region69: #{tpu_custom_call.1} parent=67 // pred_check
          %p6050 = pneg %p263
        $region70: #{tpu_custom_call.1} parent=67 // pred_check_branch
          %6052 = sbr.rel (%p6050) target = $region72
        $region71: #{tpu_custom_call.1} parent=67 // pred_region
          %s6053 = sand.u32 %s248, 1
          %s6054 = scalar_lea.sflag [#allocation3], %s6053
          %s6055 = sand.u32 %s248, 1
          %s6056 = smul.addr %s6055, 1024
          %s6057 = scalar_lea.vmem [#allocation2], %s6056
          %6058 = dma.done %s6054, 16384
        $region72: #{tpu_custom_call.1} parent=67 // pred_fallthru
          _
      $region68: #{tpu_custom_call.1} parent=5 // pred_fallthru
        _
    $region6: #{tpu_custom_call.1} parent=1 // loop_footer
      %s23 = sadd.s32 1, %s19
    $region7: #{tpu_custom_call.1} parent=1 // loop_footer_branch
      %18 = sbr.rel target = $region3
    $region8: #{tpu_custom_call.1} parent=1 // loop_exit
      _
    %6059 = vsyncpa [#allocation3], 1
    %s6060 = scalar_lea.sflag [#allocation3], 1
    %6061 = vsyncpa %s6060, 1

</llo_original>
